<compile_context>
chip_gen: v5e
topology: v5e:2x2
jax: 0.10.0
libtpu: 0.0.40
codegen_flags: <defaults>
</compile_context>

<pallas_src>
import math
import functools

import jax
import jax.numpy as jnp
from jax import lax
from jax.experimental import pallas as pl
from jax.experimental.pallas import tpu as pltpu

# Full-precision f32 matmuls everywhere (reference AND kernel) so the correctness gate is tight.
jax.config.update("jax_default_matmul_precision", "highest")

LN_EPS = 1e-5
LEAKY_SLOPE = 0.01   # nn.LeakyReLU default
SCALE_INIT = 0.01    # nn.Parameter(torch.tensor(0.01)) baked at its init value
NEG_INF = -1e30      # additive mask value for cross-batch attention blocks


# ----------------------------- in-kernel helpers -----------------------------

def _erf(x):
    # Abramowitz & Stegun 7.1.26 rational approximation (|err| < 1.5e-7).
    a1, a2, a3, a4, a5 = 0.254829592, -0.284496736, 1.421413741, -1.453152027, 1.061405429
    p = 0.3275911
    s = jnp.where(x < 0.0, -1.0, 1.0)
    ax = jnp.abs(x)
    t = 1.0 / (1.0 + p * ax)
    poly = ((((a5 * t + a4) * t + a3) * t + a2) * t + a1) * t
    return s * (1.0 - poly * jnp.exp(-ax * ax))


def _gelu_exact(x):
    # matches nn.GELU() (erf-based, approximate='none')
    return 0.5 * x * (1.0 + _erf(x * (1.0 / math.sqrt(2.0))))


def _layernorm(x, g, b):
    mu = jnp.mean(x, axis=-1, keepdims=True)
    var = jnp.mean(jnp.square(x - mu), axis=-1, keepdims=True)
    return (x - mu) * jax.lax.rsqrt(var + LN_EPS) * g + b


def _softmax(x, *, approx):
    m = jnp.max(x, axis=-1, keepdims=True)
    e = jnp.exp(x - m)
    d = jnp.sum(e, axis=-1, keepdims=True)
    if approx:
        return e * pl.reciprocal(d, approx=True)   # EUP slot, ~free next to the VPU
    return e / d


# --------------------------- parameter-slab layout ----------------------------

def _layout(B, L, T_in, T_out, C, E, H):
    """Row offsets of every region in the single prepacked parameter slab.
    Every region starts at a sublane-aligned row (multiple of 8) and lane offset 0,
    so every in-kernel extraction is a cheap sublane slice (no lane rotates)."""
    BL, BT, HBL = B * L, B * T_out, H * B * L
    regions = [
        ("conv_w",    BT,    B * T_in),  # block-diagonal kron(I_B, conv_w)
        ("conv_b",    BT,    E),         # conv bias pre-broadcast along E
        ("lin_w",     E,     C),
        ("sa_w",      4 * C, C),         # row-stack [Wq/sqrt(C); Wk; Wv; Wo]
        ("ca_w",      4 * C, C),         # row-stack [Wq/sqrt(dh); Wk; Wv; Wo]
        ("vec",       16,    C),         # 11 used: lin_b, n1_g/b, san_g/b, n2_g/b, can_g/b, sa_bo, ca_bo
        ("sa_qb",     BL,    C),         # pos-enc + bias + 1/sqrt(C) folded row biases
        ("sa_kb",     BL,    C),
        ("sa_vb",     BL,    C),
        ("ca_qb",     BL,    C),
        ("ca_kb",     BT,    C),
        ("ca_vb",     BT,    C),
        ("sa_mask",   BL,    BL),        # additive block-diagonal batch mask (0 / -1e30)
        ("ca_mask",   HBL,   BT),        # additive batch mask for head-stacked CA scores
        ("head_mask", HBL,   C),         # 0/1 head selector, rows (h, b, l)-major
    ]
    off, r = {}, 0
    for name, rows, cols in regions:
        off[name] = (r, rows, cols)
        r += ((rows + 7) // 8) * 8
    width = max(cols for _, _, cols in regions)
    return off, r, width


# --------------------------------- the kernel --------------------------------

def fus_kernel(x_ref, txt_ref, p_ref, out_ref, *, B, L, T_in, T_out, C, E, H, precise):
    f32 = jnp.float32
    off, _, _ = _layout(B, L, T_in, T_out, C, E, H)
    BL = B * L

    def P(name):                      # static, sublane-aligned, lane-offset-0 slab slice
        r0, nr, nc = off[name]
        return p_ref[r0:r0 + nr, 0:nc]

    # f32 MXU operands throughout (K<=64, N<=64: MXU is never the binding slot, and the
    # f32->bf16 operand packs are pure VPU overhead); f32 accumulation.
    def mm(a, b):                     # (M, K) @ (K, N)
        return lax.dot_general(a, b, (((1,), (0,)), ((), ())), preferred_element_type=f32)

    def mm_nt(a, b):                  # (M, K) x (N, K) -> (M, N): no XLU transpose of K
        return lax.dot_general(a, b, (((1,), (1,)), ((), ())), preferred_element_type=f32)

    x = x_ref[...]                    # (B*L, C) flattened visual tokens
    txt = txt_ref[...]                # (B*T_in, E) flattened text tokens

    vec = P("vec")
    lin_b = vec[0:1]
    n1_g, n1_b = vec[1:2], vec[2:3]
    san_g, san_b = vec[3:4], vec[4:5]
    n2_g, n2_b = vec[5:6], vec[6:7]
    can_g, can_b = vec[7:8], vec[8:9]
    sa_bo, ca_bo = vec[9:10], vec[10:11]

    # ---- text_project: Conv1d(k=1) as block-diagonal matmul + GELU + Linear + LeakyReLU ----
    t1 = _gelu_exact(mm(P("conv_w"), txt) + P("conv_b"))          # (B*T_out, E)
    t2 = mm(t1, P("lin_w")) + lin_b                               # (B*T_out, C)
    txt_p = jnp.where(t2 >= 0.0, t2, LEAKY_SLOPE * t2)

    # ---- self-attention (1 head) over the whole flattened batch ----
    # Block-diagonal additive mask replaces the per-batch loop: one score matmul, one softmax,
    # one A@V, no sublane concat.  Pos-enc, biases and 1/sqrt(C) are folded host-side.
    sa_w = P("sa_w")                                              # (4C, C)
    vis2 = _layernorm(x, n1_g, n1_b)
    q = mm(vis2, sa_w[0:C]) + P("sa_qb")
    k = mm(vis2, sa_w[C:2 * C]) + P("sa_kb")
    v = mm(vis2, sa_w[2 * C:3 * C]) + P("sa_vb")
    s = mm_nt(q, k) + P("sa_mask")                                # (B*L, B*L)
    a = _softmax(s, approx=not precise)
    o = mm(mm(a, v), sa_w[3 * C:4 * C]) + sa_bo                   # (B*L, C)
    vis = x + _layernorm(o, san_g, san_b)

    # ---- cross-attention (H heads): all batches AND heads collapsed, no loops ----
    # q_stack rows are (h, b, l)-major; the 0/1 head mask zeroes non-head columns of Q so the
    # NT contraction against the full-width K yields exact per-head scores.  One softmax pass
    # covers every head/batch; the same head mask on A@V plus a sum over the H row blocks
    # reconstructs the concatenated multi-head output before the shared Wo projection.
    ca_w = P("ca_w")                                              # (4C, C)
    vis2 = _layernorm(vis, n2_g, n2_b)
    q = mm(vis2, ca_w[0:C]) + P("ca_qb")                          # (B*L, C)
    k = mm(txt_p, ca_w[C:2 * C]) + P("ca_kb")                     # (B*T_out, C)
    v = mm(txt_p, ca_w[2 * C:3 * C]) + P("ca_vb")                 # (B*T_out, C)

    head_mask = P("head_mask")                                    # (H*B*L, C) 0/1
    q_stack = jnp.concatenate([q] * H, axis=0) * head_mask        # (H*B*L, C)
    s = mm_nt(q_stack, k) + P("ca_mask")                          # (H*B*L, B*T_out)
    a = _softmax(s, approx=not precise)
    o_full = mm(a, v) * head_mask                                 # (H*B*L, C)
    o = o_full[0:BL]
    for h in range(1, H):                                         # H-1 sublane-aligned adds
        o = o + o_full[h * BL:(h + 1) * BL]
    o = mm(o, ca_w[3 * C:4 * C]) + ca_bo                          # (B*L, C)
    vis2 = _layernorm(o, can_g, can_b)

    # NOTE(perf): at C=32 the output store is a few lane-masked vst (4 KiB total); for larger
    # L*C emit a lane-dense (B, L*C) out_shape and reshape in the wrapper.
    out_ref[...] = vis + SCALE_INIT * vis2


# ------------------------------ host-side packing -----------------------------

def sinusoidal_encoding(d_model, length):
    # Same values as PositionalEncoding.generate_encoding (first `length` rows).
    pos = jnp.arange(length, dtype=jnp.float32)[:, None]
    div = jnp.exp(jnp.arange(0, d_model, 2, dtype=jnp.float32) * (-math.log(10000.0) / d_model))
    enc = jnp.zeros((length, d_model), dtype=jnp.float32)
    enc = enc.at[:, 0::2].set(jnp.sin(pos * div))
    enc = enc.at[:, 1::2].set(jnp.cos(pos * div))
    return enc


def prepack_params(params, *, B, L, T_in, T_out, C, E, num_heads):
    """ONE-TIME, parameter-only repack (runs at init, NOT per forward): folds positional
    encodings, attention input biases and 1/sqrt(d) score scales into row-bias slabs, builds
    the block-diagonal conv matrix and batch/head masks, and packs everything into a single
    f32 slab so the kernel sees one DMA for all parameters."""
    f32 = jnp.float32
    H = num_heads
    dh = C // H
    off, total_rows, width = _layout(B, L, T_in, T_out, C, E, H)
    BL, BT, HBL = B * L, B * T_out, H * B * L

    vis_pos = sinusoidal_encoding(C, L)              # (L, C)
    txt_pos = sinusoidal_encoding(C, T_out)          # (T_out, C)
    inv_s = 1.0 / math.sqrt(C)                       # self-attn: 1 head -> head_dim = C
    inv_d = 1.0 / math.sqrt(dh)                      # cross-attn head scale

    # Conv1d(k=1) over the token axis as one block-diagonal matmul; bias pre-broadcast along E.
    conv_blk = jnp.kron(jnp.eye(B, dtype=f32), params["conv_w"])                    # (BT, B*T_in)
    conv_bias = jnp.tile(jnp.broadcast_to(params["conv_b"], (T_out, E)), (B, 1))    # (BT, E)

    # Row-stacked attention weights (sublane slices in-kernel, zero lane rotates).
    sa_wq = params["sa_wq"] * inv_s
    sa_w = jnp.concatenate([sa_wq, params["sa_wk"], params["sa_wv"], params["sa_wo"]], axis=0)
    ca_wq = params["ca_wq"] * inv_d
    ca_w = jnp.concatenate([ca_wq, params["ca_wk"], params["ca_wv"], params["ca_wo"]], axis=0)

    vec = jnp.concatenate([params["lin_b"],
                           params["n1_g"], params["n1_b"],
                           params["san_g"], params["san_b"],
                           params["n2_g"], params["n2_b"],
                           params["can_g"], params["can_b"],
                           params["sa_bo"], params["ca_bo"]], axis=0)               # (11, C)

    # Effective row biases: pos-encodings + projection biases (+ score scale on the Q side).
    sa_qb = jnp.tile(vis_pos @ sa_wq + params["sa_bq"] * inv_s, (B, 1))             # (BL, C)
    sa_kb = jnp.tile(vis_pos @ params["sa_wk"] + params["sa_bk"], (B, 1))           # (BL, C)
    sa_vb = jnp.broadcast_to(params["sa_bv"], (BL, C))                              # (BL, C)
    ca_qb = jnp.tile(vis_pos @ ca_wq + params["ca_bq"] * inv_d, (B, 1))             # (BL, C)
    ca_kb = jnp.tile(txt_pos @ params["ca_wk"] + params["ca_bk"], (B, 1))           # (BT, C)
    ca_vb = jnp.broadcast_to(params["ca_bv"], (BT, C))                              # (BT, C)

    # Additive block-diagonal batch masks and the 0/1 head-selector mask.
    r = jnp.arange(BL)
    sa_mask = jnp.where((r[:, None] // L) == (r[None, :] // L), 0.0, NEG_INF).astype(f32)
    rr = jnp.arange(HBL)
    cc = jnp.arange(BT)
    ca_mask = jnp.where(((rr % BL) // L)[:, None] == (cc // T_out)[None, :],
                        0.0, NEG_INF).astype(f32)
    ch = jnp.arange(C)
    head_mask = ((rr // BL)[:, None] == (ch // dh)[None, :]).astype(f32)

    slab = jnp.zeros((total_rows, width), f32)
    for name, val in [("conv_w", conv_blk), ("conv_b", conv_bias), ("lin_w", params["lin_w"]),
                      ("sa_w", sa_w), ("ca_w", ca_w), ("vec", vec),
                      ("sa_qb", sa_qb), ("sa_kb", sa_kb), ("sa_vb", sa_vb),
                      ("ca_qb", ca_qb), ("ca_kb", ca_kb), ("ca_vb", ca_vb),
                      ("sa_mask", sa_mask), ("ca_mask", ca_mask), ("head_mask", head_mask)]:
        r0, _, _ = off[name]
        slab = slab.at[r0:r0 + val.shape[0], :val.shape[1]].set(val.astype(f32))
    return slab


@functools.partial(jax.jit, static_argnames=("t_out", "num_heads", "precise"))
def fus_language_vision(x, txt, packed, *, t_out, num_heads=4, precise=False):
    B, L, C = x.shape
    _, T_in, E = txt.shape
    # No grid: the whole (tiny) problem is one invocation, everything resident in VMEM.
    # For v7x (2 TensorCores) or realistic L, add a "parallel" batch/token-tile grid axis (or
    # pl.core_map over a TC mesh), re-derive tiles for 64 MiB VMEM (set vmem_limit_bytes in
    # pltpu.CompilerParams) and switch self-attention to flash-style K/V tiling.
    out_flat = pl.pallas_call(
        functools.partial(fus_kernel, B=B, L=L, T_in=T_in, T_out=t_out, C=C, E=E,
                          H=num_heads, precise=precise),
        out_shape=jax.ShapeDtypeStruct((B * L, C), jnp.float32),
        in_specs=[pl.BlockSpec(memory_space=pltpu.MemorySpace.VMEM)] * 3,
        out_specs=pl.BlockSpec(memory_space=pltpu.MemorySpace.VMEM),
    )(x.reshape(B * L, C), txt.reshape(B * T_in, E), packed)
    return out_flat.reshape(B, L, C)


def init_params(key, C, T_in, T_out, E):
    keys = jax.random.split(key, 20)

    def nrm(k, shape, scale):
        return scale * jax.random.normal(k, shape, dtype=jnp.float32)

    ones = jnp.ones((1, C), jnp.float32)
    zeros = jnp.zeros((1, C), jnp.float32)
    s = 1.0 / math.sqrt(C)
    return {
        # text_project: Conv1d weight (T_out, T_in) [k=1 squeezed], Linear stored as (E, C) for x @ W
        "conv_w": nrm(keys[0], (T_out, T_in), 1.0 / math.sqrt(T_in)),
        "conv_b": nrm(keys[1], (T_out, 1), 0.02),
        "lin_w": nrm(keys[2], (E, C), 1.0 / math.sqrt(E)),
        "lin_b": nrm(keys[3], (1, C), 0.02),
        # LayerNorms (PyTorch default init: weight=1, bias=0)
        "n1_g": ones, "n1_b": zeros, "n2_g": ones, "n2_b": zeros,
        "san_g": ones, "san_b": zeros, "can_g": ones, "can_b": zeros,
        # self attention (1 head); weights stored pre-transposed as (C_in, C_out)
        "sa_wq": nrm(keys[4], (C, C), s), "sa_wk": nrm(keys[5], (C, C), s),
        "sa_wv": nrm(keys[6], (C, C), s),
        "sa_bq": nrm(keys[7], (1, C), 0.02), "sa_bk": nrm(keys[8], (1, C), 0.02),
        "sa_bv": nrm(keys[9], (1, C), 0.02),
        "sa_wo": nrm(keys[10], (C, C), s), "sa_bo": nrm(keys[11], (1, C), 0.02),
        # cross attention (4 heads)
        "ca_wq": nrm(keys[12], (C, C), s), "ca_wk": nrm(keys[13], (C, C), s),
        "ca_wv": nrm(keys[14], (C, C), s),
        "ca_bq": nrm(keys[15], (1, C), 0.02), "ca_bk": nrm(keys[16], (1, C), 0.02),
        "ca_bv": nrm(keys[17], (1, C), 0.02),
        "ca_wo": nrm(keys[18], (C, C), s), "ca_bo": nrm(keys[19], (1, C), 0.02),
    }


# ------------------------- pure-JAX reference (checking) ----------------------

def reference_forward(x, txt, params, *, num_heads=4):
    B, L, C = x.shape
    T_out = params["conv_w"].shape[0]
    vis_pos = sinusoidal_encoding(C, L)[None]
    txt_pos = sinusoidal_encoding(C, T_out)[None]

    def ln(z, g, b):
        mu = z.mean(-1, keepdims=True)
        var = ((z - mu) ** 2).mean(-1, keepdims=True)
        return (z - mu) / jnp.sqrt(var + LN_EPS) * g + b

    t1 = jnp.einsum("oi,bie->boe", params["conv_w"], txt) + params["conv_b"][None]
    t1 = 0.5 * t1 * (1.0 + jax.scipy.special.erf(t1 / math.sqrt(2.0)))
    t2 = jnp.einsum("boe,ec->boc", t1, params["lin_w"]) + params["lin_b"][None]
    txt_p = jnp.where(t2 >= 0.0, t2, LEAKY_SLOPE * t2)

    def mha(q_in, k_in, v_in, wq, bq, wk, bk, wv, bv, wo, bo, h):
        dh = C // h
        q = (q_in @ wq + bq).reshape(B, -1, h, dh)
        k = (k_in @ wk + bk).reshape(B, -1, h, dh)
        v = (v_in @ wv + bv).reshape(B, -1, h, dh)
        s = jnp.einsum("bqhd,bkhd->bhqk", q, k) / math.sqrt(dh)
        a = jax.nn.softmax(s, axis=-1)
        o = jnp.einsum("bhqk,bkhd->bqhd", a, v).reshape(B, -1, C)
        return o @ wo + bo

    vis2 = ln(x, params["n1_g"], params["n1_b"])
    qk = vis2 + vis_pos
    vis2 = mha(qk, qk, vis2,
               params["sa_wq"], params["sa_bq"], params["sa_wk"], params["sa_bk"],
               params["sa_wv"], params["sa_bv"], params["sa_wo"], params["sa_bo"], 1)
    vis2 = ln(vis2, params["san_g"], params["san_b"])
    vis = x + vis2
    vis2 = ln(vis, params["n2_g"], params["n2_b"])
    vis2 = mha(vis2 + vis_pos, txt_p + txt_pos, txt_p,
               params["ca_wq"], params["ca_bq"], params["ca_wk"], params["ca_bk"],
               params["ca_wv"], params["ca_bv"], params["ca_wo"], params["ca_bo"], num_heads)
    vis2 = ln(vis2, params["can_g"], params["can_b"])
    return vis + SCALE_INIT * vis2


# ----------------------------------- main -------------------------------------

if __name__ == "__main__":
    # Shapes consistent with FusLanguageVision(in_channels=32, output_text_len=8,
    #                                          input_text_len=16, embed_dim=64)
    B, L, C = 2, 16, 32         # x: (B, L, C)  -- visual token sequence, channels-last
    T_in, T_out, E = 16, 8, 64  # txt: (B, T_in, E)
    H = 4

    key = jax.random.PRNGKey(0)
    kx, kt, kp = jax.random.split(key, 3)
    x = jax.random.normal(kx, (B, L, C), dtype=jnp.float32)
    txt = jax.random.normal(kt, (B, T_in, E), dtype=jnp.float32)
    params = init_params(kp, C, T_in, T_out, E)

    # One-time parameter-only prepack (outside the jitted forward).
    packed = jax.block_until_ready(
        prepack_params(params, B=B, L=L, T_in=T_in, T_out=T_out, C=C, E=E, num_heads=H))

    ref = reference_forward(x, txt, params, num_heads=H)

    # (1) precise path: exact softmax divide -- tight correctness gate.
    out_precise = jax.block_until_ready(
        fus_language_vision(x, txt, packed, t_out=T_out, num_heads=H, precise=True))
    assert out_precise.shape == (B, L, C)
    assert bool(jnp.all(jnp.isfinite(out_precise)))
    err_p = float(jnp.max(jnp.abs(out_precise - ref)))
    assert err_p < 2e-3, f"precise-path mismatch: max_err={err_p}"

    # (2) default perf path: EUP approx reciprocal in the softmax denominators (f32 everywhere
    # else, per the review the bf16 MXU cast was dropped).  Coarser gate for the approximation.
    out_fast = jax.block_until_ready(
        fus_language_vision(x, txt, packed, t_out=T_out, num_heads=H, precise=False))
    assert out_fast.shape == (B, L, C)
    assert bool(jnp.all(jnp.isfinite(out_fast)))
    err_f = float(jnp.max(jnp.abs(out_fast - ref)))
    assert err_f < 5e-2, f"fast-path mismatch: max_err={err_f}"

    print("KERNEL_OK")
</pallas_src>

<mosaic_0001>
module attributes {stable_mosaic.version = 11 : i64} {
  func.func @fus_kernel(%arg0: memref<32x32xf32, #tpu.memory_space<vmem>>, %arg1: memref<32x64xf32, #tpu.memory_space<vmem>>, %arg2: memref<816x64xf32, #tpu.memory_space<vmem>>, %arg3: memref<32x32xf32, #tpu.memory_space<vmem>>) attributes {dimension_semantics = [], scalar_prefetch = 0 : i64, scratch_operands = 0 : i64, tpu.core_type = #tpu.core_type<tc>} {
    %c0 = arith.constant 0 : index
    %c0_0 = arith.constant 0 : index
    %0 = vector.load %arg0[%c0, %c0_0] : memref<32x32xf32, #tpu.memory_space<vmem>>, vector<32x32xf32>
    %c0_1 = arith.constant 0 : index
    %c0_2 = arith.constant 0 : index
    %1 = vector.load %arg1[%c0_1, %c0_2] : memref<32x64xf32, #tpu.memory_space<vmem>>, vector<32x64xf32>
    %c352 = arith.constant 352 : index
    %c0_3 = arith.constant 0 : index
    %2 = vector.load %arg2[%c352, %c0_3] : memref<816x64xf32, #tpu.memory_space<vmem>>, vector<16x32xf32>
    %3 = vector.extract_strided_slice %2 {offsets = [0, 0], sizes = [1, 32], strides = [1, 1]} : vector<16x32xf32> to vector<1x32xf32>
    %4 = vector.extract_strided_slice %2 {offsets = [1, 0], sizes = [1, 32], strides = [1, 1]} : vector<16x32xf32> to vector<1x32xf32>
    %5 = vector.extract_strided_slice %2 {offsets = [2, 0], sizes = [1, 32], strides = [1, 1]} : vector<16x32xf32> to vector<1x32xf32>
    %6 = vector.extract_strided_slice %2 {offsets = [3, 0], sizes = [1, 32], strides = [1, 1]} : vector<16x32xf32> to vector<1x32xf32>
    %7 = vector.extract_strided_slice %2 {offsets = [4, 0], sizes = [1, 32], strides = [1, 1]} : vector<16x32xf32> to vector<1x32xf32>
    %8 = vector.extract_strided_slice %2 {offsets = [5, 0], sizes = [1, 32], strides = [1, 1]} : vector<16x32xf32> to vector<1x32xf32>
    %9 = vector.extract_strided_slice %2 {offsets = [6, 0], sizes = [1, 32], strides = [1, 1]} : vector<16x32xf32> to vector<1x32xf32>
    %10 = vector.extract_strided_slice %2 {offsets = [7, 0], sizes = [1, 32], strides = [1, 1]} : vector<16x32xf32> to vector<1x32xf32>
    %11 = vector.extract_strided_slice %2 {offsets = [8, 0], sizes = [1, 32], strides = [1, 1]} : vector<16x32xf32> to vector<1x32xf32>
    %12 = vector.extract_strided_slice %2 {offsets = [9, 0], sizes = [1, 32], strides = [1, 1]} : vector<16x32xf32> to vector<1x32xf32>
    %13 = vector.extract_strided_slice %2 {offsets = [10, 0], sizes = [1, 32], strides = [1, 1]} : vector<16x32xf32> to vector<1x32xf32>
    %c0_4 = arith.constant 0 : index
    %c0_5 = arith.constant 0 : index
    %14 = vector.load %arg2[%c0_4, %c0_5] : memref<816x64xf32, #tpu.memory_space<vmem>>, vector<16x32xf32>
    %cst = arith.constant dense<0.000000e+00> : vector<16x64xf32>
    %15 = tpu.matmul %14, %1, %cst {dimension_numbers = #tpu.dot_dimension_numbers<[1], [0], [0], [1], [0, 0, 1, 1], [], []>, precision = #tpu.contract_precision<fp32>} : vector<16x32xf32>, vector<32x64xf32>, vector<16x64xf32> -> vector<16x64xf32>
    %c16 = arith.constant 16 : index
    %c0_6 = arith.constant 0 : index
    %16 = vector.load %arg2[%c16, %c0_6] : memref<816x64xf32, #tpu.memory_space<vmem>>, vector<16x64xf32>
    %17 = arith.addf %15, %16 : vector<16x64xf32>
    %cst_7 = arith.constant 5.000000e-01 : f32
    %18 = vector.broadcast %cst_7 : f32 to vector<16x64xf32>
    %19 = arith.mulf %18, %17 : vector<16x64xf32>
    %cst_8 = arith.constant 0.707106769 : f32
    %20 = vector.broadcast %cst_8 : f32 to vector<16x64xf32>
    %21 = arith.mulf %17, %20 : vector<16x64xf32>
    %cst_9 = arith.constant 0.000000e+00 : f32
    %22 = vector.broadcast %cst_9 : f32 to vector<16x64xf32>
    %23 = arith.cmpf olt, %21, %22 : vector<16x64xf32>
    %cst_10 = arith.constant -1.000000e+00 : f32
    %cst_11 = arith.constant 1.000000e+00 : f32
    %24 = vector.broadcast %cst_10 : f32 to vector<16x64xf32>
    %25 = vector.broadcast %cst_11 : f32 to vector<16x64xf32>
    %26 = arith.select %23, %24, %25 : vector<16x64xi1>, vector<16x64xf32>
    %27 = math.absf %21 : vector<16x64xf32>
    %cst_12 = arith.constant 0.327591091 : f32
    %28 = vector.broadcast %cst_12 : f32 to vector<16x64xf32>
    %29 = arith.mulf %28, %27 : vector<16x64xf32>
    %cst_13 = arith.constant 1.000000e+00 : f32
    %30 = vector.broadcast %cst_13 : f32 to vector<16x64xf32>
    %31 = arith.addf %30, %29 : vector<16x64xf32>
    %cst_14 = arith.constant 1.000000e+00 : f32
    %32 = vector.broadcast %cst_14 : f32 to vector<16x64xf32>
    %33 = arith.divf %32, %31 : vector<16x64xf32>
    %cst_15 = arith.constant 1.06140542 : f32
    %34 = vector.broadcast %cst_15 : f32 to vector<16x64xf32>
    %35 = arith.mulf %34, %33 : vector<16x64xf32>
    %cst_16 = arith.constant -1.45315206 : f32
    %36 = vector.broadcast %cst_16 : f32 to vector<16x64xf32>
    %37 = arith.addf %35, %36 : vector<16x64xf32>
    %38 = arith.mulf %37, %33 : vector<16x64xf32>
    %cst_17 = arith.constant 1.42141378 : f32
    %39 = vector.broadcast %cst_17 : f32 to vector<16x64xf32>
    %40 = arith.addf %38, %39 : vector<16x64xf32>
    %41 = arith.mulf %40, %33 : vector<16x64xf32>
    %cst_18 = arith.constant -0.284496725 : f32
    %42 = vector.broadcast %cst_18 : f32 to vector<16x64xf32>
    %43 = arith.addf %41, %42 : vector<16x64xf32>
    %44 = arith.mulf %43, %33 : vector<16x64xf32>
    %cst_19 = arith.constant 0.254829586 : f32
    %45 = vector.broadcast %cst_19 : f32 to vector<16x64xf32>
    %46 = arith.addf %44, %45 : vector<16x64xf32>
    %47 = arith.mulf %46, %33 : vector<16x64xf32>
    %cst_20 = arith.constant 0.000000e+00 : f32
    %48 = vector.broadcast %cst_20 : f32 to vector<16x64xf32>
    %49 = arith.subf %48, %27 : vector<16x64xf32>
    %50 = arith.mulf %49, %27 : vector<16x64xf32>
    %51 = math.exp %50 : vector<16x64xf32>
    %52 = arith.mulf %47, %51 : vector<16x64xf32>
    %cst_21 = arith.constant 1.000000e+00 : f32
    %53 = vector.broadcast %cst_21 : f32 to vector<16x64xf32>
    %54 = arith.subf %53, %52 : vector<16x64xf32>
    %55 = arith.mulf %26, %54 : vector<16x64xf32>
    %cst_22 = arith.constant 1.000000e+00 : f32
    %56 = vector.broadcast %cst_22 : f32 to vector<16x64xf32>
    %57 = arith.addf %56, %55 : vector<16x64xf32>
    %58 = arith.mulf %19, %57 : vector<16x64xf32>
    %c32 = arith.constant 32 : index
    %c0_23 = arith.constant 0 : index
    %59 = vector.load %arg2[%c32, %c0_23] : memref<816x64xf32, #tpu.memory_space<vmem>>, vector<64x32xf32>
    %cst_24 = arith.constant dense<0.000000e+00> : vector<16x32xf32>
    %60 = tpu.matmul %58, %59, %cst_24 {dimension_numbers = #tpu.dot_dimension_numbers<[1], [0], [0], [1], [0, 0, 1, 1], [], []>, precision = #tpu.contract_precision<fp32>} : vector<16x64xf32>, vector<64x32xf32>, vector<16x32xf32> -> vector<16x32xf32>
    %61 = vector.broadcast %3 : vector<1x32xf32> to vector<16x32xf32>
    %62 = arith.addf %60, %61 : vector<16x32xf32>
    %cst_25 = arith.constant 0.000000e+00 : f32
    %63 = vector.broadcast %cst_25 : f32 to vector<16x32xf32>
    %64 = arith.cmpf oge, %62, %63 : vector<16x32xf32>
    %cst_26 = arith.constant 0.00999999977 : f32
    %65 = vector.broadcast %cst_26 : f32 to vector<16x32xf32>
    %66 = arith.mulf %65, %62 : vector<16x32xf32>
    %67 = arith.select %64, %62, %66 : vector<16x32xi1>, vector<16x32xf32>
    %c96 = arith.constant 96 : index
    %c0_27 = arith.constant 0 : index
    %68 = vector.load %arg2[%c96, %c0_27] : memref<816x64xf32, #tpu.memory_space<vmem>>, vector<128x32xf32>
    %cst_28 = arith.constant dense<0.000000e+00> : vector<32xf32>
    %69 = vector.multi_reduction <add>, %0, %cst_28 [1] : vector<32x32xf32> to vector<32xf32>
    %70 = vector.shape_cast %69 : vector<32xf32> to vector<32x1xf32>
    %cst_29 = arith.constant 3.200000e+01 : f32
    %71 = vector.broadcast %cst_29 : f32 to vector<32x1xf32>
    %72 = arith.divf %70, %71 : vector<32x1xf32>
    %73 = vector.broadcast %72 : vector<32x1xf32> to vector<32x32xf32>
    %74 = arith.subf %0, %73 : vector<32x32xf32>
    %75 = arith.mulf %74, %74 : vector<32x32xf32>
    %cst_30 = arith.constant dense<0.000000e+00> : vector<32xf32>
    %76 = vector.multi_reduction <add>, %75, %cst_30 [1] : vector<32x32xf32> to vector<32xf32>
    %77 = vector.shape_cast %76 : vector<32xf32> to vector<32x1xf32>
    %cst_31 = arith.constant 3.200000e+01 : f32
    %78 = vector.broadcast %cst_31 : f32 to vector<32x1xf32>
    %79 = arith.divf %77, %78 : vector<32x1xf32>
    %80 = vector.broadcast %72 : vector<32x1xf32> to vector<32x32xf32>
    %81 = arith.subf %0, %80 : vector<32x32xf32>
    %cst_32 = arith.constant 9.99999974E-6 : f32
    %82 = vector.broadcast %cst_32 : f32 to vector<32x1xf32>
    %83 = arith.addf %79, %82 : vector<32x1xf32>
    %84 = math.rsqrt %83 : vector<32x1xf32>
    %85 = vector.broadcast %84 : vector<32x1xf32> to vector<32x32xf32>
    %86 = arith.mulf %81, %85 : vector<32x32xf32>
    %87 = vector.broadcast %4 : vector<1x32xf32> to vector<32x32xf32>
    %88 = arith.mulf %86, %87 : vector<32x32xf32>
    %89 = vector.broadcast %5 : vector<1x32xf32> to vector<32x32xf32>
    %90 = arith.addf %88, %89 : vector<32x32xf32>
    %91 = vector.extract_strided_slice %68 {offsets = [0, 0], sizes = [32, 32], strides = [1, 1]} : vector<128x32xf32> to vector<32x32xf32>
    %cst_33 = arith.constant dense<0.000000e+00> : vector<32x32xf32>
    %92 = tpu.matmul %90, %91, %cst_33 {dimension_numbers = #tpu.dot_dimension_numbers<[1], [0], [0], [1], [0, 0, 1, 1], [], []>, precision = #tpu.contract_precision<fp32>} : vector<32x32xf32>, vector<32x32xf32>, vector<32x32xf32> -> vector<32x32xf32>
    %c368 = arith.constant 368 : index
    %c0_34 = arith.constant 0 : index
    %93 = vector.load %arg2[%c368, %c0_34] : memref<816x64xf32, #tpu.memory_space<vmem>>, vector<32x32xf32>
    %94 = arith.addf %92, %93 : vector<32x32xf32>
    %95 = vector.extract_strided_slice %68 {offsets = [32, 0], sizes = [32, 32], strides = [1, 1]} : vector<128x32xf32> to vector<32x32xf32>
    %cst_35 = arith.constant dense<0.000000e+00> : vector<32x32xf32>
    %96 = tpu.matmul %90, %95, %cst_35 {dimension_numbers = #tpu.dot_dimension_numbers<[1], [0], [0], [1], [0, 0, 1, 1], [], []>, precision = #tpu.contract_precision<fp32>} : vector<32x32xf32>, vector<32x32xf32>, vector<32x32xf32> -> vector<32x32xf32>
    %c400 = arith.constant 400 : index
    %c0_36 = arith.constant 0 : index
    %97 = vector.load %arg2[%c400, %c0_36] : memref<816x64xf32, #tpu.memory_space<vmem>>, vector<32x32xf32>
    %98 = arith.addf %96, %97 : vector<32x32xf32>
    %99 = vector.extract_strided_slice %68 {offsets = [64, 0], sizes = [32, 32], strides = [1, 1]} : vector<128x32xf32> to vector<32x32xf32>
    %cst_37 = arith.constant dense<0.000000e+00> : vector<32x32xf32>
    %100 = tpu.matmul %90, %99, %cst_37 {dimension_numbers = #tpu.dot_dimension_numbers<[1], [0], [0], [1], [0, 0, 1, 1], [], []>, precision = #tpu.contract_precision<fp32>} : vector<32x32xf32>, vector<32x32xf32>, vector<32x32xf32> -> vector<32x32xf32>
    %c432 = arith.constant 432 : index
    %c0_38 = arith.constant 0 : index
    %101 = vector.load %arg2[%c432, %c0_38] : memref<816x64xf32, #tpu.memory_space<vmem>>, vector<32x32xf32>
    %102 = arith.addf %100, %101 : vector<32x32xf32>
    %cst_39 = arith.constant dense<0.000000e+00> : vector<32x32xf32>
    %103 = tpu.matmul %94, %98, %cst_39 {dimension_numbers = #tpu.dot_dimension_numbers<[1], [1], [0], [0], [0, 0, 1, 0], [], []>, precision = #tpu.contract_precision<fp32>} : vector<32x32xf32>, vector<32x32xf32>, vector<32x32xf32> -> vector<32x32xf32>
    %c528 = arith.constant 528 : index
    %c0_40 = arith.constant 0 : index
    %104 = vector.load %arg2[%c528, %c0_40] : memref<816x64xf32, #tpu.memory_space<vmem>>, vector<32x32xf32>
    %105 = arith.addf %103, %104 : vector<32x32xf32>
    %cst_41 = arith.constant dense<0xFF800000> : vector<32xf32>
    %106 = vector.multi_reduction <maximumf>, %105, %cst_41 [1] : vector<32x32xf32> to vector<32xf32>
    %107 = vector.shape_cast %106 : vector<32xf32> to vector<32x1xf32>
    %108 = vector.broadcast %107 : vector<32x1xf32> to vector<32x32xf32>
    %109 = arith.subf %105, %108 : vector<32x32xf32>
    %110 = math.exp %109 : vector<32x32xf32>
    %cst_42 = arith.constant dense<0.000000e+00> : vector<32xf32>
    %111 = vector.multi_reduction <add>, %110, %cst_42 [1] : vector<32x32xf32> to vector<32xf32>
    %112 = vector.shape_cast %111 : vector<32xf32> to vector<32x1xf32>
    %113 = vector.broadcast %112 : vector<32x1xf32> to vector<32x32xf32>
    %114 = arith.divf %110, %113 : vector<32x32xf32>
    %cst_43 = arith.constant dense<0.000000e+00> : vector<32x32xf32>
    %115 = tpu.matmul %114, %102, %cst_43 {dimension_numbers = #tpu.dot_dimension_numbers<[1], [0], [0], [1], [0, 0, 1, 1], [], []>, precision = #tpu.contract_precision<fp32>} : vector<32x32xf32>, vector<32x32xf32>, vector<32x32xf32> -> vector<32x32xf32>
    %116 = vector.extract_strided_slice %68 {offsets = [96, 0], sizes = [32, 32], strides = [1, 1]} : vector<128x32xf32> to vector<32x32xf32>
    %cst_44 = arith.constant dense<0.000000e+00> : vector<32x32xf32>
    %117 = tpu.matmul %115, %116, %cst_44 {dimension_numbers = #tpu.dot_dimension_numbers<[1], [0], [0], [1], [0, 0, 1, 1], [], []>, precision = #tpu.contract_precision<fp32>} : vector<32x32xf32>, vector<32x32xf32>, vector<32x32xf32> -> vector<32x32xf32>
    %118 = vector.broadcast %12 : vector<1x32xf32> to vector<32x32xf32>
    %119 = arith.addf %117, %118 : vector<32x32xf32>
    %cst_45 = arith.constant dense<0.000000e+00> : vector<32xf32>
    %120 = vector.multi_reduction <add>, %119, %cst_45 [1] : vector<32x32xf32> to vector<32xf32>
    %121 = vector.shape_cast %120 : vector<32xf32> to vector<32x1xf32>
    %cst_46 = arith.constant 3.200000e+01 : f32
    %122 = vector.broadcast %cst_46 : f32 to vector<32x1xf32>
    %123 = arith.divf %121, %122 : vector<32x1xf32>
    %124 = vector.broadcast %123 : vector<32x1xf32> to vector<32x32xf32>
    %125 = arith.subf %119, %124 : vector<32x32xf32>
    %126 = arith.mulf %125, %125 : vector<32x32xf32>
    %cst_47 = arith.constant dense<0.000000e+00> : vector<32xf32>
    %127 = vector.multi_reduction <add>, %126, %cst_47 [1] : vector<32x32xf32> to vector<32xf32>
    %128 = vector.shape_cast %127 : vector<32xf32> to vector<32x1xf32>
    %cst_48 = arith.constant 3.200000e+01 : f32
    %129 = vector.broadcast %cst_48 : f32 to vector<32x1xf32>
    %130 = arith.divf %128, %129 : vector<32x1xf32>
    %131 = vector.broadcast %123 : vector<32x1xf32> to vector<32x32xf32>
    %132 = arith.subf %119, %131 : vector<32x32xf32>
    %cst_49 = arith.constant 9.99999974E-6 : f32
    %133 = vector.broadcast %cst_49 : f32 to vector<32x1xf32>
    %134 = arith.addf %130, %133 : vector<32x1xf32>
    %135 = math.rsqrt %134 : vector<32x1xf32>
    %136 = vector.broadcast %135 : vector<32x1xf32> to vector<32x32xf32>
    %137 = arith.mulf %132, %136 : vector<32x32xf32>
    %138 = vector.broadcast %6 : vector<1x32xf32> to vector<32x32xf32>
    %139 = arith.mulf %137, %138 : vector<32x32xf32>
    %140 = vector.broadcast %7 : vector<1x32xf32> to vector<32x32xf32>
    %141 = arith.addf %139, %140 : vector<32x32xf32>
    %142 = arith.addf %0, %141 : vector<32x32xf32>
    %c224 = arith.constant 224 : index
    %c0_50 = arith.constant 0 : index
    %143 = vector.load %arg2[%c224, %c0_50] : memref<816x64xf32, #tpu.memory_space<vmem>>, vector<128x32xf32>
    %cst_51 = arith.constant dense<0.000000e+00> : vector<32xf32>
    %144 = vector.multi_reduction <add>, %142, %cst_51 [1] : vector<32x32xf32> to vector<32xf32>
    %145 = vector.shape_cast %144 : vector<32xf32> to vector<32x1xf32>
    %cst_52 = arith.constant 3.200000e+01 : f32
    %146 = vector.broadcast %cst_52 : f32 to vector<32x1xf32>
    %147 = arith.divf %145, %146 : vector<32x1xf32>
    %148 = vector.broadcast %147 : vector<32x1xf32> to vector<32x32xf32>
    %149 = arith.subf %142, %148 : vector<32x32xf32>
    %150 = arith.mulf %149, %149 : vector<32x32xf32>
    %cst_53 = arith.constant dense<0.000000e+00> : vector<32xf32>
    %151 = vector.multi_reduction <add>, %150, %cst_53 [1] : vector<32x32xf32> to vector<32xf32>
    %152 = vector.shape_cast %151 : vector<32xf32> to vector<32x1xf32>
    %cst_54 = arith.constant 3.200000e+01 : f32
    %153 = vector.broadcast %cst_54 : f32 to vector<32x1xf32>
    %154 = arith.divf %152, %153 : vector<32x1xf32>
    %155 = vector.broadcast %147 : vector<32x1xf32> to vector<32x32xf32>
    %156 = arith.subf %142, %155 : vector<32x32xf32>
    %cst_55 = arith.constant 9.99999974E-6 : f32
    %157 = vector.broadcast %cst_55 : f32 to vector<32x1xf32>
    %158 = arith.addf %154, %157 : vector<32x1xf32>
    %159 = math.rsqrt %158 : vector<32x1xf32>
    %160 = vector.broadcast %159 : vector<32x1xf32> to vector<32x32xf32>
    %161 = arith.mulf %156, %160 : vector<32x32xf32>
    %162 = vector.broadcast %8 : vector<1x32xf32> to vector<32x32xf32>
    %163 = arith.mulf %161, %162 : vector<32x32xf32>
    %164 = vector.broadcast %9 : vector<1x32xf32> to vector<32x32xf32>
    %165 = arith.addf %163, %164 : vector<32x32xf32>
    %166 = vector.extract_strided_slice %143 {offsets = [0, 0], sizes = [32, 32], strides = [1, 1]} : vector<128x32xf32> to vector<32x32xf32>
    %cst_56 = arith.constant dense<0.000000e+00> : vector<32x32xf32>
    %167 = tpu.matmul %165, %166, %cst_56 {dimension_numbers = #tpu.dot_dimension_numbers<[1], [0], [0], [1], [0, 0, 1, 1], [], []>, precision = #tpu.contract_precision<fp32>} : vector<32x32xf32>, vector<32x32xf32>, vector<32x32xf32> -> vector<32x32xf32>
    %c464 = arith.constant 464 : index
    %c0_57 = arith.constant 0 : index
    %168 = vector.load %arg2[%c464, %c0_57] : memref<816x64xf32, #tpu.memory_space<vmem>>, vector<32x32xf32>
    %169 = arith.addf %167, %168 : vector<32x32xf32>
    %170 = vector.extract_strided_slice %143 {offsets = [32, 0], sizes = [32, 32], strides = [1, 1]} : vector<128x32xf32> to vector<32x32xf32>
    %cst_58 = arith.constant dense<0.000000e+00> : vector<16x32xf32>
    %171 = tpu.matmul %67, %170, %cst_58 {dimension_numbers = #tpu.dot_dimension_numbers<[1], [0], [0], [1], [0, 0, 1, 1], [], []>, precision = #tpu.contract_precision<fp32>} : vector<16x32xf32>, vector<32x32xf32>, vector<16x32xf32> -> vector<16x32xf32>
    %c496 = arith.constant 496 : index
    %c0_59 = arith.constant 0 : index
    %172 = vector.load %arg2[%c496, %c0_59] : memref<816x64xf32, #tpu.memory_space<vmem>>, vector<16x32xf32>
    %173 = arith.addf %171, %172 : vector<16x32xf32>
    %174 = vector.extract_strided_slice %143 {offsets = [64, 0], sizes = [32, 32], strides = [1, 1]} : vector<128x32xf32> to vector<32x32xf32>
    %cst_60 = arith.constant dense<0.000000e+00> : vector<16x32xf32>
    %175 = tpu.matmul %67, %174, %cst_60 {dimension_numbers = #tpu.dot_dimension_numbers<[1], [0], [0], [1], [0, 0, 1, 1], [], []>, precision = #tpu.contract_precision<fp32>} : vector<16x32xf32>, vector<32x32xf32>, vector<16x32xf32> -> vector<16x32xf32>
    %c512 = arith.constant 512 : index
    %c0_61 = arith.constant 0 : index
    %176 = vector.load %arg2[%c512, %c0_61] : memref<816x64xf32, #tpu.memory_space<vmem>>, vector<16x32xf32>
    %177 = arith.addf %175, %176 : vector<16x32xf32>
    %c688 = arith.constant 688 : index
    %c0_62 = arith.constant 0 : index
    %178 = vector.load %arg2[%c688, %c0_62] : memref<816x64xf32, #tpu.memory_space<vmem>>, vector<128x32xf32>
    %179 = tpu.concatenate %169, %169, %169, %169 in 0 : vector<32x32xf32>, vector<32x32xf32>, vector<32x32xf32>, vector<32x32xf32> -> vector<128x32xf32>
    %180 = arith.mulf %179, %178 : vector<128x32xf32>
    %cst_63 = arith.constant dense<0.000000e+00> : vector<128x16xf32>
    %181 = tpu.matmul %180, %173, %cst_63 {dimension_numbers = #tpu.dot_dimension_numbers<[1], [1], [0], [0], [0, 0, 1, 0], [], []>, precision = #tpu.contract_precision<fp32>} : vector<128x32xf32>, vector<16x32xf32>, vector<128x16xf32> -> vector<128x16xf32>
    %c560 = arith.constant 560 : index
    %c0_64 = arith.constant 0 : index
    %182 = vector.load %arg2[%c560, %c0_64] : memref<816x64xf32, #tpu.memory_space<vmem>>, vector<128x16xf32>
    %183 = arith.addf %181, %182 : vector<128x16xf32>
    %cst_65 = arith.constant dense<0xFF800000> : vector<128xf32>
    %184 = vector.multi_reduction <maximumf>, %183, %cst_65 [1] : vector<128x16xf32> to vector<128xf32>
    %185 = vector.shape_cast %184 : vector<128xf32> to vector<128x1xf32>
    %186 = vector.broadcast %185 : vector<128x1xf32> to vector<128x16xf32>
    %187 = arith.subf %183, %186 : vector<128x16xf32>
    %188 = math.exp %187 : vector<128x16xf32>
    %cst_66 = arith.constant dense<0.000000e+00> : vector<128xf32>
    %189 = vector.multi_reduction <add>, %188, %cst_66 [1] : vector<128x16xf32> to vector<128xf32>
    %190 = vector.shape_cast %189 : vector<128xf32> to vector<128x1xf32>
    %191 = vector.broadcast %190 : vector<128x1xf32> to vector<128x16xf32>
    %192 = arith.divf %188, %191 : vector<128x16xf32>
    %cst_67 = arith.constant dense<0.000000e+00> : vector<128x32xf32>
    %193 = tpu.matmul %192, %177, %cst_67 {dimension_numbers = #tpu.dot_dimension_numbers<[1], [0], [0], [1], [0, 0, 1, 1], [], []>, precision = #tpu.contract_precision<fp32>} : vector<128x16xf32>, vector<16x32xf32>, vector<128x32xf32> -> vector<128x32xf32>
    %194 = arith.mulf %193, %178 : vector<128x32xf32>
    %195 = vector.extract_strided_slice %194 {offsets = [0, 0], sizes = [32, 32], strides = [1, 1]} : vector<128x32xf32> to vector<32x32xf32>
    %196 = vector.extract_strided_slice %194 {offsets = [32, 0], sizes = [32, 32], strides = [1, 1]} : vector<128x32xf32> to vector<32x32xf32>
    %197 = arith.addf %195, %196 : vector<32x32xf32>
    %198 = vector.extract_strided_slice %194 {offsets = [64, 0], sizes = [32, 32], strides = [1, 1]} : vector<128x32xf32> to vector<32x32xf32>
    %199 = arith.addf %197, %198 : vector<32x32xf32>
    %200 = vector.extract_strided_slice %194 {offsets = [96, 0], sizes = [32, 32], strides = [1, 1]} : vector<128x32xf32> to vector<32x32xf32>
    %201 = arith.addf %199, %200 : vector<32x32xf32>
    %202 = vector.extract_strided_slice %143 {offsets = [96, 0], sizes = [32, 32], strides = [1, 1]} : vector<128x32xf32> to vector<32x32xf32>
    %cst_68 = arith.constant dense<0.000000e+00> : vector<32x32xf32>
    %203 = tpu.matmul %201, %202, %cst_68 {dimension_numbers = #tpu.dot_dimension_numbers<[1], [0], [0], [1], [0, 0, 1, 1], [], []>, precision = #tpu.contract_precision<fp32>} : vector<32x32xf32>, vector<32x32xf32>, vector<32x32xf32> -> vector<32x32xf32>
    %204 = vector.broadcast %13 : vector<1x32xf32> to vector<32x32xf32>
    %205 = arith.addf %203, %204 : vector<32x32xf32>
    %cst_69 = arith.constant dense<0.000000e+00> : vector<32xf32>
    %206 = vector.multi_reduction <add>, %205, %cst_69 [1] : vector<32x32xf32> to vector<32xf32>
    %207 = vector.shape_cast %206 : vector<32xf32> to vector<32x1xf32>
    %cst_70 = arith.constant 3.200000e+01 : f32
    %208 = vector.broadcast %cst_70 : f32 to vector<32x1xf32>
    %209 = arith.divf %207, %208 : vector<32x1xf32>
    %210 = vector.broadcast %209 : vector<32x1xf32> to vector<32x32xf32>
    %211 = arith.subf %205, %210 : vector<32x32xf32>
    %212 = arith.mulf %211, %211 : vector<32x32xf32>
    %cst_71 = arith.constant dense<0.000000e+00> : vector<32xf32>
    %213 = vector.multi_reduction <add>, %212, %cst_71 [1] : vector<32x32xf32> to vector<32xf32>
    %214 = vector.shape_cast %213 : vector<32xf32> to vector<32x1xf32>
    %cst_72 = arith.constant 3.200000e+01 : f32
    %215 = vector.broadcast %cst_72 : f32 to vector<32x1xf32>
    %216 = arith.divf %214, %215 : vector<32x1xf32>
    %217 = vector.broadcast %209 : vector<32x1xf32> to vector<32x32xf32>
    %218 = arith.subf %205, %217 : vector<32x32xf32>
    %cst_73 = arith.constant 9.99999974E-6 : f32
    %219 = vector.broadcast %cst_73 : f32 to vector<32x1xf32>
    %220 = arith.addf %216, %219 : vector<32x1xf32>
    %221 = math.rsqrt %220 : vector<32x1xf32>
    %222 = vector.broadcast %221 : vector<32x1xf32> to vector<32x32xf32>
    %223 = arith.mulf %218, %222 : vector<32x32xf32>
    %224 = vector.broadcast %10 : vector<1x32xf32> to vector<32x32xf32>
    %225 = arith.mulf %223, %224 : vector<32x32xf32>
    %226 = vector.broadcast %11 : vector<1x32xf32> to vector<32x32xf32>
    %227 = arith.addf %225, %226 : vector<32x32xf32>
    %cst_74 = arith.constant 0.00999999977 : f32
    %228 = vector.broadcast %cst_74 : f32 to vector<32x32xf32>
    %229 = arith.mulf %228, %227 : vector<32x32xf32>
    %230 = arith.addf %142, %229 : vector<32x32xf32>
    %c0_75 = arith.constant 0 : index
    %c0_76 = arith.constant 0 : index
    %231 = vector.load %arg3[%c0_75, %c0_76] : memref<32x32xf32, #tpu.memory_space<vmem>>, vector<32x32xf32>
    tpu.vector_store %arg3[%c0_75, %c0_76], %230 {strides = array<i32>} : memref<32x32xf32, #tpu.memory_space<vmem>>, vector<32x32xf32>,
    return
  }
}

</mosaic_0001>

<llo_original>
// kernel: fus_language_vision.1
$region0: #{fus_language_vision.1}
  #allocation0 [shape = 'u32[]', space=smem, size = 0x4, offset = 0x4, fixed_abs, tag = 'smem constant byte address 0x4 - core index']
  #allocation1 [shape = 'u32[72,128]{1,0:T(1,128)}', space=vmem, size = 0x9000, scoped, tag = 'internal scratch']
  %s0 = inlined_call_operand.vmem [shape: f32[32,32], index: 0, kind: input, shape index: {}]
  %s1 = inlined_call_operand.vmem [shape: f32[32,64], index: 1, kind: input, shape index: {}]
  %s2 = inlined_call_operand.vmem [shape: f32[816,64], index: 2, kind: input, shape index: {}]
  %s3 = inlined_call_operand.hbm [shape: f32[32,32], index: 3, kind: output, shape index: {}]
  %s4 = sld [smem:[#allocation0]]
  $region22: #{fus_language_vision.1} parent=0
    _
  %s6 = ssub.s32 1, %s4
  %s7 = scalar_select 0, %s6, %s4
  $region1: #{fus_language_vision.1} parent=0
    #allocation2 [shape = 'u8[16384]{0}', space=vmem, size = 0x4000, scoped, tag = 'output window, operand 0, single buffered']
    #allocation3 [shape = 's32[1]{0}', space=sflag, size = 0x4, scoped, tag = 'scoped memory for fus_language_vision.1']
    %8 = vsyncpa [#allocation3], 0
    // Predicated region
    $region2: #{fus_language_vision.1} parent=1 // pred_check
      _
    $region3: #{fus_language_vision.1} parent=1 // pred_check_branch
      %10 = sbr.rel (0) target = $region5
    $region4: #{fus_language_vision.1} parent=1 // pred_region
      _
    $region5: #{fus_language_vision.1} parent=1 // pred_fallthru
      _
    // Predicated region
    $region6: #{fus_language_vision.1} parent=1 // pred_check
      _
    $region7: #{fus_language_vision.1} parent=1 // pred_check_branch
      %12 = sbr.rel (0) target = $region9
    $region8: #{fus_language_vision.1} parent=1 // pred_region
      _
    $region9: #{fus_language_vision.1} parent=1 // pred_fallthru
      _
    // Predicated region
    $region10: #{fus_language_vision.1} parent=1 // pred_check
      _
    $region11: #{fus_language_vision.1} parent=1 // pred_check_branch
      %14 = sbr.rel (0) target = $region13
    $region12: #{fus_language_vision.1} parent=1 // pred_region
      _
    $region13: #{fus_language_vision.1} parent=1 // pred_fallthru
      _
    %v15 = vld [vmem:[%s0] sm:$0xff]
    %v16 = vld [vmem:[%s0 + $0x8] sm:$0xff]
    %v17 = vld [vmem:[%s0 + $0x10] sm:$0xff]
    %v18 = vld [vmem:[%s0 + $0x18] sm:$0xff]
    %v19 = vld [vmem:[%s1] sm:$0xff]
    %v20 = vld [vmem:[%s1 + $0x8] sm:$0xff]
    %v21 = vld [vmem:[%s1 + $0x10] sm:$0xff]
    %v22 = vld [vmem:[%s1 + $0x18] sm:$0xff]
    %v23 = vld [vmem:[%s2 + $0x160] sm:$0xff]
    %v24 = vld [vmem:[%s2 + $0x168] sm:$0xff]
    %v25 = vld [vmem:[%s2] sm:$0xff]
    %v26 = vld [vmem:[%s2 + $0x8] sm:$0xff]
    %v27 = vld [vmem:[%s2 + $0x10] sm:$0xff]
    %v28 = vld [vmem:[%s2 + $0x18] sm:$0xff]
    %vm29 = vcmask 261120
    %v31 = vsel %vm29, %v25, 0
    %v34 = vsel %vm29, %v26, 0
    %36 = vmatpush.msra.mxu0 0.0
    %37 = vmatpush.msra.mxu0 0.0
    %38 = vmatpush.msra.mxu0 0.0
    %39 = vmatpush.msra.mxu0 0.0
    %40 = vmatpush.msra.mxu0 0.0
    %41 = vmatpush.msra.mxu0 0.0
    %42 = vmatpush.msra.mxu0 0.0
    %43 = vmatpush.msra.mxu0 0.0
    %44 = vmatpush.msra.mxu0 0.0
    %45 = vmatpush.msra.mxu0 0.0
    %46 = vmatpush.msra.mxu0 0.0
    %47 = vmatpush.msra.mxu0 0.0
    %v48 = vand.u32 %v22, 4294901760
    %49 = vmatpush.msra.mxu0 %v48
    %v50 = vand.u32 %v21, 4294901760
    %51 = vmatpush.msra.mxu0 %v50
    %v52 = vand.u32 %v20, 4294901760
    %53 = vmatpush.msra.mxu0 %v52
    %v54 = vand.u32 %v19, 4294901760
    %55 = vmatpush.msra.mxu0 %v54
    %v56 = vand.u32 %v31, 4294901760
    %v57 = vsub.f32 %v31, %v56
    %v58 = vand.u32 %v57, 4294901760
    %v59 = vsub.f32 %v57, %v58
    %v60 = vand.u32 %v59, 4294901760
    %61 = vmatmul.f32.gmra.mxu0 %v60
    %v62 = vpop.f32.mrf.mxu0
    %v63 = vadd.f32 %v27, %v62
    %v64 = vand.u32 %v34, 4294901760
    %v65 = vsub.f32 %v34, %v64
    %v66 = vand.u32 %v65, 4294901760
    %v67 = vsub.f32 %v65, %v66
    %v68 = vand.u32 %v67, 4294901760
    %69 = vmatmul.f32.gmra.mxu0 %v68
    %v70 = vpop.f32.mrf.mxu0
    %v71 = vadd.f32 %v28, %v70
    %72 = vdwg.mxu0
    %73 = vmatpush.msra.mxu0 0.0
    %74 = vmatpush.msra.mxu0 0.0
    %75 = vmatpush.msra.mxu0 0.0
    %76 = vmatpush.msra.mxu0 0.0
    %77 = vmatpush.msra.mxu0 0.0
    %78 = vmatpush.msra.mxu0 0.0
    %79 = vmatpush.msra.mxu0 0.0
    %80 = vmatpush.msra.mxu0 0.0
    %81 = vmatpush.msra.mxu0 0.0
    %82 = vmatpush.msra.mxu0 0.0
    %83 = vmatpush.msra.mxu0 0.0
    %84 = vmatpush.msra.mxu0 0.0
    %v85 = vand.u32 %v22, 4294901760
    %v86 = vsub.f32 %v22, %v85
    %v87 = vand.u32 %v86, 4294901760
    %v88 = vsub.f32 %v86, %v87
    %v89 = vand.u32 %v88, 4294901760
    %90 = vmatpush.msra.mxu0 %v89
    %v91 = vand.u32 %v21, 4294901760
    %v92 = vsub.f32 %v21, %v91
    %v93 = vand.u32 %v92, 4294901760
    %v94 = vsub.f32 %v92, %v93
    %v95 = vand.u32 %v94, 4294901760
    %96 = vmatpush.msra.mxu0 %v95
    %v97 = vand.u32 %v20, 4294901760
    %v98 = vsub.f32 %v20, %v97
    %v99 = vand.u32 %v98, 4294901760
    %v100 = vsub.f32 %v98, %v99
    %v101 = vand.u32 %v100, 4294901760
    %102 = vmatpush.msra.mxu0 %v101
    %v103 = vand.u32 %v19, 4294901760
    %v104 = vsub.f32 %v19, %v103
    %v105 = vand.u32 %v104, 4294901760
    %v106 = vsub.f32 %v104, %v105
    %v107 = vand.u32 %v106, 4294901760
    %108 = vmatpush.msra.mxu0 %v107
    %v109 = vand.u32 %v31, 4294901760
    %110 = vmatmul.f32.gmra.mxu0 %v109
    %v111 = vpop.f32.mrf.mxu0
    %v112 = vadd.f32 %v63, %v111
    %v113 = vand.u32 %v34, 4294901760
    %114 = vmatmul.f32.gmra.mxu0 %v113
    %v115 = vpop.f32.mrf.mxu0
    %v116 = vadd.f32 %v71, %v115
    %117 = vdwg.mxu0
    %118 = vmatpush.msra.mxu0 0.0
    %119 = vmatpush.msra.mxu0 0.0
    %120 = vmatpush.msra.mxu0 0.0
    %121 = vmatpush.msra.mxu0 0.0
    %122 = vmatpush.msra.mxu0 0.0
    %123 = vmatpush.msra.mxu0 0.0
    %124 = vmatpush.msra.mxu0 0.0
    %125 = vmatpush.msra.mxu0 0.0
    %126 = vmatpush.msra.mxu0 0.0
    %127 = vmatpush.msra.mxu0 0.0
    %128 = vmatpush.msra.mxu0 0.0
    %129 = vmatpush.msra.mxu0 0.0
    %v130 = vand.u32 %v22, 4294901760
    %v131 = vsub.f32 %v22, %v130
    %132 = vmatpush.msra.mxu0 %v131
    %v133 = vand.u32 %v21, 4294901760
    %v134 = vsub.f32 %v21, %v133
    %135 = vmatpush.msra.mxu0 %v134
    %v136 = vand.u32 %v20, 4294901760
    %v137 = vsub.f32 %v20, %v136
    %138 = vmatpush.msra.mxu0 %v137
    %v139 = vand.u32 %v19, 4294901760
    %v140 = vsub.f32 %v19, %v139
    %141 = vmatpush.msra.mxu0 %v140
    %v142 = vand.u32 %v31, 4294901760
    %v143 = vsub.f32 %v31, %v142
    %144 = vmatmul.f32.gmra.mxu0 %v143
    %v145 = vpop.f32.mrf.mxu0
    %v146 = vadd.f32 %v112, %v145
    %v147 = vand.u32 %v34, 4294901760
    %v148 = vsub.f32 %v34, %v147
    %149 = vmatmul.f32.gmra.mxu0 %v148
    %v150 = vpop.f32.mrf.mxu0
    %v151 = vadd.f32 %v116, %v150
    %152 = vdwg.mxu0
    %153 = vmatpush.msra.mxu0 0.0
    %154 = vmatpush.msra.mxu0 0.0
    %155 = vmatpush.msra.mxu0 0.0
    %156 = vmatpush.msra.mxu0 0.0
    %157 = vmatpush.msra.mxu0 0.0
    %158 = vmatpush.msra.mxu0 0.0
    %159 = vmatpush.msra.mxu0 0.0
    %160 = vmatpush.msra.mxu0 0.0
    %161 = vmatpush.msra.mxu0 0.0
    %162 = vmatpush.msra.mxu0 0.0
    %163 = vmatpush.msra.mxu0 0.0
    %164 = vmatpush.msra.mxu0 0.0
    %v165 = vand.u32 %v22, 4294901760
    %166 = vmatpush.msra.mxu0 %v165
    %v167 = vand.u32 %v21, 4294901760
    %168 = vmatpush.msra.mxu0 %v167
    %v169 = vand.u32 %v20, 4294901760
    %170 = vmatpush.msra.mxu0 %v169
    %v171 = vand.u32 %v19, 4294901760
    %172 = vmatpush.msra.mxu0 %v171
    %v173 = vand.u32 %v31, 4294901760
    %v174 = vsub.f32 %v31, %v173
    %v175 = vand.u32 %v174, 4294901760
    %176 = vmatmul.f32.gmra.mxu0 %v175
    %v177 = vpop.f32.mrf.mxu0
    %v178 = vadd.f32 %v146, %v177
    %v179 = vand.u32 %v34, 4294901760
    %v180 = vsub.f32 %v34, %v179
    %v181 = vand.u32 %v180, 4294901760
    %182 = vmatmul.f32.gmra.mxu0 %v181
    %v183 = vpop.f32.mrf.mxu0
    %v184 = vadd.f32 %v151, %v183
    %185 = vdwg.mxu0
    %186 = vmatpush.msra.mxu0 0.0
    %187 = vmatpush.msra.mxu0 0.0
    %188 = vmatpush.msra.mxu0 0.0
    %189 = vmatpush.msra.mxu0 0.0
    %190 = vmatpush.msra.mxu0 0.0
    %191 = vmatpush.msra.mxu0 0.0
    %192 = vmatpush.msra.mxu0 0.0
    %193 = vmatpush.msra.mxu0 0.0
    %194 = vmatpush.msra.mxu0 0.0
    %195 = vmatpush.msra.mxu0 0.0
    %196 = vmatpush.msra.mxu0 0.0
    %197 = vmatpush.msra.mxu0 0.0
    %v198 = vand.u32 %v22, 4294901760
    %v199 = vsub.f32 %v22, %v198
    %v200 = vand.u32 %v199, 4294901760
    %201 = vmatpush.msra.mxu0 %v200
    %v202 = vand.u32 %v21, 4294901760
    %v203 = vsub.f32 %v21, %v202
    %v204 = vand.u32 %v203, 4294901760
    %205 = vmatpush.msra.mxu0 %v204
    %v206 = vand.u32 %v20, 4294901760
    %v207 = vsub.f32 %v20, %v206
    %v208 = vand.u32 %v207, 4294901760
    %209 = vmatpush.msra.mxu0 %v208
    %v210 = vand.u32 %v19, 4294901760
    %v211 = vsub.f32 %v19, %v210
    %v212 = vand.u32 %v211, 4294901760
    %213 = vmatpush.msra.mxu0 %v212
    %v214 = vand.u32 %v31, 4294901760
    %215 = vmatmul.f32.gmra.mxu0 %v214
    %v216 = vpop.f32.mrf.mxu0
    %v217 = vadd.f32 %v178, %v216
    %v218 = vand.u32 %v34, 4294901760
    %219 = vmatmul.f32.gmra.mxu0 %v218
    %v220 = vpop.f32.mrf.mxu0
    %v221 = vadd.f32 %v184, %v220
    %222 = vdwg.mxu0
    %223 = vmatpush.msra.mxu0 0.0
    %224 = vmatpush.msra.mxu0 0.0
    %225 = vmatpush.msra.mxu0 0.0
    %226 = vmatpush.msra.mxu0 0.0
    %227 = vmatpush.msra.mxu0 0.0
    %228 = vmatpush.msra.mxu0 0.0
    %229 = vmatpush.msra.mxu0 0.0
    %230 = vmatpush.msra.mxu0 0.0
    %231 = vmatpush.msra.mxu0 0.0
    %232 = vmatpush.msra.mxu0 0.0
    %233 = vmatpush.msra.mxu0 0.0
    %234 = vmatpush.msra.mxu0 0.0
    %v235 = vand.u32 %v22, 4294901760
    %236 = vmatpush.msra.mxu0 %v235
    %v237 = vand.u32 %v21, 4294901760
    %238 = vmatpush.msra.mxu0 %v237
    %v239 = vand.u32 %v20, 4294901760
    %240 = vmatpush.msra.mxu0 %v239
    %v241 = vand.u32 %v19, 4294901760
    %242 = vmatpush.msra.mxu0 %v241
    %v243 = vand.u32 %v31, 4294901760
    %244 = vmatmul.f32.gmra.mxu0 %v243
    %v245 = vpop.f32.mrf.mxu0
    %v246 = vadd.f32 %v217, %v245
    %v247 = vand.u32 %v34, 4294901760
    %248 = vmatmul.f32.gmra.mxu0 %v247
    %v249 = vpop.f32.mrf.mxu0
    %v250 = vadd.f32 %v221, %v249
    %251 = vdwg.mxu0
    %v252 = vmul.f32 %v246, 0.5
    %v253 = vmul.f32 %v250, 0.5
    %v254 = vmul.f32 %v246, 0.70710677
    %v255 = vmul.f32 %v250, 0.70710677
    %vm256 = vcmp.lt.f32.partialorder %v254, 0.0
    %vm257 = vcmp.lt.f32.partialorder %v255, 0.0
    %v258 = vsel %vm256, -1.0, 1.0
    %v259 = vsel %vm257, -1.0, 1.0
    %v260 = vand.u32 2147483647, %v254
    %v261 = vand.u32 2147483647, %v255
    %v262 = vmul.f32 %v260, 0.3275911
    %v263 = vmul.f32 %v261, 0.3275911
    %v264 = vadd.f32 %v262, 1.0
    %v265 = vadd.f32 %v263, 1.0
    %v266 = vrcp.pop %v264
    %v267 = vmul.f32 %v264, %v266
    %v268 = vsub.f32 1.0, %v267
    %v269 = vmul.f32 %v266, %v268
    %v270 = vadd.f32 %v266, %v269
    %vm271 = vweird.f32 %v264
    %vm272 = vweird.f32 %v266
    %vm273 = vmor %vm271, %vm272
    %v274 = vsel %vm273, %v266, %v270
    %v275 = vand.u32 2147483647, %v264
    %vm276 = vcmp.eq.f32.partialorder %v275, 8.507059e+37
    %v277 = vand.u32 %v264, 2147483648
    %v278 = vor.u32 1.1754944e-38, %v277
    %v279 = vsel %vm276, %v278, %v274
    %v280 = vmul.f32 1.0, %v279
    %v281 = vrcp.pop %v265
    %v282 = vmul.f32 %v265, %v281
    %v283 = vsub.f32 1.0, %v282
    %v284 = vmul.f32 %v281, %v283
    %v285 = vadd.f32 %v281, %v284
    %vm286 = vweird.f32 %v265
    %vm287 = vweird.f32 %v281
    %vm288 = vmor %vm286, %vm287
    %v289 = vsel %vm288, %v281, %v285
    %v290 = vand.u32 2147483647, %v265
    %vm291 = vcmp.eq.f32.partialorder %v290, 8.507059e+37
    %v292 = vand.u32 %v265, 2147483648
    %v293 = vor.u32 1.1754944e-38, %v292
    %v294 = vsel %vm291, %v293, %v289
    %v295 = vmul.f32 1.0, %v294
    %v296 = vmul.f32 %v280, 1.0614054
    %v297 = vmul.f32 %v295, 1.0614054
    %v298 = vadd.f32 %v296, -1.4531521
    %v299 = vadd.f32 %v297, -1.4531521
    %v300 = vmul.f32 %v298, %v280
    %v301 = vmul.f32 %v299, %v295
    %v302 = vadd.f32 %v300, 1.4214138
    %v303 = vadd.f32 %v301, 1.4214138
    %v304 = vmul.f32 %v302, %v280
    %v305 = vmul.f32 %v303, %v295
    %v306 = vadd.f32 %v304, -0.28449672
    %v307 = vadd.f32 %v305, -0.28449672
    %v308 = vmul.f32 %v306, %v280
    %v309 = vmul.f32 %v307, %v295
    %v310 = vadd.f32 %v308, 0.2548296
    %v311 = vadd.f32 %v309, 0.2548296
    %v312 = vmul.f32 %v310, %v280
    %v313 = vmul.f32 %v311, %v295
    %v314 = vsub.f32 0.0, %v260
    %v315 = vsub.f32 0.0, %v261
    %v316 = vmul.f32 %v314, %v260
    %v317 = vmul.f32 %v315, %v261
    %v318 = vmul.f32 %v316, 1.442695
    %v319 = vpow.pop %v318
    %v320 = vmul.f32 %v317, 1.442695
    %v321 = vpow.pop %v320
    %v322 = vmul.f32 %v312, %v319
    %v323 = vmul.f32 %v313, %v321
    %v324 = vsub.f32 1.0, %v322
    %v325 = vsub.f32 1.0, %v323
    %v326 = vmul.f32 %v258, %v324
    %v327 = vmul.f32 %v259, %v325
    %v328 = vadd.f32 %v326, 1.0
    %v329 = vadd.f32 %v327, 1.0
    %v330 = vmul.f32 %v252, %v328
    %v331 = vmul.f32 %v253, %v329
    %v332 = vld [vmem:[%s2 + $0x20] sm:$0xff]
    %v333 = vld [vmem:[%s2 + $0x28] sm:$0xff]
    %v334 = vld [vmem:[%s2 + $0x30] sm:$0xff]
    %v335 = vld [vmem:[%s2 + $0x38] sm:$0xff]
    %v336 = vld [vmem:[%s2 + $0x40] sm:$0xff]
    %v337 = vld [vmem:[%s2 + $0x48] sm:$0xff]
    %v338 = vld [vmem:[%s2 + $0x50] sm:$0xff]
    %v339 = vld [vmem:[%s2 + $0x58] sm:$0xff]
    %v340 = vperm.slane %v23, 0
    %vm341 = vcmask 523264
    %v343 = vsel %vm341, %v330, 0
    %v346 = vsel %vm341, %v331, 0
    %348 = vmatpush.msra.mxu0 0.0
    %349 = vmatpush.msra.mxu0 0.0
    %350 = vmatpush.msra.mxu0 0.0
    %351 = vmatpush.msra.mxu0 0.0
    %352 = vmatpush.msra.mxu0 0.0
    %353 = vmatpush.msra.mxu0 0.0
    %354 = vmatpush.msra.mxu0 0.0
    %355 = vmatpush.msra.mxu0 0.0
    %v356 = vand.u32 %v339, 4294901760
    %357 = vmatpush.msra.mxu0 %v356
    %v358 = vand.u32 %v338, 4294901760
    %359 = vmatpush.msra.mxu0 %v358
    %v360 = vand.u32 %v337, 4294901760
    %361 = vmatpush.msra.mxu0 %v360
    %v362 = vand.u32 %v336, 4294901760
    %363 = vmatpush.msra.mxu0 %v362
    %v364 = vand.u32 %v335, 4294901760
    %365 = vmatpush.msra.mxu0 %v364
    %v366 = vand.u32 %v334, 4294901760
    %367 = vmatpush.msra.mxu0 %v366
    %v368 = vand.u32 %v333, 4294901760
    %369 = vmatpush.msra.mxu0 %v368
    %v370 = vand.u32 %v332, 4294901760
    %371 = vmatpush.msra.mxu0 %v370
    %v372 = vand.u32 %v343, 4294901760
    %v373 = vsub.f32 %v343, %v372
    %v374 = vand.u32 %v373, 4294901760
    %v375 = vsub.f32 %v373, %v374
    %v376 = vand.u32 %v375, 4294901760
    %377 = vmatmul.f32.gmra.mxu0 %v376
    %v378 = vpop.f32.mrf.mxu0
    %v379 = vadd.f32 %v340, %v378
    %v380 = vand.u32 %v346, 4294901760
    %v381 = vsub.f32 %v346, %v380
    %v382 = vand.u32 %v381, 4294901760
    %v383 = vsub.f32 %v381, %v382
    %v384 = vand.u32 %v383, 4294901760
    %385 = vmatmul.f32.gmra.mxu0 %v384
    %v386 = vpop.f32.mrf.mxu0
    %v387 = vadd.f32 %v340, %v386
    %388 = vdwg.mxu0
    %389 = vmatpush.msra.mxu0 0.0
    %390 = vmatpush.msra.mxu0 0.0
    %391 = vmatpush.msra.mxu0 0.0
    %392 = vmatpush.msra.mxu0 0.0
    %393 = vmatpush.msra.mxu0 0.0
    %394 = vmatpush.msra.mxu0 0.0
    %395 = vmatpush.msra.mxu0 0.0
    %396 = vmatpush.msra.mxu0 0.0
    %v397 = vand.u32 %v339, 4294901760
    %v398 = vsub.f32 %v339, %v397
    %v399 = vand.u32 %v398, 4294901760
    %v400 = vsub.f32 %v398, %v399
    %v401 = vand.u32 %v400, 4294901760
    %402 = vmatpush.msra.mxu0 %v401
    %v403 = vand.u32 %v338, 4294901760
    %v404 = vsub.f32 %v338, %v403
    %v405 = vand.u32 %v404, 4294901760
    %v406 = vsub.f32 %v404, %v405
    %v407 = vand.u32 %v406, 4294901760
    %408 = vmatpush.msra.mxu0 %v407
    %v409 = vand.u32 %v337, 4294901760
    %v410 = vsub.f32 %v337, %v409
    %v411 = vand.u32 %v410, 4294901760
    %v412 = vsub.f32 %v410, %v411
    %v413 = vand.u32 %v412, 4294901760
    %414 = vmatpush.msra.mxu0 %v413
    %v415 = vand.u32 %v336, 4294901760
    %v416 = vsub.f32 %v336, %v415
    %v417 = vand.u32 %v416, 4294901760
    %v418 = vsub.f32 %v416, %v417
    %v419 = vand.u32 %v418, 4294901760
    %420 = vmatpush.msra.mxu0 %v419
    %v421 = vand.u32 %v335, 4294901760
    %v422 = vsub.f32 %v335, %v421
    %v423 = vand.u32 %v422, 4294901760
    %v424 = vsub.f32 %v422, %v423
    %v425 = vand.u32 %v424, 4294901760
    %426 = vmatpush.msra.mxu0 %v425
    %v427 = vand.u32 %v334, 4294901760
    %v428 = vsub.f32 %v334, %v427
    %v429 = vand.u32 %v428, 4294901760
    %v430 = vsub.f32 %v428, %v429
    %v431 = vand.u32 %v430, 4294901760
    %432 = vmatpush.msra.mxu0 %v431
    %v433 = vand.u32 %v333, 4294901760
    %v434 = vsub.f32 %v333, %v433
    %v435 = vand.u32 %v434, 4294901760
    %v436 = vsub.f32 %v434, %v435
    %v437 = vand.u32 %v436, 4294901760
    %438 = vmatpush.msra.mxu0 %v437
    %v439 = vand.u32 %v332, 4294901760
    %v440 = vsub.f32 %v332, %v439
    %v441 = vand.u32 %v440, 4294901760
    %v442 = vsub.f32 %v440, %v441
    %v443 = vand.u32 %v442, 4294901760
    %444 = vmatpush.msra.mxu0 %v443
    %v445 = vand.u32 %v343, 4294901760
    %446 = vmatmul.f32.gmra.mxu0 %v445
    %v447 = vpop.f32.mrf.mxu0
    %v448 = vadd.f32 %v379, %v447
    %v449 = vand.u32 %v346, 4294901760
    %450 = vmatmul.f32.gmra.mxu0 %v449
    %v451 = vpop.f32.mrf.mxu0
    %v452 = vadd.f32 %v387, %v451
    %453 = vdwg.mxu0
    %454 = vmatpush.msra.mxu0 0.0
    %455 = vmatpush.msra.mxu0 0.0
    %456 = vmatpush.msra.mxu0 0.0
    %457 = vmatpush.msra.mxu0 0.0
    %458 = vmatpush.msra.mxu0 0.0
    %459 = vmatpush.msra.mxu0 0.0
    %460 = vmatpush.msra.mxu0 0.0
    %461 = vmatpush.msra.mxu0 0.0
    %v462 = vand.u32 %v339, 4294901760
    %v463 = vsub.f32 %v339, %v462
    %464 = vmatpush.msra.mxu0 %v463
    %v465 = vand.u32 %v338, 4294901760
    %v466 = vsub.f32 %v338, %v465
    %467 = vmatpush.msra.mxu0 %v466
    %v468 = vand.u32 %v337, 4294901760
    %v469 = vsub.f32 %v337, %v468
    %470 = vmatpush.msra.mxu0 %v469
    %v471 = vand.u32 %v336, 4294901760
    %v472 = vsub.f32 %v336, %v471
    %473 = vmatpush.msra.mxu0 %v472
    %v474 = vand.u32 %v335, 4294901760
    %v475 = vsub.f32 %v335, %v474
    %476 = vmatpush.msra.mxu0 %v475
    %v477 = vand.u32 %v334, 4294901760
    %v478 = vsub.f32 %v334, %v477
    %479 = vmatpush.msra.mxu0 %v478
    %v480 = vand.u32 %v333, 4294901760
    %v481 = vsub.f32 %v333, %v480
    %482 = vmatpush.msra.mxu0 %v481
    %v483 = vand.u32 %v332, 4294901760
    %v484 = vsub.f32 %v332, %v483
    %485 = vmatpush.msra.mxu0 %v484
    %v486 = vand.u32 %v343, 4294901760
    %v487 = vsub.f32 %v343, %v486
    %488 = vmatmul.f32.gmra.mxu0 %v487
    %v489 = vpop.f32.mrf.mxu0
    %v490 = vadd.f32 %v448, %v489
    %v491 = vand.u32 %v346, 4294901760
    %v492 = vsub.f32 %v346, %v491
    %493 = vmatmul.f32.gmra.mxu0 %v492
    %v494 = vpop.f32.mrf.mxu0
    %v495 = vadd.f32 %v452, %v494
    %496 = vdwg.mxu0
    %497 = vmatpush.msra.mxu0 0.0
    %498 = vmatpush.msra.mxu0 0.0
    %499 = vmatpush.msra.mxu0 0.0
    %500 = vmatpush.msra.mxu0 0.0
    %501 = vmatpush.msra.mxu0 0.0
    %502 = vmatpush.msra.mxu0 0.0
    %503 = vmatpush.msra.mxu0 0.0
    %504 = vmatpush.msra.mxu0 0.0
    %v505 = vand.u32 %v339, 4294901760
    %506 = vmatpush.msra.mxu0 %v505
    %v507 = vand.u32 %v338, 4294901760
    %508 = vmatpush.msra.mxu0 %v507
    %v509 = vand.u32 %v337, 4294901760
    %510 = vmatpush.msra.mxu0 %v509
    %v511 = vand.u32 %v336, 4294901760
    %512 = vmatpush.msra.mxu0 %v511
    %v513 = vand.u32 %v335, 4294901760
    %514 = vmatpush.msra.mxu0 %v513
    %v515 = vand.u32 %v334, 4294901760
    %516 = vmatpush.msra.mxu0 %v515
    %v517 = vand.u32 %v333, 4294901760
    %518 = vmatpush.msra.mxu0 %v517
    %v519 = vand.u32 %v332, 4294901760
    %520 = vmatpush.msra.mxu0 %v519
    %v521 = vand.u32 %v343, 4294901760
    %v522 = vsub.f32 %v343, %v521
    %v523 = vand.u32 %v522, 4294901760
    %524 = vmatmul.f32.gmra.mxu0 %v523
    %v525 = vpop.f32.mrf.mxu0
    %v526 = vadd.f32 %v490, %v525
    %v527 = vand.u32 %v346, 4294901760
    %v528 = vsub.f32 %v346, %v527
    %v529 = vand.u32 %v528, 4294901760
    %530 = vmatmul.f32.gmra.mxu0 %v529
    %v531 = vpop.f32.mrf.mxu0
    %v532 = vadd.f32 %v495, %v531
    %533 = vdwg.mxu0
    %534 = vmatpush.msra.mxu0 0.0
    %535 = vmatpush.msra.mxu0 0.0
    %536 = vmatpush.msra.mxu0 0.0
    %537 = vmatpush.msra.mxu0 0.0
    %538 = vmatpush.msra.mxu0 0.0
    %539 = vmatpush.msra.mxu0 0.0
    %540 = vmatpush.msra.mxu0 0.0
    %541 = vmatpush.msra.mxu0 0.0
    %v542 = vand.u32 %v339, 4294901760
    %v543 = vsub.f32 %v339, %v542
    %v544 = vand.u32 %v543, 4294901760
    %545 = vmatpush.msra.mxu0 %v544
    %v546 = vand.u32 %v338, 4294901760
    %v547 = vsub.f32 %v338, %v546
    %v548 = vand.u32 %v547, 4294901760
    %549 = vmatpush.msra.mxu0 %v548
    %v550 = vand.u32 %v337, 4294901760
    %v551 = vsub.f32 %v337, %v550
    %v552 = vand.u32 %v551, 4294901760
    %553 = vmatpush.msra.mxu0 %v552
    %v554 = vand.u32 %v336, 4294901760
    %v555 = vsub.f32 %v336, %v554
    %v556 = vand.u32 %v555, 4294901760
    %557 = vmatpush.msra.mxu0 %v556
    %v558 = vand.u32 %v335, 4294901760
    %v559 = vsub.f32 %v335, %v558
    %v560 = vand.u32 %v559, 4294901760
    %561 = vmatpush.msra.mxu0 %v560
    %v562 = vand.u32 %v334, 4294901760
    %v563 = vsub.f32 %v334, %v562
    %v564 = vand.u32 %v563, 4294901760
    %565 = vmatpush.msra.mxu0 %v564
    %v566 = vand.u32 %v333, 4294901760
    %v567 = vsub.f32 %v333, %v566
    %v568 = vand.u32 %v567, 4294901760
    %569 = vmatpush.msra.mxu0 %v568
    %v570 = vand.u32 %v332, 4294901760
    %v571 = vsub.f32 %v332, %v570
    %v572 = vand.u32 %v571, 4294901760
    %573 = vmatpush.msra.mxu0 %v572
    %v574 = vand.u32 %v343, 4294901760
    %575 = vmatmul.f32.gmra.mxu0 %v574
    %v576 = vpop.f32.mrf.mxu0
    %v577 = vadd.f32 %v526, %v576
    %v578 = vand.u32 %v346, 4294901760
    %579 = vmatmul.f32.gmra.mxu0 %v578
    %v580 = vpop.f32.mrf.mxu0
    %v581 = vadd.f32 %v532, %v580
    %582 = vdwg.mxu0
    %583 = vmatpush.msra.mxu0 0.0
    %584 = vmatpush.msra.mxu0 0.0
    %585 = vmatpush.msra.mxu0 0.0
    %586 = vmatpush.msra.mxu0 0.0
    %587 = vmatpush.msra.mxu0 0.0
    %588 = vmatpush.msra.mxu0 0.0
    %589 = vmatpush.msra.mxu0 0.0
    %590 = vmatpush.msra.mxu0 0.0
    %v591 = vand.u32 %v339, 4294901760
    %592 = vmatpush.msra.mxu0 %v591
    %v593 = vand.u32 %v338, 4294901760
    %594 = vmatpush.msra.mxu0 %v593
    %v595 = vand.u32 %v337, 4294901760
    %596 = vmatpush.msra.mxu0 %v595
    %v597 = vand.u32 %v336, 4294901760
    %598 = vmatpush.msra.mxu0 %v597
    %v599 = vand.u32 %v335, 4294901760
    %600 = vmatpush.msra.mxu0 %v599
    %v601 = vand.u32 %v334, 4294901760
    %602 = vmatpush.msra.mxu0 %v601
    %v603 = vand.u32 %v333, 4294901760
    %604 = vmatpush.msra.mxu0 %v603
    %v605 = vand.u32 %v332, 4294901760
    %606 = vmatpush.msra.mxu0 %v605
    %v607 = vand.u32 %v343, 4294901760
    %608 = vmatmul.f32.gmra.mxu0 %v607
    %v609 = vpop.f32.mrf.mxu0
    %v610 = vadd.f32 %v577, %v609
    %v611 = vand.u32 %v346, 4294901760
    %612 = vmatmul.f32.gmra.mxu0 %v611
    %v613 = vpop.f32.mrf.mxu0
    %v614 = vadd.f32 %v581, %v613
    %615 = vdwg.mxu0
    %vm616 = vcmp.ge.f32.partialorder %v610, 0.0
    %vm617 = vcmp.ge.f32.partialorder %v614, 0.0
    %v618 = vmul.f32 %v610, 0.01
    %v619 = vmul.f32 %v614, 0.01
    %v620 = vsel %vm616, %v610, %v618
    %v621 = vsel %vm617, %v614, %v619
    %v622 = vld [vmem:[%s2 + $0x60] sm:$0xff]
    %v623 = vld [vmem:[%s2 + $0x68] sm:$0xff]
    %v624 = vld [vmem:[%s2 + $0x70] sm:$0xff]
    %v625 = vld [vmem:[%s2 + $0x78] sm:$0xff]
    %v626 = vld [vmem:[%s2 + $0x80] sm:$0xff]
    %v627 = vld [vmem:[%s2 + $0x88] sm:$0xff]
    %v628 = vld [vmem:[%s2 + $0x90] sm:$0xff]
    %v629 = vld [vmem:[%s2 + $0x98] sm:$0xff]
    %v630 = vld [vmem:[%s2 + $0xa0] sm:$0xff]
    %v631 = vld [vmem:[%s2 + $0xa8] sm:$0xff]
    %v632 = vld [vmem:[%s2 + $0xb0] sm:$0xff]
    %v633 = vld [vmem:[%s2 + $0xb8] sm:$0xff]
    %v634 = vld [vmem:[%s2 + $0xc0] sm:$0xff]
    %v635 = vld [vmem:[%s2 + $0xc8] sm:$0xff]
    %v636 = vld [vmem:[%s2 + $0xd0] sm:$0xff]
    %v637 = vld [vmem:[%s2 + $0xd8] sm:$0xff]
    %v638 = vsel %vm29, %v15, 0.0
    %639 = vadd.xlane.f32.xlu0 %v638
    %v640 = vpop.xlane.xlu0 %639
    %v641 = vsel %vm29, %v16, 0.0
    %642 = vadd.xlane.f32.xlu0 %v641
    %v643 = vpop.xlane.xlu0 %642
    %v644 = vsel %vm29, %v17, 0.0
    %645 = vadd.xlane.f32.xlu0 %v644
    %v646 = vpop.xlane.xlu0 %645
    %v647 = vsel %vm29, %v18, 0.0
    %648 = vadd.xlane.f32.xlu0 %v647
    %v649 = vpop.xlane.xlu0 %648
    %v650 = vrcp.pop 32.0
    %v651 = vmul.f32 32.0, %v650
    %v652 = vsub.f32 1.0, %v651
    %v653 = vmul.f32 %v650, %v652
    %v654 = vadd.f32 %v650, %v653
    %vm655 = vweird.f32 %v650
    %v656 = vsel %vm655, %v650, %v654
    %v657 = vmul.f32 %v640, %v656
    %v658 = vmul.f32 %v643, %v656
    %v659 = vmul.f32 %v646, %v656
    %v660 = vmul.f32 %v649, %v656
    %v661 = vsub.f32 %v15, %v657
    %v662 = vsub.f32 %v16, %v658
    %v663 = vsub.f32 %v17, %v659
    %v664 = vsub.f32 %v18, %v660
    %v665 = vmul.f32 %v661, %v661
    %v666 = vmul.f32 %v662, %v662
    %v667 = vmul.f32 %v663, %v663
    %v668 = vmul.f32 %v664, %v664
    %v669 = vsel %vm29, %v665, 0.0
    %670 = vadd.xlane.f32.xlu0 %v669
    %v671 = vpop.xlane.xlu0 %670
    %v672 = vsel %vm29, %v666, 0.0
    %673 = vadd.xlane.f32.xlu0 %v672
    %v674 = vpop.xlane.xlu0 %673
    %v675 = vsel %vm29, %v667, 0.0
    %676 = vadd.xlane.f32.xlu0 %v675
    %v677 = vpop.xlane.xlu0 %676
    %v678 = vsel %vm29, %v668, 0.0
    %679 = vadd.xlane.f32.xlu0 %v678
    %v680 = vpop.xlane.xlu0 %679
    %v681 = vmul.f32 %v671, %v656
    %v682 = vmul.f32 %v674, %v656
    %v683 = vmul.f32 %v677, %v656
    %v684 = vmul.f32 %v680, %v656
    %v685 = vadd.f32 %v681, 1e-05
    %v686 = vadd.f32 %v682, 1e-05
    %v687 = vadd.f32 %v683, 1e-05
    %v688 = vadd.f32 %v684, 1e-05
    %v689 = vrsqrt.pop %v685
    %v690 = vmul.f32 %v689, %v685
    %v691 = vmul.f32 %v690, %v689
    %v692 = vmul.f32 0.5, %v691
    %v693 = vsub.f32 1.5, %v692
    %v694 = vmul.f32 %v689, %v693
    %vm695 = vweird.f32 %v685
    %vm696 = vweird.f32 %v689
    %vm697 = vmor %vm695, %vm696
    %v698 = vsel %vm697, %v689, %v694
    %v699 = vrsqrt.pop %v686
    %v700 = vmul.f32 %v699, %v686
    %v701 = vmul.f32 %v700, %v699
    %v702 = vmul.f32 0.5, %v701
    %v703 = vsub.f32 1.5, %v702
    %v704 = vmul.f32 %v699, %v703
    %vm705 = vweird.f32 %v686
    %vm706 = vweird.f32 %v699
    %vm707 = vmor %vm705, %vm706
    %v708 = vsel %vm707, %v699, %v704
    %v709 = vrsqrt.pop %v687
    %v710 = vmul.f32 %v709, %v687
    %v711 = vmul.f32 %v710, %v709
    %v712 = vmul.f32 0.5, %v711
    %v713 = vsub.f32 1.5, %v712
    %v714 = vmul.f32 %v709, %v713
    %vm715 = vweird.f32 %v687
    %vm716 = vweird.f32 %v709
    %vm717 = vmor %vm715, %vm716
    %v718 = vsel %vm717, %v709, %v714
    %v719 = vrsqrt.pop %v688
    %v720 = vmul.f32 %v719, %v688
    %v721 = vmul.f32 %v720, %v719
    %v722 = vmul.f32 0.5, %v721
    %v723 = vsub.f32 1.5, %v722
    %v724 = vmul.f32 %v719, %v723
    %vm725 = vweird.f32 %v688
    %vm726 = vweird.f32 %v719
    %vm727 = vmor %vm725, %vm726
    %v728 = vsel %vm727, %v719, %v724
    %v729 = vmul.f32 %v661, %v698
    %v730 = vmul.f32 %v662, %v708
    %v731 = vmul.f32 %v663, %v718
    %v732 = vmul.f32 %v664, %v728
    %v733 = vperm.slane %v23, 1
    %v734 = vmul.f32 %v729, %v733
    %v735 = vmul.f32 %v730, %v733
    %v736 = vmul.f32 %v731, %v733
    %v737 = vmul.f32 %v732, %v733
    %v738 = vperm.slane %v23, 2
    %v739 = vadd.f32 %v734, %v738
    %v740 = vadd.f32 %v735, %v738
    %v741 = vadd.f32 %v736, %v738
    %v742 = vadd.f32 %v737, %v738
    %v743 = vld [vmem:[%s2 + $0x170] sm:$0xff]
    %v744 = vld [vmem:[%s2 + $0x178] sm:$0xff]
    %v745 = vld [vmem:[%s2 + $0x180] sm:$0xff]
    %v746 = vld [vmem:[%s2 + $0x188] sm:$0xff]
    %v748 = vsel %vm29, %v739, 0
    %v751 = vsel %vm29, %v740, 0
    %v754 = vsel %vm29, %v741, 0
    %v757 = vsel %vm29, %v742, 0
    %759 = vmatpush.msra.mxu0 0.0
    %760 = vmatpush.msra.mxu0 0.0
    %761 = vmatpush.msra.mxu0 0.0
    %762 = vmatpush.msra.mxu0 0.0
    %763 = vmatpush.msra.mxu0 0.0
    %764 = vmatpush.msra.mxu0 0.0
    %765 = vmatpush.msra.mxu0 0.0
    %766 = vmatpush.msra.mxu0 0.0
    %767 = vmatpush.msra.mxu0 0.0
    %768 = vmatpush.msra.mxu0 0.0
    %769 = vmatpush.msra.mxu0 0.0
    %770 = vmatpush.msra.mxu0 0.0
    %v771 = vand.u32 %v625, 4294901760
    %772 = vmatpush.msra.mxu0 %v771
    %v773 = vand.u32 %v624, 4294901760
    %774 = vmatpush.msra.mxu0 %v773
    %v775 = vand.u32 %v623, 4294901760
    %776 = vmatpush.msra.mxu0 %v775
    %v777 = vand.u32 %v622, 4294901760
    %778 = vmatpush.msra.mxu0 %v777
    %v779 = vand.u32 %v748, 4294901760
    %v780 = vsub.f32 %v748, %v779
    %v781 = vand.u32 %v780, 4294901760
    %v782 = vsub.f32 %v780, %v781
    %v783 = vand.u32 %v782, 4294901760
    %784 = vmatmul.f32.gmra.mxu0 %v783
    %v785 = vpop.f32.mrf.mxu0
    %v786 = vadd.f32 %v743, %v785
    %v787 = vand.u32 %v751, 4294901760
    %v788 = vsub.f32 %v751, %v787
    %v789 = vand.u32 %v788, 4294901760
    %v790 = vsub.f32 %v788, %v789
    %v791 = vand.u32 %v790, 4294901760
    %792 = vmatmul.f32.gmra.mxu0 %v791
    %v793 = vpop.f32.mrf.mxu0
    %v794 = vadd.f32 %v744, %v793
    %v795 = vand.u32 %v754, 4294901760
    %v796 = vsub.f32 %v754, %v795
    %v797 = vand.u32 %v796, 4294901760
    %v798 = vsub.f32 %v796, %v797
    %v799 = vand.u32 %v798, 4294901760
    %800 = vmatmul.f32.gmra.mxu0 %v799
    %v801 = vpop.f32.mrf.mxu0
    %v802 = vadd.f32 %v745, %v801
    %v803 = vand.u32 %v757, 4294901760
    %v804 = vsub.f32 %v757, %v803
    %v805 = vand.u32 %v804, 4294901760
    %v806 = vsub.f32 %v804, %v805
    %v807 = vand.u32 %v806, 4294901760
    %808 = vmatmul.f32.gmra.mxu0 %v807
    %v809 = vpop.f32.mrf.mxu0
    %v810 = vadd.f32 %v746, %v809
    %811 = vdwg.mxu0
    %812 = vmatpush.msra.mxu0 0.0
    %813 = vmatpush.msra.mxu0 0.0
    %814 = vmatpush.msra.mxu0 0.0
    %815 = vmatpush.msra.mxu0 0.0
    %816 = vmatpush.msra.mxu0 0.0
    %817 = vmatpush.msra.mxu0 0.0
    %818 = vmatpush.msra.mxu0 0.0
    %819 = vmatpush.msra.mxu0 0.0
    %820 = vmatpush.msra.mxu0 0.0
    %821 = vmatpush.msra.mxu0 0.0
    %822 = vmatpush.msra.mxu0 0.0
    %823 = vmatpush.msra.mxu0 0.0
    %v824 = vand.u32 %v625, 4294901760
    %v825 = vsub.f32 %v625, %v824
    %v826 = vand.u32 %v825, 4294901760
    %v827 = vsub.f32 %v825, %v826
    %v828 = vand.u32 %v827, 4294901760
    %829 = vmatpush.msra.mxu0 %v828
    %v830 = vand.u32 %v624, 4294901760
    %v831 = vsub.f32 %v624, %v830
    %v832 = vand.u32 %v831, 4294901760
    %v833 = vsub.f32 %v831, %v832
    %v834 = vand.u32 %v833, 4294901760
    %835 = vmatpush.msra.mxu0 %v834
    %v836 = vand.u32 %v623, 4294901760
    %v837 = vsub.f32 %v623, %v836
    %v838 = vand.u32 %v837, 4294901760
    %v839 = vsub.f32 %v837, %v838
    %v840 = vand.u32 %v839, 4294901760
    %841 = vmatpush.msra.mxu0 %v840
    %v842 = vand.u32 %v622, 4294901760
    %v843 = vsub.f32 %v622, %v842
    %v844 = vand.u32 %v843, 4294901760
    %v845 = vsub.f32 %v843, %v844
    %v846 = vand.u32 %v845, 4294901760
    %847 = vmatpush.msra.mxu0 %v846
    %v848 = vand.u32 %v748, 4294901760
    %849 = vmatmul.f32.gmra.mxu0 %v848
    %v850 = vpop.f32.mrf.mxu0
    %v851 = vadd.f32 %v786, %v850
    %v852 = vand.u32 %v751, 4294901760
    %853 = vmatmul.f32.gmra.mxu0 %v852
    %v854 = vpop.f32.mrf.mxu0
    %v855 = vadd.f32 %v794, %v854
    %v856 = vand.u32 %v754, 4294901760
    %857 = vmatmul.f32.gmra.mxu0 %v856
    %v858 = vpop.f32.mrf.mxu0
    %v859 = vadd.f32 %v802, %v858
    %v860 = vand.u32 %v757, 4294901760
    %861 = vmatmul.f32.gmra.mxu0 %v860
    %v862 = vpop.f32.mrf.mxu0
    %v863 = vadd.f32 %v810, %v862
    %864 = vdwg.mxu0
    %865 = vmatpush.msra.mxu0 0.0
    %866 = vmatpush.msra.mxu0 0.0
    %867 = vmatpush.msra.mxu0 0.0
    %868 = vmatpush.msra.mxu0 0.0
    %869 = vmatpush.msra.mxu0 0.0
    %870 = vmatpush.msra.mxu0 0.0
    %871 = vmatpush.msra.mxu0 0.0
    %872 = vmatpush.msra.mxu0 0.0
    %873 = vmatpush.msra.mxu0 0.0
    %874 = vmatpush.msra.mxu0 0.0
    %875 = vmatpush.msra.mxu0 0.0
    %876 = vmatpush.msra.mxu0 0.0
    %v877 = vand.u32 %v625, 4294901760
    %v878 = vsub.f32 %v625, %v877
    %879 = vmatpush.msra.mxu0 %v878
    %v880 = vand.u32 %v624, 4294901760
    %v881 = vsub.f32 %v624, %v880
    %882 = vmatpush.msra.mxu0 %v881
    %v883 = vand.u32 %v623, 4294901760
    %v884 = vsub.f32 %v623, %v883
    %885 = vmatpush.msra.mxu0 %v884
    %v886 = vand.u32 %v622, 4294901760
    %v887 = vsub.f32 %v622, %v886
    %888 = vmatpush.msra.mxu0 %v887
    %v889 = vand.u32 %v748, 4294901760
    %v890 = vsub.f32 %v748, %v889
    %891 = vmatmul.f32.gmra.mxu0 %v890
    %v892 = vpop.f32.mrf.mxu0
    %v893 = vadd.f32 %v851, %v892
    %v894 = vand.u32 %v751, 4294901760
    %v895 = vsub.f32 %v751, %v894
    %896 = vmatmul.f32.gmra.mxu0 %v895
    %v897 = vpop.f32.mrf.mxu0
    %v898 = vadd.f32 %v855, %v897
    %v899 = vand.u32 %v754, 4294901760
    %v900 = vsub.f32 %v754, %v899
    %901 = vmatmul.f32.gmra.mxu0 %v900
    %v902 = vpop.f32.mrf.mxu0
    %v903 = vadd.f32 %v859, %v902
    %v904 = vand.u32 %v757, 4294901760
    %v905 = vsub.f32 %v757, %v904
    %906 = vmatmul.f32.gmra.mxu0 %v905
    %v907 = vpop.f32.mrf.mxu0
    %v908 = vadd.f32 %v863, %v907
    %909 = vdwg.mxu0
    %910 = vmatpush.msra.mxu0 0.0
    %911 = vmatpush.msra.mxu0 0.0
    %912 = vmatpush.msra.mxu0 0.0
    %913 = vmatpush.msra.mxu0 0.0
    %914 = vmatpush.msra.mxu0 0.0
    %915 = vmatpush.msra.mxu0 0.0
    %916 = vmatpush.msra.mxu0 0.0
    %917 = vmatpush.msra.mxu0 0.0
    %918 = vmatpush.msra.mxu0 0.0
    %919 = vmatpush.msra.mxu0 0.0
    %920 = vmatpush.msra.mxu0 0.0
    %921 = vmatpush.msra.mxu0 0.0
    %v922 = vand.u32 %v625, 4294901760
    %923 = vmatpush.msra.mxu0 %v922
    %v924 = vand.u32 %v624, 4294901760
    %925 = vmatpush.msra.mxu0 %v924
    %v926 = vand.u32 %v623, 4294901760
    %927 = vmatpush.msra.mxu0 %v926
    %v928 = vand.u32 %v622, 4294901760
    %929 = vmatpush.msra.mxu0 %v928
    %v930 = vand.u32 %v748, 4294901760
    %v931 = vsub.f32 %v748, %v930
    %v932 = vand.u32 %v931, 4294901760
    %933 = vmatmul.f32.gmra.mxu0 %v932
    %v934 = vpop.f32.mrf.mxu0
    %v935 = vadd.f32 %v893, %v934
    %v936 = vand.u32 %v751, 4294901760
    %v937 = vsub.f32 %v751, %v936
    %v938 = vand.u32 %v937, 4294901760
    %939 = vmatmul.f32.gmra.mxu0 %v938
    %v940 = vpop.f32.mrf.mxu0
    %v941 = vadd.f32 %v898, %v940
    %v942 = vand.u32 %v754, 4294901760
    %v943 = vsub.f32 %v754, %v942
    %v944 = vand.u32 %v943, 4294901760
    %945 = vmatmul.f32.gmra.mxu0 %v944
    %v946 = vpop.f32.mrf.mxu0
    %v947 = vadd.f32 %v903, %v946
    %v948 = vand.u32 %v757, 4294901760
    %v949 = vsub.f32 %v757, %v948
    %v950 = vand.u32 %v949, 4294901760
    %951 = vmatmul.f32.gmra.mxu0 %v950
    %v952 = vpop.f32.mrf.mxu0
    %v953 = vadd.f32 %v908, %v952
    %954 = vdwg.mxu0
    %955 = vmatpush.msra.mxu0 0.0
    %956 = vmatpush.msra.mxu0 0.0
    %957 = vmatpush.msra.mxu0 0.0
    %958 = vmatpush.msra.mxu0 0.0
    %959 = vmatpush.msra.mxu0 0.0
    %960 = vmatpush.msra.mxu0 0.0
    %961 = vmatpush.msra.mxu0 0.0
    %962 = vmatpush.msra.mxu0 0.0
    %963 = vmatpush.msra.mxu0 0.0
    %964 = vmatpush.msra.mxu0 0.0
    %965 = vmatpush.msra.mxu0 0.0
    %966 = vmatpush.msra.mxu0 0.0
    %v967 = vand.u32 %v625, 4294901760
    %v968 = vsub.f32 %v625, %v967
    %v969 = vand.u32 %v968, 4294901760
    %970 = vmatpush.msra.mxu0 %v969
    %v971 = vand.u32 %v624, 4294901760
    %v972 = vsub.f32 %v624, %v971
    %v973 = vand.u32 %v972, 4294901760
    %974 = vmatpush.msra.mxu0 %v973
    %v975 = vand.u32 %v623, 4294901760
    %v976 = vsub.f32 %v623, %v975
    %v977 = vand.u32 %v976, 4294901760
    %978 = vmatpush.msra.mxu0 %v977
    %v979 = vand.u32 %v622, 4294901760
    %v980 = vsub.f32 %v622, %v979
    %v981 = vand.u32 %v980, 4294901760
    %982 = vmatpush.msra.mxu0 %v981
    %v983 = vand.u32 %v748, 4294901760
    %984 = vmatmul.f32.gmra.mxu0 %v983
    %v985 = vpop.f32.mrf.mxu0
    %v986 = vadd.f32 %v935, %v985
    %v987 = vand.u32 %v751, 4294901760
    %988 = vmatmul.f32.gmra.mxu0 %v987
    %v989 = vpop.f32.mrf.mxu0
    %v990 = vadd.f32 %v941, %v989
    %v991 = vand.u32 %v754, 4294901760
    %992 = vmatmul.f32.gmra.mxu0 %v991
    %v993 = vpop.f32.mrf.mxu0
    %v994 = vadd.f32 %v947, %v993
    %v995 = vand.u32 %v757, 4294901760
    %996 = vmatmul.f32.gmra.mxu0 %v995
    %v997 = vpop.f32.mrf.mxu0
    %v998 = vadd.f32 %v953, %v997
    %999 = vdwg.mxu0
    %1000 = vmatpush.msra.mxu0 0.0
    %1001 = vmatpush.msra.mxu0 0.0
    %1002 = vmatpush.msra.mxu0 0.0
    %1003 = vmatpush.msra.mxu0 0.0
    %1004 = vmatpush.msra.mxu0 0.0
    %1005 = vmatpush.msra.mxu0 0.0
    %1006 = vmatpush.msra.mxu0 0.0
    %1007 = vmatpush.msra.mxu0 0.0
    %1008 = vmatpush.msra.mxu0 0.0
    %1009 = vmatpush.msra.mxu0 0.0
    %1010 = vmatpush.msra.mxu0 0.0
    %1011 = vmatpush.msra.mxu0 0.0
    %v1012 = vand.u32 %v625, 4294901760
    %1013 = vmatpush.msra.mxu0 %v1012
    %v1014 = vand.u32 %v624, 4294901760
    %1015 = vmatpush.msra.mxu0 %v1014
    %v1016 = vand.u32 %v623, 4294901760
    %1017 = vmatpush.msra.mxu0 %v1016
    %v1018 = vand.u32 %v622, 4294901760
    %1019 = vmatpush.msra.mxu0 %v1018
    %v1020 = vand.u32 %v748, 4294901760
    %1021 = vmatmul.f32.gmra.mxu0 %v1020
    %v1022 = vpop.f32.mrf.mxu0
    %v1023 = vadd.f32 %v986, %v1022
    %v1024 = vand.u32 %v751, 4294901760
    %1025 = vmatmul.f32.gmra.mxu0 %v1024
    %v1026 = vpop.f32.mrf.mxu0
    %v1027 = vadd.f32 %v990, %v1026
    %v1028 = vand.u32 %v754, 4294901760
    %1029 = vmatmul.f32.gmra.mxu0 %v1028
    %v1030 = vpop.f32.mrf.mxu0
    %v1031 = vadd.f32 %v994, %v1030
    %v1032 = vand.u32 %v757, 4294901760
    %1033 = vmatmul.f32.gmra.mxu0 %v1032
    %v1034 = vpop.f32.mrf.mxu0
    %v1035 = vadd.f32 %v998, %v1034
    %1036 = vdwg.mxu0
    %v1037 = vld [vmem:[%s2 + $0x190] sm:$0xff]
    %v1038 = vld [vmem:[%s2 + $0x198] sm:$0xff]
    %v1039 = vld [vmem:[%s2 + $0x1a0] sm:$0xff]
    %v1040 = vld [vmem:[%s2 + $0x1a8] sm:$0xff]
    %1041 = vmatpush.msra.mxu0 0.0
    %1042 = vmatpush.msra.mxu0 0.0
    %1043 = vmatpush.msra.mxu0 0.0
    %1044 = vmatpush.msra.mxu0 0.0
    %1045 = vmatpush.msra.mxu0 0.0
    %1046 = vmatpush.msra.mxu0 0.0
    %1047 = vmatpush.msra.mxu0 0.0
    %1048 = vmatpush.msra.mxu0 0.0
    %1049 = vmatpush.msra.mxu0 0.0
    %1050 = vmatpush.msra.mxu0 0.0
    %1051 = vmatpush.msra.mxu0 0.0
    %1052 = vmatpush.msra.mxu0 0.0
    %v1053 = vand.u32 %v629, 4294901760
    %1054 = vmatpush.msra.mxu0 %v1053
    %v1055 = vand.u32 %v628, 4294901760
    %1056 = vmatpush.msra.mxu0 %v1055
    %v1057 = vand.u32 %v627, 4294901760
    %1058 = vmatpush.msra.mxu0 %v1057
    %v1059 = vand.u32 %v626, 4294901760
    %1060 = vmatpush.msra.mxu0 %v1059
    %v1061 = vand.u32 %v748, 4294901760
    %v1062 = vsub.f32 %v748, %v1061
    %v1063 = vand.u32 %v1062, 4294901760
    %v1064 = vsub.f32 %v1062, %v1063
    %v1065 = vand.u32 %v1064, 4294901760
    %1066 = vmatmul.f32.gmra.mxu0 %v1065
    %v1067 = vpop.f32.mrf.mxu0
    %v1068 = vadd.f32 %v1037, %v1067
    %v1069 = vand.u32 %v751, 4294901760
    %v1070 = vsub.f32 %v751, %v1069
    %v1071 = vand.u32 %v1070, 4294901760
    %v1072 = vsub.f32 %v1070, %v1071
    %v1073 = vand.u32 %v1072, 4294901760
    %1074 = vmatmul.f32.gmra.mxu0 %v1073
    %v1075 = vpop.f32.mrf.mxu0
    %v1076 = vadd.f32 %v1038, %v1075
    %v1077 = vand.u32 %v754, 4294901760
    %v1078 = vsub.f32 %v754, %v1077
    %v1079 = vand.u32 %v1078, 4294901760
    %v1080 = vsub.f32 %v1078, %v1079
    %v1081 = vand.u32 %v1080, 4294901760
    %1082 = vmatmul.f32.gmra.mxu0 %v1081
    %v1083 = vpop.f32.mrf.mxu0
    %v1084 = vadd.f32 %v1039, %v1083
    %v1085 = vand.u32 %v757, 4294901760
    %v1086 = vsub.f32 %v757, %v1085
    %v1087 = vand.u32 %v1086, 4294901760
    %v1088 = vsub.f32 %v1086, %v1087
    %v1089 = vand.u32 %v1088, 4294901760
    %1090 = vmatmul.f32.gmra.mxu0 %v1089
    %v1091 = vpop.f32.mrf.mxu0
    %v1092 = vadd.f32 %v1040, %v1091
    %1093 = vdwg.mxu0
    %1094 = vmatpush.msra.mxu0 0.0
    %1095 = vmatpush.msra.mxu0 0.0
    %1096 = vmatpush.msra.mxu0 0.0
    %1097 = vmatpush.msra.mxu0 0.0
    %1098 = vmatpush.msra.mxu0 0.0
    %1099 = vmatpush.msra.mxu0 0.0
    %1100 = vmatpush.msra.mxu0 0.0
    %1101 = vmatpush.msra.mxu0 0.0
    %1102 = vmatpush.msra.mxu0 0.0
    %1103 = vmatpush.msra.mxu0 0.0
    %1104 = vmatpush.msra.mxu0 0.0
    %1105 = vmatpush.msra.mxu0 0.0
    %v1106 = vand.u32 %v629, 4294901760
    %v1107 = vsub.f32 %v629, %v1106
    %v1108 = vand.u32 %v1107, 4294901760
    %v1109 = vsub.f32 %v1107, %v1108
    %v1110 = vand.u32 %v1109, 4294901760
    %1111 = vmatpush.msra.mxu0 %v1110
    %v1112 = vand.u32 %v628, 4294901760
    %v1113 = vsub.f32 %v628, %v1112
    %v1114 = vand.u32 %v1113, 4294901760
    %v1115 = vsub.f32 %v1113, %v1114
    %v1116 = vand.u32 %v1115, 4294901760
    %1117 = vmatpush.msra.mxu0 %v1116
    %v1118 = vand.u32 %v627, 4294901760
    %v1119 = vsub.f32 %v627, %v1118
    %v1120 = vand.u32 %v1119, 4294901760
    %v1121 = vsub.f32 %v1119, %v1120
    %v1122 = vand.u32 %v1121, 4294901760
    %1123 = vmatpush.msra.mxu0 %v1122
    %v1124 = vand.u32 %v626, 4294901760
    %v1125 = vsub.f32 %v626, %v1124
    %v1126 = vand.u32 %v1125, 4294901760
    %v1127 = vsub.f32 %v1125, %v1126
    %v1128 = vand.u32 %v1127, 4294901760
    %1129 = vmatpush.msra.mxu0 %v1128
    %v1130 = vand.u32 %v748, 4294901760
    %1131 = vmatmul.f32.gmra.mxu0 %v1130
    %v1132 = vpop.f32.mrf.mxu0
    %v1133 = vadd.f32 %v1068, %v1132
    %v1134 = vand.u32 %v751, 4294901760
    %1135 = vmatmul.f32.gmra.mxu0 %v1134
    %v1136 = vpop.f32.mrf.mxu0
    %v1137 = vadd.f32 %v1076, %v1136
    %v1138 = vand.u32 %v754, 4294901760
    %1139 = vmatmul.f32.gmra.mxu0 %v1138
    %v1140 = vpop.f32.mrf.mxu0
    %v1141 = vadd.f32 %v1084, %v1140
    %v1142 = vand.u32 %v757, 4294901760
    %1143 = vmatmul.f32.gmra.mxu0 %v1142
    %v1144 = vpop.f32.mrf.mxu0
    %v1145 = vadd.f32 %v1092, %v1144
    %1146 = vdwg.mxu0
    %1147 = vmatpush.msra.mxu0 0.0
    %1148 = vmatpush.msra.mxu0 0.0
    %1149 = vmatpush.msra.mxu0 0.0
    %1150 = vmatpush.msra.mxu0 0.0
    %1151 = vmatpush.msra.mxu0 0.0
    %1152 = vmatpush.msra.mxu0 0.0
    %1153 = vmatpush.msra.mxu0 0.0
    %1154 = vmatpush.msra.mxu0 0.0
    %1155 = vmatpush.msra.mxu0 0.0
    %1156 = vmatpush.msra.mxu0 0.0
    %1157 = vmatpush.msra.mxu0 0.0
    %1158 = vmatpush.msra.mxu0 0.0
    %v1159 = vand.u32 %v629, 4294901760
    %v1160 = vsub.f32 %v629, %v1159
    %1161 = vmatpush.msra.mxu0 %v1160
    %v1162 = vand.u32 %v628, 4294901760
    %v1163 = vsub.f32 %v628, %v1162
    %1164 = vmatpush.msra.mxu0 %v1163
    %v1165 = vand.u32 %v627, 4294901760
    %v1166 = vsub.f32 %v627, %v1165
    %1167 = vmatpush.msra.mxu0 %v1166
    %v1168 = vand.u32 %v626, 4294901760
    %v1169 = vsub.f32 %v626, %v1168
    %1170 = vmatpush.msra.mxu0 %v1169
    %v1171 = vand.u32 %v748, 4294901760
    %v1172 = vsub.f32 %v748, %v1171
    %1173 = vmatmul.f32.gmra.mxu0 %v1172
    %v1174 = vpop.f32.mrf.mxu0
    %v1175 = vadd.f32 %v1133, %v1174
    %v1176 = vand.u32 %v751, 4294901760
    %v1177 = vsub.f32 %v751, %v1176
    %1178 = vmatmul.f32.gmra.mxu0 %v1177
    %v1179 = vpop.f32.mrf.mxu0
    %v1180 = vadd.f32 %v1137, %v1179
    %v1181 = vand.u32 %v754, 4294901760
    %v1182 = vsub.f32 %v754, %v1181
    %1183 = vmatmul.f32.gmra.mxu0 %v1182
    %v1184 = vpop.f32.mrf.mxu0
    %v1185 = vadd.f32 %v1141, %v1184
    %v1186 = vand.u32 %v757, 4294901760
    %v1187 = vsub.f32 %v757, %v1186
    %1188 = vmatmul.f32.gmra.mxu0 %v1187
    %v1189 = vpop.f32.mrf.mxu0
    %v1190 = vadd.f32 %v1145, %v1189
    %1191 = vdwg.mxu0
    %1192 = vmatpush.msra.mxu0 0.0
    %1193 = vmatpush.msra.mxu0 0.0
    %1194 = vmatpush.msra.mxu0 0.0
    %1195 = vmatpush.msra.mxu0 0.0
    %1196 = vmatpush.msra.mxu0 0.0
    %1197 = vmatpush.msra.mxu0 0.0
    %1198 = vmatpush.msra.mxu0 0.0
    %1199 = vmatpush.msra.mxu0 0.0
    %1200 = vmatpush.msra.mxu0 0.0
    %1201 = vmatpush.msra.mxu0 0.0
    %1202 = vmatpush.msra.mxu0 0.0
    %1203 = vmatpush.msra.mxu0 0.0
    %v1204 = vand.u32 %v629, 4294901760
    %1205 = vmatpush.msra.mxu0 %v1204
    %v1206 = vand.u32 %v628, 4294901760
    %1207 = vmatpush.msra.mxu0 %v1206
    %v1208 = vand.u32 %v627, 4294901760
    %1209 = vmatpush.msra.mxu0 %v1208
    %v1210 = vand.u32 %v626, 4294901760
    %1211 = vmatpush.msra.mxu0 %v1210
    %v1212 = vand.u32 %v748, 4294901760
    %v1213 = vsub.f32 %v748, %v1212
    %v1214 = vand.u32 %v1213, 4294901760
    %1215 = vmatmul.f32.gmra.mxu0 %v1214
    %v1216 = vpop.f32.mrf.mxu0
    %v1217 = vadd.f32 %v1175, %v1216
    %v1218 = vand.u32 %v751, 4294901760
    %v1219 = vsub.f32 %v751, %v1218
    %v1220 = vand.u32 %v1219, 4294901760
    %1221 = vmatmul.f32.gmra.mxu0 %v1220
    %v1222 = vpop.f32.mrf.mxu0
    %v1223 = vadd.f32 %v1180, %v1222
    %v1224 = vand.u32 %v754, 4294901760
    %v1225 = vsub.f32 %v754, %v1224
    %v1226 = vand.u32 %v1225, 4294901760
    %1227 = vmatmul.f32.gmra.mxu0 %v1226
    %v1228 = vpop.f32.mrf.mxu0
    %v1229 = vadd.f32 %v1185, %v1228
    %v1230 = vand.u32 %v757, 4294901760
    %v1231 = vsub.f32 %v757, %v1230
    %v1232 = vand.u32 %v1231, 4294901760
    %1233 = vmatmul.f32.gmra.mxu0 %v1232
    %v1234 = vpop.f32.mrf.mxu0
    %v1235 = vadd.f32 %v1190, %v1234
    %1236 = vdwg.mxu0
    %1237 = vmatpush.msra.mxu0 0.0
    %1238 = vmatpush.msra.mxu0 0.0
    %1239 = vmatpush.msra.mxu0 0.0
    %1240 = vmatpush.msra.mxu0 0.0
    %1241 = vmatpush.msra.mxu0 0.0
    %1242 = vmatpush.msra.mxu0 0.0
    %1243 = vmatpush.msra.mxu0 0.0
    %1244 = vmatpush.msra.mxu0 0.0
    %1245 = vmatpush.msra.mxu0 0.0
    %1246 = vmatpush.msra.mxu0 0.0
    %1247 = vmatpush.msra.mxu0 0.0
    %1248 = vmatpush.msra.mxu0 0.0
    %v1249 = vand.u32 %v629, 4294901760
    %v1250 = vsub.f32 %v629, %v1249
    %v1251 = vand.u32 %v1250, 4294901760
    %1252 = vmatpush.msra.mxu0 %v1251
    %v1253 = vand.u32 %v628, 4294901760
    %v1254 = vsub.f32 %v628, %v1253
    %v1255 = vand.u32 %v1254, 4294901760
    %1256 = vmatpush.msra.mxu0 %v1255
    %v1257 = vand.u32 %v627, 4294901760
    %v1258 = vsub.f32 %v627, %v1257
    %v1259 = vand.u32 %v1258, 4294901760
    %1260 = vmatpush.msra.mxu0 %v1259
    %v1261 = vand.u32 %v626, 4294901760
    %v1262 = vsub.f32 %v626, %v1261
    %v1263 = vand.u32 %v1262, 4294901760
    %1264 = vmatpush.msra.mxu0 %v1263
    %v1265 = vand.u32 %v748, 4294901760
    %1266 = vmatmul.f32.gmra.mxu0 %v1265
    %v1267 = vpop.f32.mrf.mxu0
    %v1268 = vadd.f32 %v1217, %v1267
    %v1269 = vand.u32 %v751, 4294901760
    %1270 = vmatmul.f32.gmra.mxu0 %v1269
    %v1271 = vpop.f32.mrf.mxu0
    %v1272 = vadd.f32 %v1223, %v1271
    %v1273 = vand.u32 %v754, 4294901760
    %1274 = vmatmul.f32.gmra.mxu0 %v1273
    %v1275 = vpop.f32.mrf.mxu0
    %v1276 = vadd.f32 %v1229, %v1275
    %v1277 = vand.u32 %v757, 4294901760
    %1278 = vmatmul.f32.gmra.mxu0 %v1277
    %v1279 = vpop.f32.mrf.mxu0
    %v1280 = vadd.f32 %v1235, %v1279
    %1281 = vdwg.mxu0
    %1282 = vmatpush.msra.mxu0 0.0
    %1283 = vmatpush.msra.mxu0 0.0
    %1284 = vmatpush.msra.mxu0 0.0
    %1285 = vmatpush.msra.mxu0 0.0
    %1286 = vmatpush.msra.mxu0 0.0
    %1287 = vmatpush.msra.mxu0 0.0
    %1288 = vmatpush.msra.mxu0 0.0
    %1289 = vmatpush.msra.mxu0 0.0
    %1290 = vmatpush.msra.mxu0 0.0
    %1291 = vmatpush.msra.mxu0 0.0
    %1292 = vmatpush.msra.mxu0 0.0
    %1293 = vmatpush.msra.mxu0 0.0
    %v1294 = vand.u32 %v629, 4294901760
    %1295 = vmatpush.msra.mxu0 %v1294
    %v1296 = vand.u32 %v628, 4294901760
    %1297 = vmatpush.msra.mxu0 %v1296
    %v1298 = vand.u32 %v627, 4294901760
    %1299 = vmatpush.msra.mxu0 %v1298
    %v1300 = vand.u32 %v626, 4294901760
    %1301 = vmatpush.msra.mxu0 %v1300
    %v1302 = vand.u32 %v748, 4294901760
    %1303 = vmatmul.f32.gmra.mxu0 %v1302
    %v1304 = vpop.f32.mrf.mxu0
    %v1305 = vadd.f32 %v1268, %v1304
    %v1306 = vand.u32 %v751, 4294901760
    %1307 = vmatmul.f32.gmra.mxu0 %v1306
    %v1308 = vpop.f32.mrf.mxu0
    %v1309 = vadd.f32 %v1272, %v1308
    %v1310 = vand.u32 %v754, 4294901760
    %1311 = vmatmul.f32.gmra.mxu0 %v1310
    %v1312 = vpop.f32.mrf.mxu0
    %v1313 = vadd.f32 %v1276, %v1312
    %v1314 = vand.u32 %v757, 4294901760
    %1315 = vmatmul.f32.gmra.mxu0 %v1314
    %v1316 = vpop.f32.mrf.mxu0
    %v1317 = vadd.f32 %v1280, %v1316
    %1318 = vdwg.mxu0
    %v1319 = vld [vmem:[%s2 + $0x1b0] sm:$0xff]
    %v1320 = vld [vmem:[%s2 + $0x1b8] sm:$0xff]
    %v1321 = vld [vmem:[%s2 + $0x1c0] sm:$0xff]
    %v1322 = vld [vmem:[%s2 + $0x1c8] sm:$0xff]
    %1323 = vmatpush.msra.mxu0 0.0
    %1324 = vmatpush.msra.mxu0 0.0
    %1325 = vmatpush.msra.mxu0 0.0
    %1326 = vmatpush.msra.mxu0 0.0
    %1327 = vmatpush.msra.mxu0 0.0
    %1328 = vmatpush.msra.mxu0 0.0
    %1329 = vmatpush.msra.mxu0 0.0
    %1330 = vmatpush.msra.mxu0 0.0
    %1331 = vmatpush.msra.mxu0 0.0
    %1332 = vmatpush.msra.mxu0 0.0
    %1333 = vmatpush.msra.mxu0 0.0
    %1334 = vmatpush.msra.mxu0 0.0
    %v1335 = vand.u32 %v633, 4294901760
    %1336 = vmatpush.msra.mxu0 %v1335
    %v1337 = vand.u32 %v632, 4294901760
    %1338 = vmatpush.msra.mxu0 %v1337
    %v1339 = vand.u32 %v631, 4294901760
    %1340 = vmatpush.msra.mxu0 %v1339
    %v1341 = vand.u32 %v630, 4294901760
    %1342 = vmatpush.msra.mxu0 %v1341
    %v1343 = vand.u32 %v748, 4294901760
    %v1344 = vsub.f32 %v748, %v1343
    %v1345 = vand.u32 %v1344, 4294901760
    %v1346 = vsub.f32 %v1344, %v1345
    %v1347 = vand.u32 %v1346, 4294901760
    %1348 = vmatmul.f32.gmra.mxu0 %v1347
    %v1349 = vpop.f32.mrf.mxu0
    %v1350 = vadd.f32 %v1319, %v1349
    %v1351 = vand.u32 %v751, 4294901760
    %v1352 = vsub.f32 %v751, %v1351
    %v1353 = vand.u32 %v1352, 4294901760
    %v1354 = vsub.f32 %v1352, %v1353
    %v1355 = vand.u32 %v1354, 4294901760
    %1356 = vmatmul.f32.gmra.mxu0 %v1355
    %v1357 = vpop.f32.mrf.mxu0
    %v1358 = vadd.f32 %v1320, %v1357
    %v1359 = vand.u32 %v754, 4294901760
    %v1360 = vsub.f32 %v754, %v1359
    %v1361 = vand.u32 %v1360, 4294901760
    %v1362 = vsub.f32 %v1360, %v1361
    %v1363 = vand.u32 %v1362, 4294901760
    %1364 = vmatmul.f32.gmra.mxu0 %v1363
    %v1365 = vpop.f32.mrf.mxu0
    %v1366 = vadd.f32 %v1321, %v1365
    %v1367 = vand.u32 %v757, 4294901760
    %v1368 = vsub.f32 %v757, %v1367
    %v1369 = vand.u32 %v1368, 4294901760
    %v1370 = vsub.f32 %v1368, %v1369
    %v1371 = vand.u32 %v1370, 4294901760
    %1372 = vmatmul.f32.gmra.mxu0 %v1371
    %v1373 = vpop.f32.mrf.mxu0
    %v1374 = vadd.f32 %v1322, %v1373
    %1375 = vdwg.mxu0
    %1376 = vmatpush.msra.mxu0 0.0
    %1377 = vmatpush.msra.mxu0 0.0
    %1378 = vmatpush.msra.mxu0 0.0
    %1379 = vmatpush.msra.mxu0 0.0
    %1380 = vmatpush.msra.mxu0 0.0
    %1381 = vmatpush.msra.mxu0 0.0
    %1382 = vmatpush.msra.mxu0 0.0
    %1383 = vmatpush.msra.mxu0 0.0
    %1384 = vmatpush.msra.mxu0 0.0
    %1385 = vmatpush.msra.mxu0 0.0
    %1386 = vmatpush.msra.mxu0 0.0
    %1387 = vmatpush.msra.mxu0 0.0
    %v1388 = vand.u32 %v633, 4294901760
    %v1389 = vsub.f32 %v633, %v1388
    %v1390 = vand.u32 %v1389, 4294901760
    %v1391 = vsub.f32 %v1389, %v1390
    %v1392 = vand.u32 %v1391, 4294901760
    %1393 = vmatpush.msra.mxu0 %v1392
    %v1394 = vand.u32 %v632, 4294901760
    %v1395 = vsub.f32 %v632, %v1394
    %v1396 = vand.u32 %v1395, 4294901760
    %v1397 = vsub.f32 %v1395, %v1396
    %v1398 = vand.u32 %v1397, 4294901760
    %1399 = vmatpush.msra.mxu0 %v1398
    %v1400 = vand.u32 %v631, 4294901760
    %v1401 = vsub.f32 %v631, %v1400
    %v1402 = vand.u32 %v1401, 4294901760
    %v1403 = vsub.f32 %v1401, %v1402
    %v1404 = vand.u32 %v1403, 4294901760
    %1405 = vmatpush.msra.mxu0 %v1404
    %v1406 = vand.u32 %v630, 4294901760
    %v1407 = vsub.f32 %v630, %v1406
    %v1408 = vand.u32 %v1407, 4294901760
    %v1409 = vsub.f32 %v1407, %v1408
    %v1410 = vand.u32 %v1409, 4294901760
    %1411 = vmatpush.msra.mxu0 %v1410
    %v1412 = vand.u32 %v748, 4294901760
    %1413 = vmatmul.f32.gmra.mxu0 %v1412
    %v1414 = vpop.f32.mrf.mxu0
    %v1415 = vadd.f32 %v1350, %v1414
    %v1416 = vand.u32 %v751, 4294901760
    %1417 = vmatmul.f32.gmra.mxu0 %v1416
    %v1418 = vpop.f32.mrf.mxu0
    %v1419 = vadd.f32 %v1358, %v1418
    %v1420 = vand.u32 %v754, 4294901760
    %1421 = vmatmul.f32.gmra.mxu0 %v1420
    %v1422 = vpop.f32.mrf.mxu0
    %v1423 = vadd.f32 %v1366, %v1422
    %v1424 = vand.u32 %v757, 4294901760
    %1425 = vmatmul.f32.gmra.mxu0 %v1424
    %v1426 = vpop.f32.mrf.mxu0
    %v1427 = vadd.f32 %v1374, %v1426
    %1428 = vdwg.mxu0
    %1429 = vmatpush.msra.mxu0 0.0
    %1430 = vmatpush.msra.mxu0 0.0
    %1431 = vmatpush.msra.mxu0 0.0
    %1432 = vmatpush.msra.mxu0 0.0
    %1433 = vmatpush.msra.mxu0 0.0
    %1434 = vmatpush.msra.mxu0 0.0
    %1435 = vmatpush.msra.mxu0 0.0
    %1436 = vmatpush.msra.mxu0 0.0
    %1437 = vmatpush.msra.mxu0 0.0
    %1438 = vmatpush.msra.mxu0 0.0
    %1439 = vmatpush.msra.mxu0 0.0
    %1440 = vmatpush.msra.mxu0 0.0
    %v1441 = vand.u32 %v633, 4294901760
    %v1442 = vsub.f32 %v633, %v1441
    %1443 = vmatpush.msra.mxu0 %v1442
    %v1444 = vand.u32 %v632, 4294901760
    %v1445 = vsub.f32 %v632, %v1444
    %1446 = vmatpush.msra.mxu0 %v1445
    %v1447 = vand.u32 %v631, 4294901760
    %v1448 = vsub.f32 %v631, %v1447
    %1449 = vmatpush.msra.mxu0 %v1448
    %v1450 = vand.u32 %v630, 4294901760
    %v1451 = vsub.f32 %v630, %v1450
    %1452 = vmatpush.msra.mxu0 %v1451
    %v1453 = vand.u32 %v748, 4294901760
    %v1454 = vsub.f32 %v748, %v1453
    %1455 = vmatmul.f32.gmra.mxu0 %v1454
    %v1456 = vpop.f32.mrf.mxu0
    %v1457 = vadd.f32 %v1415, %v1456
    %v1458 = vand.u32 %v751, 4294901760
    %v1459 = vsub.f32 %v751, %v1458
    %1460 = vmatmul.f32.gmra.mxu0 %v1459
    %v1461 = vpop.f32.mrf.mxu0
    %v1462 = vadd.f32 %v1419, %v1461
    %v1463 = vand.u32 %v754, 4294901760
    %v1464 = vsub.f32 %v754, %v1463
    %1465 = vmatmul.f32.gmra.mxu0 %v1464
    %v1466 = vpop.f32.mrf.mxu0
    %v1467 = vadd.f32 %v1423, %v1466
    %v1468 = vand.u32 %v757, 4294901760
    %v1469 = vsub.f32 %v757, %v1468
    %1470 = vmatmul.f32.gmra.mxu0 %v1469
    %v1471 = vpop.f32.mrf.mxu0
    %v1472 = vadd.f32 %v1427, %v1471
    %1473 = vdwg.mxu0
    %1474 = vmatpush.msra.mxu0 0.0
    %1475 = vmatpush.msra.mxu0 0.0
    %1476 = vmatpush.msra.mxu0 0.0
    %1477 = vmatpush.msra.mxu0 0.0
    %1478 = vmatpush.msra.mxu0 0.0
    %1479 = vmatpush.msra.mxu0 0.0
    %1480 = vmatpush.msra.mxu0 0.0
    %1481 = vmatpush.msra.mxu0 0.0
    %1482 = vmatpush.msra.mxu0 0.0
    %1483 = vmatpush.msra.mxu0 0.0
    %1484 = vmatpush.msra.mxu0 0.0
    %1485 = vmatpush.msra.mxu0 0.0
    %v1486 = vand.u32 %v633, 4294901760
    %1487 = vmatpush.msra.mxu0 %v1486
    %v1488 = vand.u32 %v632, 4294901760
    %1489 = vmatpush.msra.mxu0 %v1488
    %v1490 = vand.u32 %v631, 4294901760
    %1491 = vmatpush.msra.mxu0 %v1490
    %v1492 = vand.u32 %v630, 4294901760
    %1493 = vmatpush.msra.mxu0 %v1492
    %v1494 = vand.u32 %v748, 4294901760
    %v1495 = vsub.f32 %v748, %v1494
    %v1496 = vand.u32 %v1495, 4294901760
    %1497 = vmatmul.f32.gmra.mxu0 %v1496
    %v1498 = vpop.f32.mrf.mxu0
    %v1499 = vadd.f32 %v1457, %v1498
    %v1500 = vand.u32 %v751, 4294901760
    %v1501 = vsub.f32 %v751, %v1500
    %v1502 = vand.u32 %v1501, 4294901760
    %1503 = vmatmul.f32.gmra.mxu0 %v1502
    %v1504 = vpop.f32.mrf.mxu0
    %v1505 = vadd.f32 %v1462, %v1504
    %v1506 = vand.u32 %v754, 4294901760
    %v1507 = vsub.f32 %v754, %v1506
    %v1508 = vand.u32 %v1507, 4294901760
    %1509 = vmatmul.f32.gmra.mxu0 %v1508
    %v1510 = vpop.f32.mrf.mxu0
    %v1511 = vadd.f32 %v1467, %v1510
    %v1512 = vand.u32 %v757, 4294901760
    %v1513 = vsub.f32 %v757, %v1512
    %v1514 = vand.u32 %v1513, 4294901760
    %1515 = vmatmul.f32.gmra.mxu0 %v1514
    %v1516 = vpop.f32.mrf.mxu0
    %v1517 = vadd.f32 %v1472, %v1516
    %1518 = vdwg.mxu0
    %1519 = vmatpush.msra.mxu0 0.0
    %1520 = vmatpush.msra.mxu0 0.0
    %1521 = vmatpush.msra.mxu0 0.0
    %1522 = vmatpush.msra.mxu0 0.0
    %1523 = vmatpush.msra.mxu0 0.0
    %1524 = vmatpush.msra.mxu0 0.0
    %1525 = vmatpush.msra.mxu0 0.0
    %1526 = vmatpush.msra.mxu0 0.0
    %1527 = vmatpush.msra.mxu0 0.0
    %1528 = vmatpush.msra.mxu0 0.0
    %1529 = vmatpush.msra.mxu0 0.0
    %1530 = vmatpush.msra.mxu0 0.0
    %v1531 = vand.u32 %v633, 4294901760
    %v1532 = vsub.f32 %v633, %v1531
    %v1533 = vand.u32 %v1532, 4294901760
    %1534 = vmatpush.msra.mxu0 %v1533
    %v1535 = vand.u32 %v632, 4294901760
    %v1536 = vsub.f32 %v632, %v1535
    %v1537 = vand.u32 %v1536, 4294901760
    %1538 = vmatpush.msra.mxu0 %v1537
    %v1539 = vand.u32 %v631, 4294901760
    %v1540 = vsub.f32 %v631, %v1539
    %v1541 = vand.u32 %v1540, 4294901760
    %1542 = vmatpush.msra.mxu0 %v1541
    %v1543 = vand.u32 %v630, 4294901760
    %v1544 = vsub.f32 %v630, %v1543
    %v1545 = vand.u32 %v1544, 4294901760
    %1546 = vmatpush.msra.mxu0 %v1545
    %v1547 = vand.u32 %v748, 4294901760
    %1548 = vmatmul.f32.gmra.mxu0 %v1547
    %v1549 = vpop.f32.mrf.mxu0
    %v1550 = vadd.f32 %v1499, %v1549
    %v1551 = vand.u32 %v751, 4294901760
    %1552 = vmatmul.f32.gmra.mxu0 %v1551
    %v1553 = vpop.f32.mrf.mxu0
    %v1554 = vadd.f32 %v1505, %v1553
    %v1555 = vand.u32 %v754, 4294901760
    %1556 = vmatmul.f32.gmra.mxu0 %v1555
    %v1557 = vpop.f32.mrf.mxu0
    %v1558 = vadd.f32 %v1511, %v1557
    %v1559 = vand.u32 %v757, 4294901760
    %1560 = vmatmul.f32.gmra.mxu0 %v1559
    %v1561 = vpop.f32.mrf.mxu0
    %v1562 = vadd.f32 %v1517, %v1561
    %1563 = vdwg.mxu0
    %1564 = vmatpush.msra.mxu0 0.0
    %1565 = vmatpush.msra.mxu0 0.0
    %1566 = vmatpush.msra.mxu0 0.0
    %1567 = vmatpush.msra.mxu0 0.0
    %1568 = vmatpush.msra.mxu0 0.0
    %1569 = vmatpush.msra.mxu0 0.0
    %1570 = vmatpush.msra.mxu0 0.0
    %1571 = vmatpush.msra.mxu0 0.0
    %1572 = vmatpush.msra.mxu0 0.0
    %1573 = vmatpush.msra.mxu0 0.0
    %1574 = vmatpush.msra.mxu0 0.0
    %1575 = vmatpush.msra.mxu0 0.0
    %v1576 = vand.u32 %v633, 4294901760
    %1577 = vmatpush.msra.mxu0 %v1576
    %v1578 = vand.u32 %v632, 4294901760
    %1579 = vmatpush.msra.mxu0 %v1578
    %v1580 = vand.u32 %v631, 4294901760
    %1581 = vmatpush.msra.mxu0 %v1580
    %v1582 = vand.u32 %v630, 4294901760
    %1583 = vmatpush.msra.mxu0 %v1582
    %v1584 = vand.u32 %v748, 4294901760
    %1585 = vmatmul.f32.gmra.mxu0 %v1584
    %v1586 = vpop.f32.mrf.mxu0
    %v1587 = vadd.f32 %v1550, %v1586
    %v1588 = vand.u32 %v751, 4294901760
    %1589 = vmatmul.f32.gmra.mxu0 %v1588
    %v1590 = vpop.f32.mrf.mxu0
    %v1591 = vadd.f32 %v1554, %v1590
    %v1592 = vand.u32 %v754, 4294901760
    %1593 = vmatmul.f32.gmra.mxu0 %v1592
    %v1594 = vpop.f32.mrf.mxu0
    %v1595 = vadd.f32 %v1558, %v1594
    %v1596 = vand.u32 %v757, 4294901760
    %1597 = vmatmul.f32.gmra.mxu0 %v1596
    %v1598 = vpop.f32.mrf.mxu0
    %v1599 = vadd.f32 %v1562, %v1598
    %1600 = vdwg.mxu0
    %v1601 = vld [vmem:[%s2 + $0x210] sm:$0xff]
    %v1602 = vld [vmem:[%s2 + $0x218] sm:$0xff]
    %v1603 = vld [vmem:[%s2 + $0x220] sm:$0xff]
    %v1604 = vld [vmem:[%s2 + $0x228] sm:$0xff]
    %v1606 = vsel %vm29, %v1023, 0
    %v1609 = vsel %vm29, %v1027, 0
    %v1612 = vsel %vm29, %v1031, 0
    %v1615 = vsel %vm29, %v1035, 0
    %v1618 = vsel %vm29, %v1305, 0
    %v1621 = vsel %vm29, %v1309, 0
    %v1624 = vsel %vm29, %v1313, 0
    %v1627 = vsel %vm29, %v1317, 0
    %1629 = vmatpush.xpose.msra.mxu0 0.0
    %1630 = vmatpush.xpose.msra.mxu0 0.0
    %1631 = vmatpush.xpose.msra.mxu0 0.0
    %1632 = vmatpush.xpose.msra.mxu0 0.0
    %1633 = vmatpush.xpose.msra.mxu0 0.0
    %1634 = vmatpush.xpose.msra.mxu0 0.0
    %1635 = vmatpush.xpose.msra.mxu0 0.0
    %1636 = vmatpush.xpose.msra.mxu0 0.0
    %1637 = vmatpush.xpose.msra.mxu0 0.0
    %1638 = vmatpush.xpose.msra.mxu0 0.0
    %1639 = vmatpush.xpose.msra.mxu0 0.0
    %1640 = vmatpush.xpose.msra.mxu0 0.0
    %v1641 = vand.u32 %v1627, 4294901760
    %1642 = vmatpush.xpose.msra.mxu0 %v1641
    %v1643 = vand.u32 %v1624, 4294901760
    %1644 = vmatpush.xpose.msra.mxu0 %v1643
    %v1645 = vand.u32 %v1621, 4294901760
    %1646 = vmatpush.xpose.msra.mxu0 %v1645
    %v1647 = vand.u32 %v1618, 4294901760
    %1648 = vmatpush.xpose.msra.mxu0 %v1647
    %v1649 = vand.u32 %v1606, 4294901760
    %v1650 = vsub.f32 %v1606, %v1649
    %v1651 = vand.u32 %v1650, 4294901760
    %v1652 = vsub.f32 %v1650, %v1651
    %v1653 = vand.u32 %v1652, 4294901760
    %1654 = vmatmul.f32.gmra.mxu0 %v1653
    %v1655 = vpop.f32.mrf.mxu0
    %v1656 = vadd.f32 %v1601, %v1655
    %v1657 = vand.u32 %v1609, 4294901760
    %v1658 = vsub.f32 %v1609, %v1657
    %v1659 = vand.u32 %v1658, 4294901760
    %v1660 = vsub.f32 %v1658, %v1659
    %v1661 = vand.u32 %v1660, 4294901760
    %1662 = vmatmul.f32.gmra.mxu0 %v1661
    %v1663 = vpop.f32.mrf.mxu0
    %v1664 = vadd.f32 %v1602, %v1663
    %v1665 = vand.u32 %v1612, 4294901760
    %v1666 = vsub.f32 %v1612, %v1665
    %v1667 = vand.u32 %v1666, 4294901760
    %v1668 = vsub.f32 %v1666, %v1667
    %v1669 = vand.u32 %v1668, 4294901760
    %1670 = vmatmul.f32.gmra.mxu0 %v1669
    %v1671 = vpop.f32.mrf.mxu0
    %v1672 = vadd.f32 %v1603, %v1671
    %v1673 = vand.u32 %v1615, 4294901760
    %v1674 = vsub.f32 %v1615, %v1673
    %v1675 = vand.u32 %v1674, 4294901760
    %v1676 = vsub.f32 %v1674, %v1675
    %v1677 = vand.u32 %v1676, 4294901760
    %1678 = vmatmul.f32.gmra.mxu0 %v1677
    %v1679 = vpop.f32.mrf.mxu0
    %v1680 = vadd.f32 %v1604, %v1679
    %1681 = vdwg.mxu0
    %1682 = vmatpush.xpose.msra.mxu0 0.0
    %1683 = vmatpush.xpose.msra.mxu0 0.0
    %1684 = vmatpush.xpose.msra.mxu0 0.0
    %1685 = vmatpush.xpose.msra.mxu0 0.0
    %1686 = vmatpush.xpose.msra.mxu0 0.0
    %1687 = vmatpush.xpose.msra.mxu0 0.0
    %1688 = vmatpush.xpose.msra.mxu0 0.0
    %1689 = vmatpush.xpose.msra.mxu0 0.0
    %1690 = vmatpush.xpose.msra.mxu0 0.0
    %1691 = vmatpush.xpose.msra.mxu0 0.0
    %1692 = vmatpush.xpose.msra.mxu0 0.0
    %1693 = vmatpush.xpose.msra.mxu0 0.0
    %v1694 = vand.u32 %v1627, 4294901760
    %v1695 = vsub.f32 %v1627, %v1694
    %v1696 = vand.u32 %v1695, 4294901760
    %v1697 = vsub.f32 %v1695, %v1696
    %v1698 = vand.u32 %v1697, 4294901760
    %1699 = vmatpush.xpose.msra.mxu0 %v1698
    %v1700 = vand.u32 %v1624, 4294901760
    %v1701 = vsub.f32 %v1624, %v1700
    %v1702 = vand.u32 %v1701, 4294901760
    %v1703 = vsub.f32 %v1701, %v1702
    %v1704 = vand.u32 %v1703, 4294901760
    %1705 = vmatpush.xpose.msra.mxu0 %v1704
    %v1706 = vand.u32 %v1621, 4294901760
    %v1707 = vsub.f32 %v1621, %v1706
    %v1708 = vand.u32 %v1707, 4294901760
    %v1709 = vsub.f32 %v1707, %v1708
    %v1710 = vand.u32 %v1709, 4294901760
    %1711 = vmatpush.xpose.msra.mxu0 %v1710
    %v1712 = vand.u32 %v1618, 4294901760
    %v1713 = vsub.f32 %v1618, %v1712
    %v1714 = vand.u32 %v1713, 4294901760
    %v1715 = vsub.f32 %v1713, %v1714
    %v1716 = vand.u32 %v1715, 4294901760
    %1717 = vmatpush.xpose.msra.mxu0 %v1716
    %v1718 = vand.u32 %v1606, 4294901760
    %1719 = vmatmul.f32.gmra.mxu0 %v1718
    %v1720 = vpop.f32.mrf.mxu0
    %v1721 = vadd.f32 %v1656, %v1720
    %v1722 = vand.u32 %v1609, 4294901760
    %1723 = vmatmul.f32.gmra.mxu0 %v1722
    %v1724 = vpop.f32.mrf.mxu0
    %v1725 = vadd.f32 %v1664, %v1724
    %v1726 = vand.u32 %v1612, 4294901760
    %1727 = vmatmul.f32.gmra.mxu0 %v1726
    %v1728 = vpop.f32.mrf.mxu0
    %v1729 = vadd.f32 %v1672, %v1728
    %v1730 = vand.u32 %v1615, 4294901760
    %1731 = vmatmul.f32.gmra.mxu0 %v1730
    %v1732 = vpop.f32.mrf.mxu0
    %v1733 = vadd.f32 %v1680, %v1732
    %1734 = vdwg.mxu0
    %1735 = vmatpush.xpose.msra.mxu0 0.0
    %1736 = vmatpush.xpose.msra.mxu0 0.0
    %1737 = vmatpush.xpose.msra.mxu0 0.0
    %1738 = vmatpush.xpose.msra.mxu0 0.0
    %1739 = vmatpush.xpose.msra.mxu0 0.0
    %1740 = vmatpush.xpose.msra.mxu0 0.0
    %1741 = vmatpush.xpose.msra.mxu0 0.0
    %1742 = vmatpush.xpose.msra.mxu0 0.0
    %1743 = vmatpush.xpose.msra.mxu0 0.0
    %1744 = vmatpush.xpose.msra.mxu0 0.0
    %1745 = vmatpush.xpose.msra.mxu0 0.0
    %1746 = vmatpush.xpose.msra.mxu0 0.0
    %v1747 = vand.u32 %v1627, 4294901760
    %v1748 = vsub.f32 %v1627, %v1747
    %1749 = vmatpush.xpose.msra.mxu0 %v1748
    %v1750 = vand.u32 %v1624, 4294901760
    %v1751 = vsub.f32 %v1624, %v1750
    %1752 = vmatpush.xpose.msra.mxu0 %v1751
    %v1753 = vand.u32 %v1621, 4294901760
    %v1754 = vsub.f32 %v1621, %v1753
    %1755 = vmatpush.xpose.msra.mxu0 %v1754
    %v1756 = vand.u32 %v1618, 4294901760
    %v1757 = vsub.f32 %v1618, %v1756
    %1758 = vmatpush.xpose.msra.mxu0 %v1757
    %v1759 = vand.u32 %v1606, 4294901760
    %v1760 = vsub.f32 %v1606, %v1759
    %1761 = vmatmul.f32.gmra.mxu0 %v1760
    %v1762 = vpop.f32.mrf.mxu0
    %v1763 = vadd.f32 %v1721, %v1762
    %v1764 = vand.u32 %v1609, 4294901760
    %v1765 = vsub.f32 %v1609, %v1764
    %1766 = vmatmul.f32.gmra.mxu0 %v1765
    %v1767 = vpop.f32.mrf.mxu0
    %v1768 = vadd.f32 %v1725, %v1767
    %v1769 = vand.u32 %v1612, 4294901760
    %v1770 = vsub.f32 %v1612, %v1769
    %1771 = vmatmul.f32.gmra.mxu0 %v1770
    %v1772 = vpop.f32.mrf.mxu0
    %v1773 = vadd.f32 %v1729, %v1772
    %v1774 = vand.u32 %v1615, 4294901760
    %v1775 = vsub.f32 %v1615, %v1774
    %1776 = vmatmul.f32.gmra.mxu0 %v1775
    %v1777 = vpop.f32.mrf.mxu0
    %v1778 = vadd.f32 %v1733, %v1777
    %1779 = vdwg.mxu0
    %1780 = vmatpush.xpose.msra.mxu0 0.0
    %1781 = vmatpush.xpose.msra.mxu0 0.0
    %1782 = vmatpush.xpose.msra.mxu0 0.0
    %1783 = vmatpush.xpose.msra.mxu0 0.0
    %1784 = vmatpush.xpose.msra.mxu0 0.0
    %1785 = vmatpush.xpose.msra.mxu0 0.0
    %1786 = vmatpush.xpose.msra.mxu0 0.0
    %1787 = vmatpush.xpose.msra.mxu0 0.0
    %1788 = vmatpush.xpose.msra.mxu0 0.0
    %1789 = vmatpush.xpose.msra.mxu0 0.0
    %1790 = vmatpush.xpose.msra.mxu0 0.0
    %1791 = vmatpush.xpose.msra.mxu0 0.0
    %v1792 = vand.u32 %v1627, 4294901760
    %1793 = vmatpush.xpose.msra.mxu0 %v1792
    %v1794 = vand.u32 %v1624, 4294901760
    %1795 = vmatpush.xpose.msra.mxu0 %v1794
    %v1796 = vand.u32 %v1621, 4294901760
    %1797 = vmatpush.xpose.msra.mxu0 %v1796
    %v1798 = vand.u32 %v1618, 4294901760
    %1799 = vmatpush.xpose.msra.mxu0 %v1798
    %v1800 = vand.u32 %v1606, 4294901760
    %v1801 = vsub.f32 %v1606, %v1800
    %v1802 = vand.u32 %v1801, 4294901760
    %1803 = vmatmul.f32.gmra.mxu0 %v1802
    %v1804 = vpop.f32.mrf.mxu0
    %v1805 = vadd.f32 %v1763, %v1804
    %v1806 = vand.u32 %v1609, 4294901760
    %v1807 = vsub.f32 %v1609, %v1806
    %v1808 = vand.u32 %v1807, 4294901760
    %1809 = vmatmul.f32.gmra.mxu0 %v1808
    %v1810 = vpop.f32.mrf.mxu0
    %v1811 = vadd.f32 %v1768, %v1810
    %v1812 = vand.u32 %v1612, 4294901760
    %v1813 = vsub.f32 %v1612, %v1812
    %v1814 = vand.u32 %v1813, 4294901760
    %1815 = vmatmul.f32.gmra.mxu0 %v1814
    %v1816 = vpop.f32.mrf.mxu0
    %v1817 = vadd.f32 %v1773, %v1816
    %v1818 = vand.u32 %v1615, 4294901760
    %v1819 = vsub.f32 %v1615, %v1818
    %v1820 = vand.u32 %v1819, 4294901760
    %1821 = vmatmul.f32.gmra.mxu0 %v1820
    %v1822 = vpop.f32.mrf.mxu0
    %v1823 = vadd.f32 %v1778, %v1822
    %1824 = vdwg.mxu0
    %1825 = vmatpush.xpose.msra.mxu0 0.0
    %1826 = vmatpush.xpose.msra.mxu0 0.0
    %1827 = vmatpush.xpose.msra.mxu0 0.0
    %1828 = vmatpush.xpose.msra.mxu0 0.0
    %1829 = vmatpush.xpose.msra.mxu0 0.0
    %1830 = vmatpush.xpose.msra.mxu0 0.0
    %1831 = vmatpush.xpose.msra.mxu0 0.0
    %1832 = vmatpush.xpose.msra.mxu0 0.0
    %1833 = vmatpush.xpose.msra.mxu0 0.0
    %1834 = vmatpush.xpose.msra.mxu0 0.0
    %1835 = vmatpush.xpose.msra.mxu0 0.0
    %1836 = vmatpush.xpose.msra.mxu0 0.0
    %v1837 = vand.u32 %v1627, 4294901760
    %v1838 = vsub.f32 %v1627, %v1837
    %v1839 = vand.u32 %v1838, 4294901760
    %1840 = vmatpush.xpose.msra.mxu0 %v1839
    %v1841 = vand.u32 %v1624, 4294901760
    %v1842 = vsub.f32 %v1624, %v1841
    %v1843 = vand.u32 %v1842, 4294901760
    %1844 = vmatpush.xpose.msra.mxu0 %v1843
    %v1845 = vand.u32 %v1621, 4294901760
    %v1846 = vsub.f32 %v1621, %v1845
    %v1847 = vand.u32 %v1846, 4294901760
    %1848 = vmatpush.xpose.msra.mxu0 %v1847
    %v1849 = vand.u32 %v1618, 4294901760
    %v1850 = vsub.f32 %v1618, %v1849
    %v1851 = vand.u32 %v1850, 4294901760
    %1852 = vmatpush.xpose.msra.mxu0 %v1851
    %v1853 = vand.u32 %v1606, 4294901760
    %1854 = vmatmul.f32.gmra.mxu0 %v1853
    %v1855 = vpop.f32.mrf.mxu0
    %v1856 = vadd.f32 %v1805, %v1855
    %v1857 = vand.u32 %v1609, 4294901760
    %1858 = vmatmul.f32.gmra.mxu0 %v1857
    %v1859 = vpop.f32.mrf.mxu0
    %v1860 = vadd.f32 %v1811, %v1859
    %v1861 = vand.u32 %v1612, 4294901760
    %1862 = vmatmul.f32.gmra.mxu0 %v1861
    %v1863 = vpop.f32.mrf.mxu0
    %v1864 = vadd.f32 %v1817, %v1863
    %v1865 = vand.u32 %v1615, 4294901760
    %1866 = vmatmul.f32.gmra.mxu0 %v1865
    %v1867 = vpop.f32.mrf.mxu0
    %v1868 = vadd.f32 %v1823, %v1867
    %1869 = vdwg.mxu0
    %1870 = vmatpush.xpose.msra.mxu0 0.0
    %1871 = vmatpush.xpose.msra.mxu0 0.0
    %1872 = vmatpush.xpose.msra.mxu0 0.0
    %1873 = vmatpush.xpose.msra.mxu0 0.0
    %1874 = vmatpush.xpose.msra.mxu0 0.0
    %1875 = vmatpush.xpose.msra.mxu0 0.0
    %1876 = vmatpush.xpose.msra.mxu0 0.0
    %1877 = vmatpush.xpose.msra.mxu0 0.0
    %1878 = vmatpush.xpose.msra.mxu0 0.0
    %1879 = vmatpush.xpose.msra.mxu0 0.0
    %1880 = vmatpush.xpose.msra.mxu0 0.0
    %1881 = vmatpush.xpose.msra.mxu0 0.0
    %v1882 = vand.u32 %v1627, 4294901760
    %1883 = vmatpush.xpose.msra.mxu0 %v1882
    %v1884 = vand.u32 %v1624, 4294901760
    %1885 = vmatpush.xpose.msra.mxu0 %v1884
    %v1886 = vand.u32 %v1621, 4294901760
    %1887 = vmatpush.xpose.msra.mxu0 %v1886
    %v1888 = vand.u32 %v1618, 4294901760
    %1889 = vmatpush.xpose.msra.mxu0 %v1888
    %v1890 = vand.u32 %v1606, 4294901760
    %1891 = vmatmul.f32.gmra.mxu0 %v1890
    %v1892 = vpop.f32.mrf.mxu0
    %v1893 = vadd.f32 %v1856, %v1892
    %v1894 = vand.u32 %v1609, 4294901760
    %1895 = vmatmul.f32.gmra.mxu0 %v1894
    %v1896 = vpop.f32.mrf.mxu0
    %v1897 = vadd.f32 %v1860, %v1896
    %v1898 = vand.u32 %v1612, 4294901760
    %1899 = vmatmul.f32.gmra.mxu0 %v1898
    %v1900 = vpop.f32.mrf.mxu0
    %v1901 = vadd.f32 %v1864, %v1900
    %v1902 = vand.u32 %v1615, 4294901760
    %1903 = vmatmul.f32.gmra.mxu0 %v1902
    %v1904 = vpop.f32.mrf.mxu0
    %v1905 = vadd.f32 %v1868, %v1904
    %1906 = vdwg.mxu0
    %v1907 = vsel %vm29, %v1893, -inf
    %1908 = vmax.xlane.f32.xlu0 %v1907
    %v1909 = vpop.xlane.xlu0 %1908
    %v1910 = vsel %vm29, %v1897, -inf
    %1911 = vmax.xlane.f32.xlu0 %v1910
    %v1912 = vpop.xlane.xlu0 %1911
    %v1913 = vsel %vm29, %v1901, -inf
    %1914 = vmax.xlane.f32.xlu0 %v1913
    %v1915 = vpop.xlane.xlu0 %1914
    %v1916 = vsel %vm29, %v1905, -inf
    %1917 = vmax.xlane.f32.xlu0 %v1916
    %v1918 = vpop.xlane.xlu0 %1917
    %v1919 = vsub.f32 %v1893, %v1909
    %v1920 = vsub.f32 %v1897, %v1912
    %v1921 = vsub.f32 %v1901, %v1915
    %v1922 = vsub.f32 %v1905, %v1918
    %v1923 = vmul.f32 %v1919, 1.442695
    %v1924 = vpow.pop %v1923
    %v1925 = vmul.f32 %v1920, 1.442695
    %v1926 = vpow.pop %v1925
    %v1927 = vmul.f32 %v1921, 1.442695
    %v1928 = vpow.pop %v1927
    %v1929 = vmul.f32 %v1922, 1.442695
    %v1930 = vpow.pop %v1929
    %v1931 = vsel %vm29, %v1924, 0.0
    %1932 = vadd.xlane.f32.xlu0 %v1931
    %v1933 = vpop.xlane.xlu0 %1932
    %v1934 = vsel %vm29, %v1926, 0.0
    %1935 = vadd.xlane.f32.xlu0 %v1934
    %v1936 = vpop.xlane.xlu0 %1935
    %v1937 = vsel %vm29, %v1928, 0.0
    %1938 = vadd.xlane.f32.xlu0 %v1937
    %v1939 = vpop.xlane.xlu0 %1938
    %v1940 = vsel %vm29, %v1930, 0.0
    %1941 = vadd.xlane.f32.xlu0 %v1940
    %v1942 = vpop.xlane.xlu0 %1941
    %v1943 = vrcp.pop %v1933
    %v1944 = vmul.f32 %v1933, %v1943
    %v1945 = vsub.f32 1.0, %v1944
    %v1946 = vmul.f32 %v1943, %v1945
    %v1947 = vadd.f32 %v1943, %v1946
    %vm1948 = vweird.f32 %v1933
    %vm1949 = vweird.f32 %v1943
    %vm1950 = vmor %vm1948, %vm1949
    %v1951 = vsel %vm1950, %v1943, %v1947
    %v1952 = vand.u32 2147483647, %v1933
    %vm1953 = vcmp.eq.f32.partialorder %v1952, 8.507059e+37
    %v1954 = vand.u32 %v1933, 2147483648
    %v1955 = vor.u32 1.1754944e-38, %v1954
    %v1956 = vsel %vm1953, %v1955, %v1951
    %v1957 = vmul.f32 %v1924, %v1956
    %v1958 = vrcp.pop %v1936
    %v1959 = vmul.f32 %v1936, %v1958
    %v1960 = vsub.f32 1.0, %v1959
    %v1961 = vmul.f32 %v1958, %v1960
    %v1962 = vadd.f32 %v1958, %v1961
    %vm1963 = vweird.f32 %v1936
    %vm1964 = vweird.f32 %v1958
    %vm1965 = vmor %vm1963, %vm1964
    %v1966 = vsel %vm1965, %v1958, %v1962
    %v1967 = vand.u32 2147483647, %v1936
    %vm1968 = vcmp.eq.f32.partialorder %v1967, 8.507059e+37
    %v1969 = vand.u32 %v1936, 2147483648
    %v1970 = vor.u32 1.1754944e-38, %v1969
    %v1971 = vsel %vm1968, %v1970, %v1966
    %v1972 = vmul.f32 %v1926, %v1971
    %v1973 = vrcp.pop %v1939
    %v1974 = vmul.f32 %v1939, %v1973
    %v1975 = vsub.f32 1.0, %v1974
    %v1976 = vmul.f32 %v1973, %v1975
    %v1977 = vadd.f32 %v1973, %v1976
    %vm1978 = vweird.f32 %v1939
    %vm1979 = vweird.f32 %v1973
    %vm1980 = vmor %vm1978, %vm1979
    %v1981 = vsel %vm1980, %v1973, %v1977
    %v1982 = vand.u32 2147483647, %v1939
    %vm1983 = vcmp.eq.f32.partialorder %v1982, 8.507059e+37
    %v1984 = vand.u32 %v1939, 2147483648
    %v1985 = vor.u32 1.1754944e-38, %v1984
    %v1986 = vsel %vm1983, %v1985, %v1981
    %v1987 = vmul.f32 %v1928, %v1986
    %v1988 = vrcp.pop %v1942
    %v1989 = vmul.f32 %v1942, %v1988
    %v1990 = vsub.f32 1.0, %v1989
    %v1991 = vmul.f32 %v1988, %v1990
    %v1992 = vadd.f32 %v1988, %v1991
    %vm1993 = vweird.f32 %v1942
    %vm1994 = vweird.f32 %v1988
    %vm1995 = vmor %vm1993, %vm1994
    %v1996 = vsel %vm1995, %v1988, %v1992
    %v1997 = vand.u32 2147483647, %v1942
    %vm1998 = vcmp.eq.f32.partialorder %v1997, 8.507059e+37
    %v1999 = vand.u32 %v1942, 2147483648
    %v2000 = vor.u32 1.1754944e-38, %v1999
    %v2001 = vsel %vm1998, %v2000, %v1996
    %v2002 = vmul.f32 %v1930, %v2001
    %v2004 = vsel %vm29, %v1957, 0
    %v2007 = vsel %vm29, %v1972, 0
    %v2010 = vsel %vm29, %v1987, 0
    %v2013 = vsel %vm29, %v2002, 0
    %2015 = vmatpush.msra.mxu0 0.0
    %2016 = vmatpush.msra.mxu0 0.0
    %2017 = vmatpush.msra.mxu0 0.0
    %2018 = vmatpush.msra.mxu0 0.0
    %2019 = vmatpush.msra.mxu0 0.0
    %2020 = vmatpush.msra.mxu0 0.0
    %2021 = vmatpush.msra.mxu0 0.0
    %2022 = vmatpush.msra.mxu0 0.0
    %2023 = vmatpush.msra.mxu0 0.0
    %2024 = vmatpush.msra.mxu0 0.0
    %2025 = vmatpush.msra.mxu0 0.0
    %2026 = vmatpush.msra.mxu0 0.0
    %v2027 = vand.u32 %v1599, 4294901760
    %2028 = vmatpush.msra.mxu0 %v2027
    %v2029 = vand.u32 %v1595, 4294901760
    %2030 = vmatpush.msra.mxu0 %v2029
    %v2031 = vand.u32 %v1591, 4294901760
    %2032 = vmatpush.msra.mxu0 %v2031
    %v2033 = vand.u32 %v1587, 4294901760
    %2034 = vmatpush.msra.mxu0 %v2033
    %v2035 = vand.u32 %v2004, 4294901760
    %v2036 = vsub.f32 %v2004, %v2035
    %v2037 = vand.u32 %v2036, 4294901760
    %v2038 = vsub.f32 %v2036, %v2037
    %v2039 = vand.u32 %v2038, 4294901760
    %2040 = vmatmul.f32.gmra.mxu0 %v2039
    %v2041 = vpop.f32.mrf.mxu0
    %v2042 = vadd.f32 0.0, %v2041
    %v2043 = vand.u32 %v2007, 4294901760
    %v2044 = vsub.f32 %v2007, %v2043
    %v2045 = vand.u32 %v2044, 4294901760
    %v2046 = vsub.f32 %v2044, %v2045
    %v2047 = vand.u32 %v2046, 4294901760
    %2048 = vmatmul.f32.gmra.mxu0 %v2047
    %v2049 = vpop.f32.mrf.mxu0
    %v2050 = vadd.f32 0.0, %v2049
    %v2051 = vand.u32 %v2010, 4294901760
    %v2052 = vsub.f32 %v2010, %v2051
    %v2053 = vand.u32 %v2052, 4294901760
    %v2054 = vsub.f32 %v2052, %v2053
    %v2055 = vand.u32 %v2054, 4294901760
    %2056 = vmatmul.f32.gmra.mxu0 %v2055
    %v2057 = vpop.f32.mrf.mxu0
    %v2058 = vadd.f32 0.0, %v2057
    %v2059 = vand.u32 %v2013, 4294901760
    %v2060 = vsub.f32 %v2013, %v2059
    %v2061 = vand.u32 %v2060, 4294901760
    %v2062 = vsub.f32 %v2060, %v2061
    %v2063 = vand.u32 %v2062, 4294901760
    %2064 = vmatmul.f32.gmra.mxu0 %v2063
    %v2065 = vpop.f32.mrf.mxu0
    %v2066 = vadd.f32 0.0, %v2065
    %2067 = vdwg.mxu0
    %2068 = vmatpush.msra.mxu0 0.0
    %2069 = vmatpush.msra.mxu0 0.0
    %2070 = vmatpush.msra.mxu0 0.0
    %2071 = vmatpush.msra.mxu0 0.0
    %2072 = vmatpush.msra.mxu0 0.0
    %2073 = vmatpush.msra.mxu0 0.0
    %2074 = vmatpush.msra.mxu0 0.0
    %2075 = vmatpush.msra.mxu0 0.0
    %2076 = vmatpush.msra.mxu0 0.0
    %2077 = vmatpush.msra.mxu0 0.0
    %2078 = vmatpush.msra.mxu0 0.0
    %2079 = vmatpush.msra.mxu0 0.0
    %v2080 = vand.u32 %v1599, 4294901760
    %v2081 = vsub.f32 %v1599, %v2080
    %v2082 = vand.u32 %v2081, 4294901760
    %v2083 = vsub.f32 %v2081, %v2082
    %v2084 = vand.u32 %v2083, 4294901760
    %2085 = vmatpush.msra.mxu0 %v2084
    %v2086 = vand.u32 %v1595, 4294901760
    %v2087 = vsub.f32 %v1595, %v2086
    %v2088 = vand.u32 %v2087, 4294901760
    %v2089 = vsub.f32 %v2087, %v2088
    %v2090 = vand.u32 %v2089, 4294901760
    %2091 = vmatpush.msra.mxu0 %v2090
    %v2092 = vand.u32 %v1591, 4294901760
    %v2093 = vsub.f32 %v1591, %v2092
    %v2094 = vand.u32 %v2093, 4294901760
    %v2095 = vsub.f32 %v2093, %v2094
    %v2096 = vand.u32 %v2095, 4294901760
    %2097 = vmatpush.msra.mxu0 %v2096
    %v2098 = vand.u32 %v1587, 4294901760
    %v2099 = vsub.f32 %v1587, %v2098
    %v2100 = vand.u32 %v2099, 4294901760
    %v2101 = vsub.f32 %v2099, %v2100
    %v2102 = vand.u32 %v2101, 4294901760
    %2103 = vmatpush.msra.mxu0 %v2102
    %v2104 = vand.u32 %v2004, 4294901760
    %2105 = vmatmul.f32.gmra.mxu0 %v2104
    %v2106 = vpop.f32.mrf.mxu0
    %v2107 = vadd.f32 %v2042, %v2106
    %v2108 = vand.u32 %v2007, 4294901760
    %2109 = vmatmul.f32.gmra.mxu0 %v2108
    %v2110 = vpop.f32.mrf.mxu0
    %v2111 = vadd.f32 %v2050, %v2110
    %v2112 = vand.u32 %v2010, 4294901760
    %2113 = vmatmul.f32.gmra.mxu0 %v2112
    %v2114 = vpop.f32.mrf.mxu0
    %v2115 = vadd.f32 %v2058, %v2114
    %v2116 = vand.u32 %v2013, 4294901760
    %2117 = vmatmul.f32.gmra.mxu0 %v2116
    %v2118 = vpop.f32.mrf.mxu0
    %v2119 = vadd.f32 %v2066, %v2118
    %2120 = vdwg.mxu0
    %2121 = vmatpush.msra.mxu0 0.0
    %2122 = vmatpush.msra.mxu0 0.0
    %2123 = vmatpush.msra.mxu0 0.0
    %2124 = vmatpush.msra.mxu0 0.0
    %2125 = vmatpush.msra.mxu0 0.0
    %2126 = vmatpush.msra.mxu0 0.0
    %2127 = vmatpush.msra.mxu0 0.0
    %2128 = vmatpush.msra.mxu0 0.0
    %2129 = vmatpush.msra.mxu0 0.0
    %2130 = vmatpush.msra.mxu0 0.0
    %2131 = vmatpush.msra.mxu0 0.0
    %2132 = vmatpush.msra.mxu0 0.0
    %v2133 = vand.u32 %v1599, 4294901760
    %v2134 = vsub.f32 %v1599, %v2133
    %2135 = vmatpush.msra.mxu0 %v2134
    %v2136 = vand.u32 %v1595, 4294901760
    %v2137 = vsub.f32 %v1595, %v2136
    %2138 = vmatpush.msra.mxu0 %v2137
    %v2139 = vand.u32 %v1591, 4294901760
    %v2140 = vsub.f32 %v1591, %v2139
    %2141 = vmatpush.msra.mxu0 %v2140
    %v2142 = vand.u32 %v1587, 4294901760
    %v2143 = vsub.f32 %v1587, %v2142
    %2144 = vmatpush.msra.mxu0 %v2143
    %v2145 = vand.u32 %v2004, 4294901760
    %v2146 = vsub.f32 %v2004, %v2145
    %2147 = vmatmul.f32.gmra.mxu0 %v2146
    %v2148 = vpop.f32.mrf.mxu0
    %v2149 = vadd.f32 %v2107, %v2148
    %v2150 = vand.u32 %v2007, 4294901760
    %v2151 = vsub.f32 %v2007, %v2150
    %2152 = vmatmul.f32.gmra.mxu0 %v2151
    %v2153 = vpop.f32.mrf.mxu0
    %v2154 = vadd.f32 %v2111, %v2153
    %v2155 = vand.u32 %v2010, 4294901760
    %v2156 = vsub.f32 %v2010, %v2155
    %2157 = vmatmul.f32.gmra.mxu0 %v2156
    %v2158 = vpop.f32.mrf.mxu0
    %v2159 = vadd.f32 %v2115, %v2158
    %v2160 = vand.u32 %v2013, 4294901760
    %v2161 = vsub.f32 %v2013, %v2160
    %2162 = vmatmul.f32.gmra.mxu0 %v2161
    %v2163 = vpop.f32.mrf.mxu0
    %v2164 = vadd.f32 %v2119, %v2163
    %2165 = vdwg.mxu0
    %2166 = vmatpush.msra.mxu0 0.0
    %2167 = vmatpush.msra.mxu0 0.0
    %2168 = vmatpush.msra.mxu0 0.0
    %2169 = vmatpush.msra.mxu0 0.0
    %2170 = vmatpush.msra.mxu0 0.0
    %2171 = vmatpush.msra.mxu0 0.0
    %2172 = vmatpush.msra.mxu0 0.0
    %2173 = vmatpush.msra.mxu0 0.0
    %2174 = vmatpush.msra.mxu0 0.0
    %2175 = vmatpush.msra.mxu0 0.0
    %2176 = vmatpush.msra.mxu0 0.0
    %2177 = vmatpush.msra.mxu0 0.0
    %v2178 = vand.u32 %v1599, 4294901760
    %2179 = vmatpush.msra.mxu0 %v2178
    %v2180 = vand.u32 %v1595, 4294901760
    %2181 = vmatpush.msra.mxu0 %v2180
    %v2182 = vand.u32 %v1591, 4294901760
    %2183 = vmatpush.msra.mxu0 %v2182
    %v2184 = vand.u32 %v1587, 4294901760
    %2185 = vmatpush.msra.mxu0 %v2184
    %v2186 = vand.u32 %v2004, 4294901760
    %v2187 = vsub.f32 %v2004, %v2186
    %v2188 = vand.u32 %v2187, 4294901760
    %2189 = vmatmul.f32.gmra.mxu0 %v2188
    %v2190 = vpop.f32.mrf.mxu0
    %v2191 = vadd.f32 %v2149, %v2190
    %v2192 = vand.u32 %v2007, 4294901760
    %v2193 = vsub.f32 %v2007, %v2192
    %v2194 = vand.u32 %v2193, 4294901760
    %2195 = vmatmul.f32.gmra.mxu0 %v2194
    %v2196 = vpop.f32.mrf.mxu0
    %v2197 = vadd.f32 %v2154, %v2196
    %v2198 = vand.u32 %v2010, 4294901760
    %v2199 = vsub.f32 %v2010, %v2198
    %v2200 = vand.u32 %v2199, 4294901760
    %2201 = vmatmul.f32.gmra.mxu0 %v2200
    %v2202 = vpop.f32.mrf.mxu0
    %v2203 = vadd.f32 %v2159, %v2202
    %v2204 = vand.u32 %v2013, 4294901760
    %v2205 = vsub.f32 %v2013, %v2204
    %v2206 = vand.u32 %v2205, 4294901760
    %2207 = vmatmul.f32.gmra.mxu0 %v2206
    %v2208 = vpop.f32.mrf.mxu0
    %v2209 = vadd.f32 %v2164, %v2208
    %2210 = vdwg.mxu0
    %2211 = vmatpush.msra.mxu0 0.0
    %2212 = vmatpush.msra.mxu0 0.0
    %2213 = vmatpush.msra.mxu0 0.0
    %2214 = vmatpush.msra.mxu0 0.0
    %2215 = vmatpush.msra.mxu0 0.0
    %2216 = vmatpush.msra.mxu0 0.0
    %2217 = vmatpush.msra.mxu0 0.0
    %2218 = vmatpush.msra.mxu0 0.0
    %2219 = vmatpush.msra.mxu0 0.0
    %2220 = vmatpush.msra.mxu0 0.0
    %2221 = vmatpush.msra.mxu0 0.0
    %2222 = vmatpush.msra.mxu0 0.0
    %v2223 = vand.u32 %v1599, 4294901760
    %v2224 = vsub.f32 %v1599, %v2223
    %v2225 = vand.u32 %v2224, 4294901760
    %2226 = vmatpush.msra.mxu0 %v2225
    %v2227 = vand.u32 %v1595, 4294901760
    %v2228 = vsub.f32 %v1595, %v2227
    %v2229 = vand.u32 %v2228, 4294901760
    %2230 = vmatpush.msra.mxu0 %v2229
    %v2231 = vand.u32 %v1591, 4294901760
    %v2232 = vsub.f32 %v1591, %v2231
    %v2233 = vand.u32 %v2232, 4294901760
    %2234 = vmatpush.msra.mxu0 %v2233
    %v2235 = vand.u32 %v1587, 4294901760
    %v2236 = vsub.f32 %v1587, %v2235
    %v2237 = vand.u32 %v2236, 4294901760
    %2238 = vmatpush.msra.mxu0 %v2237
    %v2239 = vand.u32 %v2004, 4294901760
    %2240 = vmatmul.f32.gmra.mxu0 %v2239
    %v2241 = vpop.f32.mrf.mxu0
    %v2242 = vadd.f32 %v2191, %v2241
    %v2243 = vand.u32 %v2007, 4294901760
    %2244 = vmatmul.f32.gmra.mxu0 %v2243
    %v2245 = vpop.f32.mrf.mxu0
    %v2246 = vadd.f32 %v2197, %v2245
    %v2247 = vand.u32 %v2010, 4294901760
    %2248 = vmatmul.f32.gmra.mxu0 %v2247
    %v2249 = vpop.f32.mrf.mxu0
    %v2250 = vadd.f32 %v2203, %v2249
    %v2251 = vand.u32 %v2013, 4294901760
    %2252 = vmatmul.f32.gmra.mxu0 %v2251
    %v2253 = vpop.f32.mrf.mxu0
    %v2254 = vadd.f32 %v2209, %v2253
    %2255 = vdwg.mxu0
    %2256 = vmatpush.msra.mxu0 0.0
    %2257 = vmatpush.msra.mxu0 0.0
    %2258 = vmatpush.msra.mxu0 0.0
    %2259 = vmatpush.msra.mxu0 0.0
    %2260 = vmatpush.msra.mxu0 0.0
    %2261 = vmatpush.msra.mxu0 0.0
    %2262 = vmatpush.msra.mxu0 0.0
    %2263 = vmatpush.msra.mxu0 0.0
    %2264 = vmatpush.msra.mxu0 0.0
    %2265 = vmatpush.msra.mxu0 0.0
    %2266 = vmatpush.msra.mxu0 0.0
    %2267 = vmatpush.msra.mxu0 0.0
    %v2268 = vand.u32 %v1599, 4294901760
    %2269 = vmatpush.msra.mxu0 %v2268
    %v2270 = vand.u32 %v1595, 4294901760
    %2271 = vmatpush.msra.mxu0 %v2270
    %v2272 = vand.u32 %v1591, 4294901760
    %2273 = vmatpush.msra.mxu0 %v2272
    %v2274 = vand.u32 %v1587, 4294901760
    %2275 = vmatpush.msra.mxu0 %v2274
    %v2276 = vand.u32 %v2004, 4294901760
    %2277 = vmatmul.f32.gmra.mxu0 %v2276
    %v2278 = vpop.f32.mrf.mxu0
    %v2279 = vadd.f32 %v2242, %v2278
    %v2280 = vand.u32 %v2007, 4294901760
    %2281 = vmatmul.f32.gmra.mxu0 %v2280
    %v2282 = vpop.f32.mrf.mxu0
    %v2283 = vadd.f32 %v2246, %v2282
    %v2284 = vand.u32 %v2010, 4294901760
    %2285 = vmatmul.f32.gmra.mxu0 %v2284
    %v2286 = vpop.f32.mrf.mxu0
    %v2287 = vadd.f32 %v2250, %v2286
    %v2288 = vand.u32 %v2013, 4294901760
    %2289 = vmatmul.f32.gmra.mxu0 %v2288
    %v2290 = vpop.f32.mrf.mxu0
    %v2291 = vadd.f32 %v2254, %v2290
    %2292 = vdwg.mxu0
    %v2293 = vperm.slane %v24, 1
    %v2295 = vsel %vm29, %v2279, 0
    %v2298 = vsel %vm29, %v2283, 0
    %v2301 = vsel %vm29, %v2287, 0
    %v2304 = vsel %vm29, %v2291, 0
    %2306 = vmatpush.msra.mxu0 0.0
    %2307 = vmatpush.msra.mxu0 0.0
    %2308 = vmatpush.msra.mxu0 0.0
    %2309 = vmatpush.msra.mxu0 0.0
    %2310 = vmatpush.msra.mxu0 0.0
    %2311 = vmatpush.msra.mxu0 0.0
    %2312 = vmatpush.msra.mxu0 0.0
    %2313 = vmatpush.msra.mxu0 0.0
    %2314 = vmatpush.msra.mxu0 0.0
    %2315 = vmatpush.msra.mxu0 0.0
    %2316 = vmatpush.msra.mxu0 0.0
    %2317 = vmatpush.msra.mxu0 0.0
    %v2318 = vand.u32 %v637, 4294901760
    %2319 = vmatpush.msra.mxu0 %v2318
    %v2320 = vand.u32 %v636, 4294901760
    %2321 = vmatpush.msra.mxu0 %v2320
    %v2322 = vand.u32 %v635, 4294901760
    %2323 = vmatpush.msra.mxu0 %v2322
    %v2324 = vand.u32 %v634, 4294901760
    %2325 = vmatpush.msra.mxu0 %v2324
    %v2326 = vand.u32 %v2295, 4294901760
    %v2327 = vsub.f32 %v2295, %v2326
    %v2328 = vand.u32 %v2327, 4294901760
    %v2329 = vsub.f32 %v2327, %v2328
    %v2330 = vand.u32 %v2329, 4294901760
    %2331 = vmatmul.f32.gmra.mxu0 %v2330
    %v2332 = vpop.f32.mrf.mxu0
    %v2333 = vadd.f32 %v2293, %v2332
    %v2334 = vand.u32 %v2298, 4294901760
    %v2335 = vsub.f32 %v2298, %v2334
    %v2336 = vand.u32 %v2335, 4294901760
    %v2337 = vsub.f32 %v2335, %v2336
    %v2338 = vand.u32 %v2337, 4294901760
    %2339 = vmatmul.f32.gmra.mxu0 %v2338
    %v2340 = vpop.f32.mrf.mxu0
    %v2341 = vadd.f32 %v2293, %v2340
    %v2342 = vand.u32 %v2301, 4294901760
    %v2343 = vsub.f32 %v2301, %v2342
    %v2344 = vand.u32 %v2343, 4294901760
    %v2345 = vsub.f32 %v2343, %v2344
    %v2346 = vand.u32 %v2345, 4294901760
    %2347 = vmatmul.f32.gmra.mxu0 %v2346
    %v2348 = vpop.f32.mrf.mxu0
    %v2349 = vadd.f32 %v2293, %v2348
    %v2350 = vand.u32 %v2304, 4294901760
    %v2351 = vsub.f32 %v2304, %v2350
    %v2352 = vand.u32 %v2351, 4294901760
    %v2353 = vsub.f32 %v2351, %v2352
    %v2354 = vand.u32 %v2353, 4294901760
    %2355 = vmatmul.f32.gmra.mxu0 %v2354
    %v2356 = vpop.f32.mrf.mxu0
    %v2357 = vadd.f32 %v2293, %v2356
    %2358 = vdwg.mxu0
    %2359 = vmatpush.msra.mxu0 0.0
    %2360 = vmatpush.msra.mxu0 0.0
    %2361 = vmatpush.msra.mxu0 0.0
    %2362 = vmatpush.msra.mxu0 0.0
    %2363 = vmatpush.msra.mxu0 0.0
    %2364 = vmatpush.msra.mxu0 0.0
    %2365 = vmatpush.msra.mxu0 0.0
    %2366 = vmatpush.msra.mxu0 0.0
    %2367 = vmatpush.msra.mxu0 0.0
    %2368 = vmatpush.msra.mxu0 0.0
    %2369 = vmatpush.msra.mxu0 0.0
    %2370 = vmatpush.msra.mxu0 0.0
    %v2371 = vand.u32 %v637, 4294901760
    %v2372 = vsub.f32 %v637, %v2371
    %v2373 = vand.u32 %v2372, 4294901760
    %v2374 = vsub.f32 %v2372, %v2373
    %v2375 = vand.u32 %v2374, 4294901760
    %2376 = vmatpush.msra.mxu0 %v2375
    %v2377 = vand.u32 %v636, 4294901760
    %v2378 = vsub.f32 %v636, %v2377
    %v2379 = vand.u32 %v2378, 4294901760
    %v2380 = vsub.f32 %v2378, %v2379
    %v2381 = vand.u32 %v2380, 4294901760
    %2382 = vmatpush.msra.mxu0 %v2381
    %v2383 = vand.u32 %v635, 4294901760
    %v2384 = vsub.f32 %v635, %v2383
    %v2385 = vand.u32 %v2384, 4294901760
    %v2386 = vsub.f32 %v2384, %v2385
    %v2387 = vand.u32 %v2386, 4294901760
    %2388 = vmatpush.msra.mxu0 %v2387
    %v2389 = vand.u32 %v634, 4294901760
    %v2390 = vsub.f32 %v634, %v2389
    %v2391 = vand.u32 %v2390, 4294901760
    %v2392 = vsub.f32 %v2390, %v2391
    %v2393 = vand.u32 %v2392, 4294901760
    %2394 = vmatpush.msra.mxu0 %v2393
    %v2395 = vand.u32 %v2295, 4294901760
    %2396 = vmatmul.f32.gmra.mxu0 %v2395
    %v2397 = vpop.f32.mrf.mxu0
    %v2398 = vadd.f32 %v2333, %v2397
    %v2399 = vand.u32 %v2298, 4294901760
    %2400 = vmatmul.f32.gmra.mxu0 %v2399
    %v2401 = vpop.f32.mrf.mxu0
    %v2402 = vadd.f32 %v2341, %v2401
    %v2403 = vand.u32 %v2301, 4294901760
    %2404 = vmatmul.f32.gmra.mxu0 %v2403
    %v2405 = vpop.f32.mrf.mxu0
    %v2406 = vadd.f32 %v2349, %v2405
    %v2407 = vand.u32 %v2304, 4294901760
    %2408 = vmatmul.f32.gmra.mxu0 %v2407
    %v2409 = vpop.f32.mrf.mxu0
    %v2410 = vadd.f32 %v2357, %v2409
    %2411 = vdwg.mxu0
    %2412 = vmatpush.msra.mxu0 0.0
    %2413 = vmatpush.msra.mxu0 0.0
    %2414 = vmatpush.msra.mxu0 0.0
    %2415 = vmatpush.msra.mxu0 0.0
    %2416 = vmatpush.msra.mxu0 0.0
    %2417 = vmatpush.msra.mxu0 0.0
    %2418 = vmatpush.msra.mxu0 0.0
    %2419 = vmatpush.msra.mxu0 0.0
    %2420 = vmatpush.msra.mxu0 0.0
    %2421 = vmatpush.msra.mxu0 0.0
    %2422 = vmatpush.msra.mxu0 0.0
    %2423 = vmatpush.msra.mxu0 0.0
    %v2424 = vand.u32 %v637, 4294901760
    %v2425 = vsub.f32 %v637, %v2424
    %2426 = vmatpush.msra.mxu0 %v2425
    %v2427 = vand.u32 %v636, 4294901760
    %v2428 = vsub.f32 %v636, %v2427
    %2429 = vmatpush.msra.mxu0 %v2428
    %v2430 = vand.u32 %v635, 4294901760
    %v2431 = vsub.f32 %v635, %v2430
    %2432 = vmatpush.msra.mxu0 %v2431
    %v2433 = vand.u32 %v634, 4294901760
    %v2434 = vsub.f32 %v634, %v2433
    %2435 = vmatpush.msra.mxu0 %v2434
    %v2436 = vand.u32 %v2295, 4294901760
    %v2437 = vsub.f32 %v2295, %v2436
    %2438 = vmatmul.f32.gmra.mxu0 %v2437
    %v2439 = vpop.f32.mrf.mxu0
    %v2440 = vadd.f32 %v2398, %v2439
    %v2441 = vand.u32 %v2298, 4294901760
    %v2442 = vsub.f32 %v2298, %v2441
    %2443 = vmatmul.f32.gmra.mxu0 %v2442
    %v2444 = vpop.f32.mrf.mxu0
    %v2445 = vadd.f32 %v2402, %v2444
    %v2446 = vand.u32 %v2301, 4294901760
    %v2447 = vsub.f32 %v2301, %v2446
    %2448 = vmatmul.f32.gmra.mxu0 %v2447
    %v2449 = vpop.f32.mrf.mxu0
    %v2450 = vadd.f32 %v2406, %v2449
    %v2451 = vand.u32 %v2304, 4294901760
    %v2452 = vsub.f32 %v2304, %v2451
    %2453 = vmatmul.f32.gmra.mxu0 %v2452
    %v2454 = vpop.f32.mrf.mxu0
    %v2455 = vadd.f32 %v2410, %v2454
    %2456 = vdwg.mxu0
    %2457 = vmatpush.msra.mxu0 0.0
    %2458 = vmatpush.msra.mxu0 0.0
    %2459 = vmatpush.msra.mxu0 0.0
    %2460 = vmatpush.msra.mxu0 0.0
    %2461 = vmatpush.msra.mxu0 0.0
    %2462 = vmatpush.msra.mxu0 0.0
    %2463 = vmatpush.msra.mxu0 0.0
    %2464 = vmatpush.msra.mxu0 0.0
    %2465 = vmatpush.msra.mxu0 0.0
    %2466 = vmatpush.msra.mxu0 0.0
    %2467 = vmatpush.msra.mxu0 0.0
    %2468 = vmatpush.msra.mxu0 0.0
    %v2469 = vand.u32 %v637, 4294901760
    %2470 = vmatpush.msra.mxu0 %v2469
    %v2471 = vand.u32 %v636, 4294901760
    %2472 = vmatpush.msra.mxu0 %v2471
    %v2473 = vand.u32 %v635, 4294901760
    %2474 = vmatpush.msra.mxu0 %v2473
    %v2475 = vand.u32 %v634, 4294901760
    %2476 = vmatpush.msra.mxu0 %v2475
    %v2477 = vand.u32 %v2295, 4294901760
    %v2478 = vsub.f32 %v2295, %v2477
    %v2479 = vand.u32 %v2478, 4294901760
    %2480 = vmatmul.f32.gmra.mxu0 %v2479
    %v2481 = vpop.f32.mrf.mxu0
    %v2482 = vadd.f32 %v2440, %v2481
    %v2483 = vand.u32 %v2298, 4294901760
    %v2484 = vsub.f32 %v2298, %v2483
    %v2485 = vand.u32 %v2484, 4294901760
    %2486 = vmatmul.f32.gmra.mxu0 %v2485
    %v2487 = vpop.f32.mrf.mxu0
    %v2488 = vadd.f32 %v2445, %v2487
    %v2489 = vand.u32 %v2301, 4294901760
    %v2490 = vsub.f32 %v2301, %v2489
    %v2491 = vand.u32 %v2490, 4294901760
    %2492 = vmatmul.f32.gmra.mxu0 %v2491
    %v2493 = vpop.f32.mrf.mxu0
    %v2494 = vadd.f32 %v2450, %v2493
    %v2495 = vand.u32 %v2304, 4294901760
    %v2496 = vsub.f32 %v2304, %v2495
    %v2497 = vand.u32 %v2496, 4294901760
    %2498 = vmatmul.f32.gmra.mxu0 %v2497
    %v2499 = vpop.f32.mrf.mxu0
    %v2500 = vadd.f32 %v2455, %v2499
    %2501 = vdwg.mxu0
    %2502 = vmatpush.msra.mxu0 0.0
    %2503 = vmatpush.msra.mxu0 0.0
    %2504 = vmatpush.msra.mxu0 0.0
    %2505 = vmatpush.msra.mxu0 0.0
    %2506 = vmatpush.msra.mxu0 0.0
    %2507 = vmatpush.msra.mxu0 0.0
    %2508 = vmatpush.msra.mxu0 0.0
    %2509 = vmatpush.msra.mxu0 0.0
    %2510 = vmatpush.msra.mxu0 0.0
    %2511 = vmatpush.msra.mxu0 0.0
    %2512 = vmatpush.msra.mxu0 0.0
    %2513 = vmatpush.msra.mxu0 0.0
    %v2514 = vand.u32 %v637, 4294901760
    %v2515 = vsub.f32 %v637, %v2514
    %v2516 = vand.u32 %v2515, 4294901760
    %2517 = vmatpush.msra.mxu0 %v2516
    %v2518 = vand.u32 %v636, 4294901760
    %v2519 = vsub.f32 %v636, %v2518
    %v2520 = vand.u32 %v2519, 4294901760
    %2521 = vmatpush.msra.mxu0 %v2520
    %v2522 = vand.u32 %v635, 4294901760
    %v2523 = vsub.f32 %v635, %v2522
    %v2524 = vand.u32 %v2523, 4294901760
    %2525 = vmatpush.msra.mxu0 %v2524
    %v2526 = vand.u32 %v634, 4294901760
    %v2527 = vsub.f32 %v634, %v2526
    %v2528 = vand.u32 %v2527, 4294901760
    %2529 = vmatpush.msra.mxu0 %v2528
    %v2530 = vand.u32 %v2295, 4294901760
    %2531 = vmatmul.f32.gmra.mxu0 %v2530
    %v2532 = vpop.f32.mrf.mxu0
    %v2533 = vadd.f32 %v2482, %v2532
    %v2534 = vand.u32 %v2298, 4294901760
    %2535 = vmatmul.f32.gmra.mxu0 %v2534
    %v2536 = vpop.f32.mrf.mxu0
    %v2537 = vadd.f32 %v2488, %v2536
    %v2538 = vand.u32 %v2301, 4294901760
    %2539 = vmatmul.f32.gmra.mxu0 %v2538
    %v2540 = vpop.f32.mrf.mxu0
    %v2541 = vadd.f32 %v2494, %v2540
    %v2542 = vand.u32 %v2304, 4294901760
    %2543 = vmatmul.f32.gmra.mxu0 %v2542
    %v2544 = vpop.f32.mrf.mxu0
    %v2545 = vadd.f32 %v2500, %v2544
    %2546 = vdwg.mxu0
    %2547 = vmatpush.msra.mxu0 0.0
    %2548 = vmatpush.msra.mxu0 0.0
    %2549 = vmatpush.msra.mxu0 0.0
    %2550 = vmatpush.msra.mxu0 0.0
    %2551 = vmatpush.msra.mxu0 0.0
    %2552 = vmatpush.msra.mxu0 0.0
    %2553 = vmatpush.msra.mxu0 0.0
    %2554 = vmatpush.msra.mxu0 0.0
    %2555 = vmatpush.msra.mxu0 0.0
    %2556 = vmatpush.msra.mxu0 0.0
    %2557 = vmatpush.msra.mxu0 0.0
    %2558 = vmatpush.msra.mxu0 0.0
    %v2559 = vand.u32 %v637, 4294901760
    %2560 = vmatpush.msra.mxu0 %v2559
    %v2561 = vand.u32 %v636, 4294901760
    %2562 = vmatpush.msra.mxu0 %v2561
    %v2563 = vand.u32 %v635, 4294901760
    %2564 = vmatpush.msra.mxu0 %v2563
    %v2565 = vand.u32 %v634, 4294901760
    %2566 = vmatpush.msra.mxu0 %v2565
    %v2567 = vand.u32 %v2295, 4294901760
    %2568 = vmatmul.f32.gmra.mxu0 %v2567
    %v2569 = vpop.f32.mrf.mxu0
    %v2570 = vadd.f32 %v2533, %v2569
    %v2571 = vand.u32 %v2298, 4294901760
    %2572 = vmatmul.f32.gmra.mxu0 %v2571
    %v2573 = vpop.f32.mrf.mxu0
    %v2574 = vadd.f32 %v2537, %v2573
    %v2575 = vand.u32 %v2301, 4294901760
    %2576 = vmatmul.f32.gmra.mxu0 %v2575
    %v2577 = vpop.f32.mrf.mxu0
    %v2578 = vadd.f32 %v2541, %v2577
    %v2579 = vand.u32 %v2304, 4294901760
    %2580 = vmatmul.f32.gmra.mxu0 %v2579
    %v2581 = vpop.f32.mrf.mxu0
    %v2582 = vadd.f32 %v2545, %v2581
    %2583 = vdwg.mxu0
    %v2584 = vsel %vm29, %v2570, 0.0
    %2585 = vadd.xlane.f32.xlu0 %v2584
    %v2586 = vpop.xlane.xlu0 %2585
    %v2587 = vsel %vm29, %v2574, 0.0
    %2588 = vadd.xlane.f32.xlu0 %v2587
    %v2589 = vpop.xlane.xlu0 %2588
    %v2590 = vsel %vm29, %v2578, 0.0
    %2591 = vadd.xlane.f32.xlu0 %v2590
    %v2592 = vpop.xlane.xlu0 %2591
    %v2593 = vsel %vm29, %v2582, 0.0
    %2594 = vadd.xlane.f32.xlu0 %v2593
    %v2595 = vpop.xlane.xlu0 %2594
    %v2596 = vmul.f32 %v2586, %v656
    %v2597 = vmul.f32 %v2589, %v656
    %v2598 = vmul.f32 %v2592, %v656
    %v2599 = vmul.f32 %v2595, %v656
    %v2600 = vsub.f32 %v2570, %v2596
    %v2601 = vsub.f32 %v2574, %v2597
    %v2602 = vsub.f32 %v2578, %v2598
    %v2603 = vsub.f32 %v2582, %v2599
    %v2604 = vmul.f32 %v2600, %v2600
    %v2605 = vmul.f32 %v2601, %v2601
    %v2606 = vmul.f32 %v2602, %v2602
    %v2607 = vmul.f32 %v2603, %v2603
    %v2608 = vsel %vm29, %v2604, 0.0
    %2609 = vadd.xlane.f32.xlu0 %v2608
    %v2610 = vpop.xlane.xlu0 %2609
    %v2611 = vsel %vm29, %v2605, 0.0
    %2612 = vadd.xlane.f32.xlu0 %v2611
    %v2613 = vpop.xlane.xlu0 %2612
    %v2614 = vsel %vm29, %v2606, 0.0
    %2615 = vadd.xlane.f32.xlu0 %v2614
    %v2616 = vpop.xlane.xlu0 %2615
    %v2617 = vsel %vm29, %v2607, 0.0
    %2618 = vadd.xlane.f32.xlu0 %v2617
    %v2619 = vpop.xlane.xlu0 %2618
    %v2620 = vmul.f32 %v2610, %v656
    %v2621 = vmul.f32 %v2613, %v656
    %v2622 = vmul.f32 %v2616, %v656
    %v2623 = vmul.f32 %v2619, %v656
    %v2624 = vadd.f32 %v2620, 1e-05
    %v2625 = vadd.f32 %v2621, 1e-05
    %v2626 = vadd.f32 %v2622, 1e-05
    %v2627 = vadd.f32 %v2623, 1e-05
    %v2628 = vrsqrt.pop %v2624
    %v2629 = vmul.f32 %v2628, %v2624
    %v2630 = vmul.f32 %v2629, %v2628
    %v2631 = vmul.f32 0.5, %v2630
    %v2632 = vsub.f32 1.5, %v2631
    %v2633 = vmul.f32 %v2628, %v2632
    %vm2634 = vweird.f32 %v2624
    %vm2635 = vweird.f32 %v2628
    %vm2636 = vmor %vm2634, %vm2635
    %v2637 = vsel %vm2636, %v2628, %v2633
    %v2638 = vrsqrt.pop %v2625
    %v2639 = vmul.f32 %v2638, %v2625
    %v2640 = vmul.f32 %v2639, %v2638
    %v2641 = vmul.f32 0.5, %v2640
    %v2642 = vsub.f32 1.5, %v2641
    %v2643 = vmul.f32 %v2638, %v2642
    %vm2644 = vweird.f32 %v2625
    %vm2645 = vweird.f32 %v2638
    %vm2646 = vmor %vm2644, %vm2645
    %v2647 = vsel %vm2646, %v2638, %v2643
    %v2648 = vrsqrt.pop %v2626
    %v2649 = vmul.f32 %v2648, %v2626
    %v2650 = vmul.f32 %v2649, %v2648
    %v2651 = vmul.f32 0.5, %v2650
    %v2652 = vsub.f32 1.5, %v2651
    %v2653 = vmul.f32 %v2648, %v2652
    %vm2654 = vweird.f32 %v2626
    %vm2655 = vweird.f32 %v2648
    %vm2656 = vmor %vm2654, %vm2655
    %v2657 = vsel %vm2656, %v2648, %v2653
    %v2658 = vrsqrt.pop %v2627
    %v2659 = vmul.f32 %v2658, %v2627
    %v2660 = vmul.f32 %v2659, %v2658
    %v2661 = vmul.f32 0.5, %v2660
    %v2662 = vsub.f32 1.5, %v2661
    %v2663 = vmul.f32 %v2658, %v2662
    %vm2664 = vweird.f32 %v2627
    %vm2665 = vweird.f32 %v2658
    %vm2666 = vmor %vm2664, %vm2665
    %v2667 = vsel %vm2666, %v2658, %v2663
    %v2668 = vmul.f32 %v2600, %v2637
    %v2669 = vmul.f32 %v2601, %v2647
    %v2670 = vmul.f32 %v2602, %v2657
    %v2671 = vmul.f32 %v2603, %v2667
    %v2672 = vperm.slane %v23, 3
    %v2673 = vmul.f32 %v2668, %v2672
    %v2674 = vmul.f32 %v2669, %v2672
    %v2675 = vmul.f32 %v2670, %v2672
    %v2676 = vmul.f32 %v2671, %v2672
    %v2677 = vperm.slane %v23, 4
    %v2678 = vadd.f32 %v2673, %v2677
    %v2679 = vadd.f32 %v2674, %v2677
    %v2680 = vadd.f32 %v2675, %v2677
    %v2681 = vadd.f32 %v2676, %v2677
    %v2682 = vadd.f32 %v15, %v2678
    %v2683 = vadd.f32 %v16, %v2679
    %v2684 = vadd.f32 %v17, %v2680
    %v2685 = vadd.f32 %v18, %v2681
    %v2686 = vld [vmem:[%s2 + $0xe0] sm:$0xff]
    %v2687 = vld [vmem:[%s2 + $0xe8] sm:$0xff]
    %v2688 = vld [vmem:[%s2 + $0xf0] sm:$0xff]
    %v2689 = vld [vmem:[%s2 + $0xf8] sm:$0xff]
    %v2690 = vld [vmem:[%s2 + $0x100] sm:$0xff]
    %v2691 = vld [vmem:[%s2 + $0x108] sm:$0xff]
    %v2692 = vld [vmem:[%s2 + $0x110] sm:$0xff]
    %v2693 = vld [vmem:[%s2 + $0x118] sm:$0xff]
    %v2694 = vld [vmem:[%s2 + $0x120] sm:$0xff]
    %v2695 = vld [vmem:[%s2 + $0x128] sm:$0xff]
    %v2696 = vld [vmem:[%s2 + $0x130] sm:$0xff]
    %v2697 = vld [vmem:[%s2 + $0x138] sm:$0xff]
    %v2698 = vld [vmem:[%s2 + $0x140] sm:$0xff]
    %v2699 = vld [vmem:[%s2 + $0x148] sm:$0xff]
    %v2700 = vld [vmem:[%s2 + $0x150] sm:$0xff]
    %v2701 = vld [vmem:[%s2 + $0x158] sm:$0xff]
    %v2702 = vsel %vm29, %v2682, 0.0
    %2703 = vadd.xlane.f32.xlu0 %v2702
    %v2704 = vpop.xlane.xlu0 %2703
    %v2705 = vsel %vm29, %v2683, 0.0
    %2706 = vadd.xlane.f32.xlu0 %v2705
    %v2707 = vpop.xlane.xlu0 %2706
    %v2708 = vsel %vm29, %v2684, 0.0
    %2709 = vadd.xlane.f32.xlu0 %v2708
    %v2710 = vpop.xlane.xlu0 %2709
    %v2711 = vsel %vm29, %v2685, 0.0
    %2712 = vadd.xlane.f32.xlu0 %v2711
    %v2713 = vpop.xlane.xlu0 %2712
    %v2714 = vmul.f32 %v2704, %v656
    %v2715 = vmul.f32 %v2707, %v656
    %v2716 = vmul.f32 %v2710, %v656
    %v2717 = vmul.f32 %v2713, %v656
    %v2718 = vsub.f32 %v2682, %v2714
    %v2719 = vsub.f32 %v2683, %v2715
    %v2720 = vsub.f32 %v2684, %v2716
    %v2721 = vsub.f32 %v2685, %v2717
    %v2722 = vmul.f32 %v2718, %v2718
    %v2723 = vmul.f32 %v2719, %v2719
    %v2724 = vmul.f32 %v2720, %v2720
    %v2725 = vmul.f32 %v2721, %v2721
    %v2726 = vsel %vm29, %v2722, 0.0
    %2727 = vadd.xlane.f32.xlu0 %v2726
    %v2728 = vpop.xlane.xlu0 %2727
    %v2729 = vsel %vm29, %v2723, 0.0
    %2730 = vadd.xlane.f32.xlu0 %v2729
    %v2731 = vpop.xlane.xlu0 %2730
    %v2732 = vsel %vm29, %v2724, 0.0
    %2733 = vadd.xlane.f32.xlu0 %v2732
    %v2734 = vpop.xlane.xlu0 %2733
    %v2735 = vsel %vm29, %v2725, 0.0
    %2736 = vadd.xlane.f32.xlu0 %v2735
    %v2737 = vpop.xlane.xlu0 %2736
    %v2738 = vmul.f32 %v2728, %v656
    %v2739 = vmul.f32 %v2731, %v656
    %v2740 = vmul.f32 %v2734, %v656
    %v2741 = vmul.f32 %v2737, %v656
    %v2742 = vadd.f32 %v2738, 1e-05
    %v2743 = vadd.f32 %v2739, 1e-05
    %v2744 = vadd.f32 %v2740, 1e-05
    %v2745 = vadd.f32 %v2741, 1e-05
    %v2746 = vrsqrt.pop %v2742
    %v2747 = vmul.f32 %v2746, %v2742
    %v2748 = vmul.f32 %v2747, %v2746
    %v2749 = vmul.f32 0.5, %v2748
    %v2750 = vsub.f32 1.5, %v2749
    %v2751 = vmul.f32 %v2746, %v2750
    %vm2752 = vweird.f32 %v2742
    %vm2753 = vweird.f32 %v2746
    %vm2754 = vmor %vm2752, %vm2753
    %v2755 = vsel %vm2754, %v2746, %v2751
    %v2756 = vrsqrt.pop %v2743
    %v2757 = vmul.f32 %v2756, %v2743
    %v2758 = vmul.f32 %v2757, %v2756
    %v2759 = vmul.f32 0.5, %v2758
    %v2760 = vsub.f32 1.5, %v2759
    %v2761 = vmul.f32 %v2756, %v2760
    %vm2762 = vweird.f32 %v2743
    %vm2763 = vweird.f32 %v2756
    %vm2764 = vmor %vm2762, %vm2763
    %v2765 = vsel %vm2764, %v2756, %v2761
    %v2766 = vrsqrt.pop %v2744
    %v2767 = vmul.f32 %v2766, %v2744
    %v2768 = vmul.f32 %v2767, %v2766
    %v2769 = vmul.f32 0.5, %v2768
    %v2770 = vsub.f32 1.5, %v2769
    %v2771 = vmul.f32 %v2766, %v2770
    %vm2772 = vweird.f32 %v2744
    %vm2773 = vweird.f32 %v2766
    %vm2774 = vmor %vm2772, %vm2773
    %v2775 = vsel %vm2774, %v2766, %v2771
    %v2776 = vrsqrt.pop %v2745
    %v2777 = vmul.f32 %v2776, %v2745
    %v2778 = vmul.f32 %v2777, %v2776
    %v2779 = vmul.f32 0.5, %v2778
    %v2780 = vsub.f32 1.5, %v2779
    %v2781 = vmul.f32 %v2776, %v2780
    %vm2782 = vweird.f32 %v2745
    %vm2783 = vweird.f32 %v2776
    %vm2784 = vmor %vm2782, %vm2783
    %v2785 = vsel %vm2784, %v2776, %v2781
    %v2786 = vmul.f32 %v2718, %v2755
    %v2787 = vmul.f32 %v2719, %v2765
    %v2788 = vmul.f32 %v2720, %v2775
    %v2789 = vmul.f32 %v2721, %v2785
    %v2790 = vperm.slane %v23, 5
    %v2791 = vmul.f32 %v2786, %v2790
    %v2792 = vmul.f32 %v2787, %v2790
    %v2793 = vmul.f32 %v2788, %v2790
    %v2794 = vmul.f32 %v2789, %v2790
    %v2795 = vperm.slane %v23, 6
    %v2796 = vadd.f32 %v2791, %v2795
    %v2797 = vadd.f32 %v2792, %v2795
    %v2798 = vadd.f32 %v2793, %v2795
    %v2799 = vadd.f32 %v2794, %v2795
    %v2800 = vld [vmem:[%s2 + $0x1d0] sm:$0xff]
    %v2801 = vld [vmem:[%s2 + $0x1d8] sm:$0xff]
    %v2802 = vld [vmem:[%s2 + $0x1e0] sm:$0xff]
    %v2803 = vld [vmem:[%s2 + $0x1e8] sm:$0xff]
    %v2805 = vsel %vm29, %v2796, 0
    %v2808 = vsel %vm29, %v2797, 0
    %v2811 = vsel %vm29, %v2798, 0
    %v2814 = vsel %vm29, %v2799, 0
    %2816 = vmatpush.msra.mxu0 0.0
    %2817 = vmatpush.msra.mxu0 0.0
    %2818 = vmatpush.msra.mxu0 0.0
    %2819 = vmatpush.msra.mxu0 0.0
    %2820 = vmatpush.msra.mxu0 0.0
    %2821 = vmatpush.msra.mxu0 0.0
    %2822 = vmatpush.msra.mxu0 0.0
    %2823 = vmatpush.msra.mxu0 0.0
    %2824 = vmatpush.msra.mxu0 0.0
    %2825 = vmatpush.msra.mxu0 0.0
    %2826 = vmatpush.msra.mxu0 0.0
    %2827 = vmatpush.msra.mxu0 0.0
    %v2828 = vand.u32 %v2689, 4294901760
    %2829 = vmatpush.msra.mxu0 %v2828
    %v2830 = vand.u32 %v2688, 4294901760
    %2831 = vmatpush.msra.mxu0 %v2830
    %v2832 = vand.u32 %v2687, 4294901760
    %2833 = vmatpush.msra.mxu0 %v2832
    %v2834 = vand.u32 %v2686, 4294901760
    %2835 = vmatpush.msra.mxu0 %v2834
    %v2836 = vand.u32 %v2805, 4294901760
    %v2837 = vsub.f32 %v2805, %v2836
    %v2838 = vand.u32 %v2837, 4294901760
    %v2839 = vsub.f32 %v2837, %v2838
    %v2840 = vand.u32 %v2839, 4294901760
    %2841 = vmatmul.f32.gmra.mxu0 %v2840
    %v2842 = vpop.f32.mrf.mxu0
    %v2843 = vadd.f32 %v2800, %v2842
    %v2844 = vand.u32 %v2808, 4294901760
    %v2845 = vsub.f32 %v2808, %v2844
    %v2846 = vand.u32 %v2845, 4294901760
    %v2847 = vsub.f32 %v2845, %v2846
    %v2848 = vand.u32 %v2847, 4294901760
    %2849 = vmatmul.f32.gmra.mxu0 %v2848
    %v2850 = vpop.f32.mrf.mxu0
    %v2851 = vadd.f32 %v2801, %v2850
    %v2852 = vand.u32 %v2811, 4294901760
    %v2853 = vsub.f32 %v2811, %v2852
    %v2854 = vand.u32 %v2853, 4294901760
    %v2855 = vsub.f32 %v2853, %v2854
    %v2856 = vand.u32 %v2855, 4294901760
    %2857 = vmatmul.f32.gmra.mxu0 %v2856
    %v2858 = vpop.f32.mrf.mxu0
    %v2859 = vadd.f32 %v2802, %v2858
    %v2860 = vand.u32 %v2814, 4294901760
    %v2861 = vsub.f32 %v2814, %v2860
    %v2862 = vand.u32 %v2861, 4294901760
    %v2863 = vsub.f32 %v2861, %v2862
    %v2864 = vand.u32 %v2863, 4294901760
    %2865 = vmatmul.f32.gmra.mxu0 %v2864
    %v2866 = vpop.f32.mrf.mxu0
    %v2867 = vadd.f32 %v2803, %v2866
    %2868 = vdwg.mxu0
    %2869 = vmatpush.msra.mxu0 0.0
    %2870 = vmatpush.msra.mxu0 0.0
    %2871 = vmatpush.msra.mxu0 0.0
    %2872 = vmatpush.msra.mxu0 0.0
    %2873 = vmatpush.msra.mxu0 0.0
    %2874 = vmatpush.msra.mxu0 0.0
    %2875 = vmatpush.msra.mxu0 0.0
    %2876 = vmatpush.msra.mxu0 0.0
    %2877 = vmatpush.msra.mxu0 0.0
    %2878 = vmatpush.msra.mxu0 0.0
    %2879 = vmatpush.msra.mxu0 0.0
    %2880 = vmatpush.msra.mxu0 0.0
    %v2881 = vand.u32 %v2689, 4294901760
    %v2882 = vsub.f32 %v2689, %v2881
    %v2883 = vand.u32 %v2882, 4294901760
    %v2884 = vsub.f32 %v2882, %v2883
    %v2885 = vand.u32 %v2884, 4294901760
    %2886 = vmatpush.msra.mxu0 %v2885
    %v2887 = vand.u32 %v2688, 4294901760
    %v2888 = vsub.f32 %v2688, %v2887
    %v2889 = vand.u32 %v2888, 4294901760
    %v2890 = vsub.f32 %v2888, %v2889
    %v2891 = vand.u32 %v2890, 4294901760
    %2892 = vmatpush.msra.mxu0 %v2891
    %v2893 = vand.u32 %v2687, 4294901760
    %v2894 = vsub.f32 %v2687, %v2893
    %v2895 = vand.u32 %v2894, 4294901760
    %v2896 = vsub.f32 %v2894, %v2895
    %v2897 = vand.u32 %v2896, 4294901760
    %2898 = vmatpush.msra.mxu0 %v2897
    %v2899 = vand.u32 %v2686, 4294901760
    %v2900 = vsub.f32 %v2686, %v2899
    %v2901 = vand.u32 %v2900, 4294901760
    %v2902 = vsub.f32 %v2900, %v2901
    %v2903 = vand.u32 %v2902, 4294901760
    %2904 = vmatpush.msra.mxu0 %v2903
    %v2905 = vand.u32 %v2805, 4294901760
    %2906 = vmatmul.f32.gmra.mxu0 %v2905
    %v2907 = vpop.f32.mrf.mxu0
    %v2908 = vadd.f32 %v2843, %v2907
    %v2909 = vand.u32 %v2808, 4294901760
    %2910 = vmatmul.f32.gmra.mxu0 %v2909
    %v2911 = vpop.f32.mrf.mxu0
    %v2912 = vadd.f32 %v2851, %v2911
    %v2913 = vand.u32 %v2811, 4294901760
    %2914 = vmatmul.f32.gmra.mxu0 %v2913
    %v2915 = vpop.f32.mrf.mxu0
    %v2916 = vadd.f32 %v2859, %v2915
    %v2917 = vand.u32 %v2814, 4294901760
    %2918 = vmatmul.f32.gmra.mxu0 %v2917
    %v2919 = vpop.f32.mrf.mxu0
    %v2920 = vadd.f32 %v2867, %v2919
    %2921 = vdwg.mxu0
    %2922 = vmatpush.msra.mxu0 0.0
    %2923 = vmatpush.msra.mxu0 0.0
    %2924 = vmatpush.msra.mxu0 0.0
    %2925 = vmatpush.msra.mxu0 0.0
    %2926 = vmatpush.msra.mxu0 0.0
    %2927 = vmatpush.msra.mxu0 0.0
    %2928 = vmatpush.msra.mxu0 0.0
    %2929 = vmatpush.msra.mxu0 0.0
    %2930 = vmatpush.msra.mxu0 0.0
    %2931 = vmatpush.msra.mxu0 0.0
    %2932 = vmatpush.msra.mxu0 0.0
    %2933 = vmatpush.msra.mxu0 0.0
    %v2934 = vand.u32 %v2689, 4294901760
    %v2935 = vsub.f32 %v2689, %v2934
    %2936 = vmatpush.msra.mxu0 %v2935
    %v2937 = vand.u32 %v2688, 4294901760
    %v2938 = vsub.f32 %v2688, %v2937
    %2939 = vmatpush.msra.mxu0 %v2938
    %v2940 = vand.u32 %v2687, 4294901760
    %v2941 = vsub.f32 %v2687, %v2940
    %2942 = vmatpush.msra.mxu0 %v2941
    %v2943 = vand.u32 %v2686, 4294901760
    %v2944 = vsub.f32 %v2686, %v2943
    %2945 = vmatpush.msra.mxu0 %v2944
    %v2946 = vand.u32 %v2805, 4294901760
    %v2947 = vsub.f32 %v2805, %v2946
    %2948 = vmatmul.f32.gmra.mxu0 %v2947
    %v2949 = vpop.f32.mrf.mxu0
    %v2950 = vadd.f32 %v2908, %v2949
    %v2951 = vand.u32 %v2808, 4294901760
    %v2952 = vsub.f32 %v2808, %v2951
    %2953 = vmatmul.f32.gmra.mxu0 %v2952
    %v2954 = vpop.f32.mrf.mxu0
    %v2955 = vadd.f32 %v2912, %v2954
    %v2956 = vand.u32 %v2811, 4294901760
    %v2957 = vsub.f32 %v2811, %v2956
    %2958 = vmatmul.f32.gmra.mxu0 %v2957
    %v2959 = vpop.f32.mrf.mxu0
    %v2960 = vadd.f32 %v2916, %v2959
    %v2961 = vand.u32 %v2814, 4294901760
    %v2962 = vsub.f32 %v2814, %v2961
    %2963 = vmatmul.f32.gmra.mxu0 %v2962
    %v2964 = vpop.f32.mrf.mxu0
    %v2965 = vadd.f32 %v2920, %v2964
    %2966 = vdwg.mxu0
    %2967 = vmatpush.msra.mxu0 0.0
    %2968 = vmatpush.msra.mxu0 0.0
    %2969 = vmatpush.msra.mxu0 0.0
    %2970 = vmatpush.msra.mxu0 0.0
    %2971 = vmatpush.msra.mxu0 0.0
    %2972 = vmatpush.msra.mxu0 0.0
    %2973 = vmatpush.msra.mxu0 0.0
    %2974 = vmatpush.msra.mxu0 0.0
    %2975 = vmatpush.msra.mxu0 0.0
    %2976 = vmatpush.msra.mxu0 0.0
    %2977 = vmatpush.msra.mxu0 0.0
    %2978 = vmatpush.msra.mxu0 0.0
    %v2979 = vand.u32 %v2689, 4294901760
    %2980 = vmatpush.msra.mxu0 %v2979
    %v2981 = vand.u32 %v2688, 4294901760
    %2982 = vmatpush.msra.mxu0 %v2981
    %v2983 = vand.u32 %v2687, 4294901760
    %2984 = vmatpush.msra.mxu0 %v2983
    %v2985 = vand.u32 %v2686, 4294901760
    %2986 = vmatpush.msra.mxu0 %v2985
    %v2987 = vand.u32 %v2805, 4294901760
    %v2988 = vsub.f32 %v2805, %v2987
    %v2989 = vand.u32 %v2988, 4294901760
    %2990 = vmatmul.f32.gmra.mxu0 %v2989
    %v2991 = vpop.f32.mrf.mxu0
    %v2992 = vadd.f32 %v2950, %v2991
    %v2993 = vand.u32 %v2808, 4294901760
    %v2994 = vsub.f32 %v2808, %v2993
    %v2995 = vand.u32 %v2994, 4294901760
    %2996 = vmatmul.f32.gmra.mxu0 %v2995
    %v2997 = vpop.f32.mrf.mxu0
    %v2998 = vadd.f32 %v2955, %v2997
    %v2999 = vand.u32 %v2811, 4294901760
    %v3000 = vsub.f32 %v2811, %v2999
    %v3001 = vand.u32 %v3000, 4294901760
    %3002 = vmatmul.f32.gmra.mxu0 %v3001
    %v3003 = vpop.f32.mrf.mxu0
    %v3004 = vadd.f32 %v2960, %v3003
    %v3005 = vand.u32 %v2814, 4294901760
    %v3006 = vsub.f32 %v2814, %v3005
    %v3007 = vand.u32 %v3006, 4294901760
    %3008 = vmatmul.f32.gmra.mxu0 %v3007
    %v3009 = vpop.f32.mrf.mxu0
    %v3010 = vadd.f32 %v2965, %v3009
    %3011 = vdwg.mxu0
    %3012 = vmatpush.msra.mxu0 0.0
    %3013 = vmatpush.msra.mxu0 0.0
    %3014 = vmatpush.msra.mxu0 0.0
    %3015 = vmatpush.msra.mxu0 0.0
    %3016 = vmatpush.msra.mxu0 0.0
    %3017 = vmatpush.msra.mxu0 0.0
    %3018 = vmatpush.msra.mxu0 0.0
    %3019 = vmatpush.msra.mxu0 0.0
    %3020 = vmatpush.msra.mxu0 0.0
    %3021 = vmatpush.msra.mxu0 0.0
    %3022 = vmatpush.msra.mxu0 0.0
    %3023 = vmatpush.msra.mxu0 0.0
    %v3024 = vand.u32 %v2689, 4294901760
    %v3025 = vsub.f32 %v2689, %v3024
    %v3026 = vand.u32 %v3025, 4294901760
    %3027 = vmatpush.msra.mxu0 %v3026
    %v3028 = vand.u32 %v2688, 4294901760
    %v3029 = vsub.f32 %v2688, %v3028
    %v3030 = vand.u32 %v3029, 4294901760
    %3031 = vmatpush.msra.mxu0 %v3030
    %v3032 = vand.u32 %v2687, 4294901760
    %v3033 = vsub.f32 %v2687, %v3032
    %v3034 = vand.u32 %v3033, 4294901760
    %3035 = vmatpush.msra.mxu0 %v3034
    %v3036 = vand.u32 %v2686, 4294901760
    %v3037 = vsub.f32 %v2686, %v3036
    %v3038 = vand.u32 %v3037, 4294901760
    %3039 = vmatpush.msra.mxu0 %v3038
    %v3040 = vand.u32 %v2805, 4294901760
    %3041 = vmatmul.f32.gmra.mxu0 %v3040
    %v3042 = vpop.f32.mrf.mxu0
    %v3043 = vadd.f32 %v2992, %v3042
    %v3044 = vand.u32 %v2808, 4294901760
    %3045 = vmatmul.f32.gmra.mxu0 %v3044
    %v3046 = vpop.f32.mrf.mxu0
    %v3047 = vadd.f32 %v2998, %v3046
    %v3048 = vand.u32 %v2811, 4294901760
    %3049 = vmatmul.f32.gmra.mxu0 %v3048
    %v3050 = vpop.f32.mrf.mxu0
    %v3051 = vadd.f32 %v3004, %v3050
    %v3052 = vand.u32 %v2814, 4294901760
    %3053 = vmatmul.f32.gmra.mxu0 %v3052
    %v3054 = vpop.f32.mrf.mxu0
    %v3055 = vadd.f32 %v3010, %v3054
    %3056 = vdwg.mxu0
    %3057 = vmatpush.msra.mxu0 0.0
    %3058 = vmatpush.msra.mxu0 0.0
    %3059 = vmatpush.msra.mxu0 0.0
    %3060 = vmatpush.msra.mxu0 0.0
    %3061 = vmatpush.msra.mxu0 0.0
    %3062 = vmatpush.msra.mxu0 0.0
    %3063 = vmatpush.msra.mxu0 0.0
    %3064 = vmatpush.msra.mxu0 0.0
    %3065 = vmatpush.msra.mxu0 0.0
    %3066 = vmatpush.msra.mxu0 0.0
    %3067 = vmatpush.msra.mxu0 0.0
    %3068 = vmatpush.msra.mxu0 0.0
    %v3069 = vand.u32 %v2689, 4294901760
    %3070 = vmatpush.msra.mxu0 %v3069
    %v3071 = vand.u32 %v2688, 4294901760
    %3072 = vmatpush.msra.mxu0 %v3071
    %v3073 = vand.u32 %v2687, 4294901760
    %3074 = vmatpush.msra.mxu0 %v3073
    %v3075 = vand.u32 %v2686, 4294901760
    %3076 = vmatpush.msra.mxu0 %v3075
    %v3077 = vand.u32 %v2805, 4294901760
    %3078 = vmatmul.f32.gmra.mxu0 %v3077
    %v3079 = vpop.f32.mrf.mxu0
    %v3080 = vadd.f32 %v3043, %v3079
    %v3081 = vand.u32 %v2808, 4294901760
    %3082 = vmatmul.f32.gmra.mxu0 %v3081
    %v3083 = vpop.f32.mrf.mxu0
    %v3084 = vadd.f32 %v3047, %v3083
    %v3085 = vand.u32 %v2811, 4294901760
    %3086 = vmatmul.f32.gmra.mxu0 %v3085
    %v3087 = vpop.f32.mrf.mxu0
    %v3088 = vadd.f32 %v3051, %v3087
    %v3089 = vand.u32 %v2814, 4294901760
    %3090 = vmatmul.f32.gmra.mxu0 %v3089
    %v3091 = vpop.f32.mrf.mxu0
    %v3092 = vadd.f32 %v3055, %v3091
    %3093 = vdwg.mxu0
    %v3094 = vld [vmem:[%s2 + $0x1f0] sm:$0xff]
    %v3095 = vld [vmem:[%s2 + $0x1f8] sm:$0xff]
    %v3097 = vsel %vm29, %v620, 0
    %v3100 = vsel %vm29, %v621, 0
    %3102 = vmatpush.msra.mxu0 0.0
    %3103 = vmatpush.msra.mxu0 0.0
    %3104 = vmatpush.msra.mxu0 0.0
    %3105 = vmatpush.msra.mxu0 0.0
    %3106 = vmatpush.msra.mxu0 0.0
    %3107 = vmatpush.msra.mxu0 0.0
    %3108 = vmatpush.msra.mxu0 0.0
    %3109 = vmatpush.msra.mxu0 0.0
    %3110 = vmatpush.msra.mxu0 0.0
    %3111 = vmatpush.msra.mxu0 0.0
    %3112 = vmatpush.msra.mxu0 0.0
    %3113 = vmatpush.msra.mxu0 0.0
    %v3114 = vand.u32 %v2693, 4294901760
    %3115 = vmatpush.msra.mxu0 %v3114
    %v3116 = vand.u32 %v2692, 4294901760
    %3117 = vmatpush.msra.mxu0 %v3116
    %v3118 = vand.u32 %v2691, 4294901760
    %3119 = vmatpush.msra.mxu0 %v3118
    %v3120 = vand.u32 %v2690, 4294901760
    %3121 = vmatpush.msra.mxu0 %v3120
    %v3122 = vand.u32 %v3097, 4294901760
    %v3123 = vsub.f32 %v3097, %v3122
    %v3124 = vand.u32 %v3123, 4294901760
    %v3125 = vsub.f32 %v3123, %v3124
    %v3126 = vand.u32 %v3125, 4294901760
    %3127 = vmatmul.f32.gmra.mxu0 %v3126
    %v3128 = vpop.f32.mrf.mxu0
    %v3129 = vadd.f32 %v3094, %v3128
    %v3130 = vand.u32 %v3100, 4294901760
    %v3131 = vsub.f32 %v3100, %v3130
    %v3132 = vand.u32 %v3131, 4294901760
    %v3133 = vsub.f32 %v3131, %v3132
    %v3134 = vand.u32 %v3133, 4294901760
    %3135 = vmatmul.f32.gmra.mxu0 %v3134
    %v3136 = vpop.f32.mrf.mxu0
    %v3137 = vadd.f32 %v3095, %v3136
    %3138 = vdwg.mxu0
    %3139 = vmatpush.msra.mxu0 0.0
    %3140 = vmatpush.msra.mxu0 0.0
    %3141 = vmatpush.msra.mxu0 0.0
    %3142 = vmatpush.msra.mxu0 0.0
    %3143 = vmatpush.msra.mxu0 0.0
    %3144 = vmatpush.msra.mxu0 0.0
    %3145 = vmatpush.msra.mxu0 0.0
    %3146 = vmatpush.msra.mxu0 0.0
    %3147 = vmatpush.msra.mxu0 0.0
    %3148 = vmatpush.msra.mxu0 0.0
    %3149 = vmatpush.msra.mxu0 0.0
    %3150 = vmatpush.msra.mxu0 0.0
    %v3151 = vand.u32 %v2693, 4294901760
    %v3152 = vsub.f32 %v2693, %v3151
    %v3153 = vand.u32 %v3152, 4294901760
    %v3154 = vsub.f32 %v3152, %v3153
    %v3155 = vand.u32 %v3154, 4294901760
    %3156 = vmatpush.msra.mxu0 %v3155
    %v3157 = vand.u32 %v2692, 4294901760
    %v3158 = vsub.f32 %v2692, %v3157
    %v3159 = vand.u32 %v3158, 4294901760
    %v3160 = vsub.f32 %v3158, %v3159
    %v3161 = vand.u32 %v3160, 4294901760
    %3162 = vmatpush.msra.mxu0 %v3161
    %v3163 = vand.u32 %v2691, 4294901760
    %v3164 = vsub.f32 %v2691, %v3163
    %v3165 = vand.u32 %v3164, 4294901760
    %v3166 = vsub.f32 %v3164, %v3165
    %v3167 = vand.u32 %v3166, 4294901760
    %3168 = vmatpush.msra.mxu0 %v3167
    %v3169 = vand.u32 %v2690, 4294901760
    %v3170 = vsub.f32 %v2690, %v3169
    %v3171 = vand.u32 %v3170, 4294901760
    %v3172 = vsub.f32 %v3170, %v3171
    %v3173 = vand.u32 %v3172, 4294901760
    %3174 = vmatpush.msra.mxu0 %v3173
    %v3175 = vand.u32 %v3097, 4294901760
    %3176 = vmatmul.f32.gmra.mxu0 %v3175
    %v3177 = vpop.f32.mrf.mxu0
    %v3178 = vadd.f32 %v3129, %v3177
    %v3179 = vand.u32 %v3100, 4294901760
    %3180 = vmatmul.f32.gmra.mxu0 %v3179
    %v3181 = vpop.f32.mrf.mxu0
    %v3182 = vadd.f32 %v3137, %v3181
    %3183 = vdwg.mxu0
    %3184 = vmatpush.msra.mxu0 0.0
    %3185 = vmatpush.msra.mxu0 0.0
    %3186 = vmatpush.msra.mxu0 0.0
    %3187 = vmatpush.msra.mxu0 0.0
    %3188 = vmatpush.msra.mxu0 0.0
    %3189 = vmatpush.msra.mxu0 0.0
    %3190 = vmatpush.msra.mxu0 0.0
    %3191 = vmatpush.msra.mxu0 0.0
    %3192 = vmatpush.msra.mxu0 0.0
    %3193 = vmatpush.msra.mxu0 0.0
    %3194 = vmatpush.msra.mxu0 0.0
    %3195 = vmatpush.msra.mxu0 0.0
    %v3196 = vand.u32 %v2693, 4294901760
    %v3197 = vsub.f32 %v2693, %v3196
    %3198 = vmatpush.msra.mxu0 %v3197
    %v3199 = vand.u32 %v2692, 4294901760
    %v3200 = vsub.f32 %v2692, %v3199
    %3201 = vmatpush.msra.mxu0 %v3200
    %v3202 = vand.u32 %v2691, 4294901760
    %v3203 = vsub.f32 %v2691, %v3202
    %3204 = vmatpush.msra.mxu0 %v3203
    %v3205 = vand.u32 %v2690, 4294901760
    %v3206 = vsub.f32 %v2690, %v3205
    %3207 = vmatpush.msra.mxu0 %v3206
    %v3208 = vand.u32 %v3097, 4294901760
    %v3209 = vsub.f32 %v3097, %v3208
    %3210 = vmatmul.f32.gmra.mxu0 %v3209
    %v3211 = vpop.f32.mrf.mxu0
    %v3212 = vadd.f32 %v3178, %v3211
    %v3213 = vand.u32 %v3100, 4294901760
    %v3214 = vsub.f32 %v3100, %v3213
    %3215 = vmatmul.f32.gmra.mxu0 %v3214
    %v3216 = vpop.f32.mrf.mxu0
    %v3217 = vadd.f32 %v3182, %v3216
    %3218 = vdwg.mxu0
    %3219 = vmatpush.msra.mxu0 0.0
    %3220 = vmatpush.msra.mxu0 0.0
    %3221 = vmatpush.msra.mxu0 0.0
    %3222 = vmatpush.msra.mxu0 0.0
    %3223 = vmatpush.msra.mxu0 0.0
    %3224 = vmatpush.msra.mxu0 0.0
    %3225 = vmatpush.msra.mxu0 0.0
    %3226 = vmatpush.msra.mxu0 0.0
    %3227 = vmatpush.msra.mxu0 0.0
    %3228 = vmatpush.msra.mxu0 0.0
    %3229 = vmatpush.msra.mxu0 0.0
    %3230 = vmatpush.msra.mxu0 0.0
    %v3231 = vand.u32 %v2693, 4294901760
    %3232 = vmatpush.msra.mxu0 %v3231
    %v3233 = vand.u32 %v2692, 4294901760
    %3234 = vmatpush.msra.mxu0 %v3233
    %v3235 = vand.u32 %v2691, 4294901760
    %3236 = vmatpush.msra.mxu0 %v3235
    %v3237 = vand.u32 %v2690, 4294901760
    %3238 = vmatpush.msra.mxu0 %v3237
    %v3239 = vand.u32 %v3097, 4294901760
    %v3240 = vsub.f32 %v3097, %v3239
    %v3241 = vand.u32 %v3240, 4294901760
    %3242 = vmatmul.f32.gmra.mxu0 %v3241
    %v3243 = vpop.f32.mrf.mxu0
    %v3244 = vadd.f32 %v3212, %v3243
    %v3245 = vand.u32 %v3100, 4294901760
    %v3246 = vsub.f32 %v3100, %v3245
    %v3247 = vand.u32 %v3246, 4294901760
    %3248 = vmatmul.f32.gmra.mxu0 %v3247
    %v3249 = vpop.f32.mrf.mxu0
    %v3250 = vadd.f32 %v3217, %v3249
    %3251 = vdwg.mxu0
    %3252 = vmatpush.msra.mxu0 0.0
    %3253 = vmatpush.msra.mxu0 0.0
    %3254 = vmatpush.msra.mxu0 0.0
    %3255 = vmatpush.msra.mxu0 0.0
    %3256 = vmatpush.msra.mxu0 0.0
    %3257 = vmatpush.msra.mxu0 0.0
    %3258 = vmatpush.msra.mxu0 0.0
    %3259 = vmatpush.msra.mxu0 0.0
    %3260 = vmatpush.msra.mxu0 0.0
    %3261 = vmatpush.msra.mxu0 0.0
    %3262 = vmatpush.msra.mxu0 0.0
    %3263 = vmatpush.msra.mxu0 0.0
    %v3264 = vand.u32 %v2693, 4294901760
    %v3265 = vsub.f32 %v2693, %v3264
    %v3266 = vand.u32 %v3265, 4294901760
    %3267 = vmatpush.msra.mxu0 %v3266
    %v3268 = vand.u32 %v2692, 4294901760
    %v3269 = vsub.f32 %v2692, %v3268
    %v3270 = vand.u32 %v3269, 4294901760
    %3271 = vmatpush.msra.mxu0 %v3270
    %v3272 = vand.u32 %v2691, 4294901760
    %v3273 = vsub.f32 %v2691, %v3272
    %v3274 = vand.u32 %v3273, 4294901760
    %3275 = vmatpush.msra.mxu0 %v3274
    %v3276 = vand.u32 %v2690, 4294901760
    %v3277 = vsub.f32 %v2690, %v3276
    %v3278 = vand.u32 %v3277, 4294901760
    %3279 = vmatpush.msra.mxu0 %v3278
    %v3280 = vand.u32 %v3097, 4294901760
    %3281 = vmatmul.f32.gmra.mxu0 %v3280
    %v3282 = vpop.f32.mrf.mxu0
    %v3283 = vadd.f32 %v3244, %v3282
    %v3284 = vand.u32 %v3100, 4294901760
    %3285 = vmatmul.f32.gmra.mxu0 %v3284
    %v3286 = vpop.f32.mrf.mxu0
    %v3287 = vadd.f32 %v3250, %v3286
    %3288 = vdwg.mxu0
    %3289 = vmatpush.msra.mxu0 0.0
    %3290 = vmatpush.msra.mxu0 0.0
    %3291 = vmatpush.msra.mxu0 0.0
    %3292 = vmatpush.msra.mxu0 0.0
    %3293 = vmatpush.msra.mxu0 0.0
    %3294 = vmatpush.msra.mxu0 0.0
    %3295 = vmatpush.msra.mxu0 0.0
    %3296 = vmatpush.msra.mxu0 0.0
    %3297 = vmatpush.msra.mxu0 0.0
    %3298 = vmatpush.msra.mxu0 0.0
    %3299 = vmatpush.msra.mxu0 0.0
    %3300 = vmatpush.msra.mxu0 0.0
    %v3301 = vand.u32 %v2693, 4294901760
    %3302 = vmatpush.msra.mxu0 %v3301
    %v3303 = vand.u32 %v2692, 4294901760
    %3304 = vmatpush.msra.mxu0 %v3303
    %v3305 = vand.u32 %v2691, 4294901760
    %3306 = vmatpush.msra.mxu0 %v3305
    %v3307 = vand.u32 %v2690, 4294901760
    %3308 = vmatpush.msra.mxu0 %v3307
    %v3309 = vand.u32 %v3097, 4294901760
    %3310 = vmatmul.f32.gmra.mxu0 %v3309
    %v3311 = vpop.f32.mrf.mxu0
    %v3312 = vadd.f32 %v3283, %v3311
    %v3313 = vand.u32 %v3100, 4294901760
    %3314 = vmatmul.f32.gmra.mxu0 %v3313
    %v3315 = vpop.f32.mrf.mxu0
    %v3316 = vadd.f32 %v3287, %v3315
    %3317 = vdwg.mxu0
    %v3318 = vld [vmem:[%s2 + $0x200] sm:$0xff]
    %v3319 = vld [vmem:[%s2 + $0x208] sm:$0xff]
    %3320 = vmatpush.msra.mxu0 0.0
    %3321 = vmatpush.msra.mxu0 0.0
    %3322 = vmatpush.msra.mxu0 0.0
    %3323 = vmatpush.msra.mxu0 0.0
    %3324 = vmatpush.msra.mxu0 0.0
    %3325 = vmatpush.msra.mxu0 0.0
    %3326 = vmatpush.msra.mxu0 0.0
    %3327 = vmatpush.msra.mxu0 0.0
    %3328 = vmatpush.msra.mxu0 0.0
    %3329 = vmatpush.msra.mxu0 0.0
    %3330 = vmatpush.msra.mxu0 0.0
    %3331 = vmatpush.msra.mxu0 0.0
    %v3332 = vand.u32 %v2697, 4294901760
    %3333 = vmatpush.msra.mxu0 %v3332
    %v3334 = vand.u32 %v2696, 4294901760
    %3335 = vmatpush.msra.mxu0 %v3334
    %v3336 = vand.u32 %v2695, 4294901760
    %3337 = vmatpush.msra.mxu0 %v3336
    %v3338 = vand.u32 %v2694, 4294901760
    %3339 = vmatpush.msra.mxu0 %v3338
    %v3340 = vand.u32 %v3097, 4294901760
    %v3341 = vsub.f32 %v3097, %v3340
    %v3342 = vand.u32 %v3341, 4294901760
    %v3343 = vsub.f32 %v3341, %v3342
    %v3344 = vand.u32 %v3343, 4294901760
    %3345 = vmatmul.f32.gmra.mxu0 %v3344
    %v3346 = vpop.f32.mrf.mxu0
    %v3347 = vadd.f32 %v3318, %v3346
    %v3348 = vand.u32 %v3100, 4294901760
    %v3349 = vsub.f32 %v3100, %v3348
    %v3350 = vand.u32 %v3349, 4294901760
    %v3351 = vsub.f32 %v3349, %v3350
    %v3352 = vand.u32 %v3351, 4294901760
    %3353 = vmatmul.f32.gmra.mxu0 %v3352
    %v3354 = vpop.f32.mrf.mxu0
    %v3355 = vadd.f32 %v3319, %v3354
    %3356 = vdwg.mxu0
    %3357 = vmatpush.msra.mxu0 0.0
    %3358 = vmatpush.msra.mxu0 0.0
    %3359 = vmatpush.msra.mxu0 0.0
    %3360 = vmatpush.msra.mxu0 0.0
    %3361 = vmatpush.msra.mxu0 0.0
    %3362 = vmatpush.msra.mxu0 0.0
    %3363 = vmatpush.msra.mxu0 0.0
    %3364 = vmatpush.msra.mxu0 0.0
    %3365 = vmatpush.msra.mxu0 0.0
    %3366 = vmatpush.msra.mxu0 0.0
    %3367 = vmatpush.msra.mxu0 0.0
    %3368 = vmatpush.msra.mxu0 0.0
    %v3369 = vand.u32 %v2697, 4294901760
    %v3370 = vsub.f32 %v2697, %v3369
    %v3371 = vand.u32 %v3370, 4294901760
    %v3372 = vsub.f32 %v3370, %v3371
    %v3373 = vand.u32 %v3372, 4294901760
    %3374 = vmatpush.msra.mxu0 %v3373
    %v3375 = vand.u32 %v2696, 4294901760
    %v3376 = vsub.f32 %v2696, %v3375
    %v3377 = vand.u32 %v3376, 4294901760
    %v3378 = vsub.f32 %v3376, %v3377
    %v3379 = vand.u32 %v3378, 4294901760
    %3380 = vmatpush.msra.mxu0 %v3379
    %v3381 = vand.u32 %v2695, 4294901760
    %v3382 = vsub.f32 %v2695, %v3381
    %v3383 = vand.u32 %v3382, 4294901760
    %v3384 = vsub.f32 %v3382, %v3383
    %v3385 = vand.u32 %v3384, 4294901760
    %3386 = vmatpush.msra.mxu0 %v3385
    %v3387 = vand.u32 %v2694, 4294901760
    %v3388 = vsub.f32 %v2694, %v3387
    %v3389 = vand.u32 %v3388, 4294901760
    %v3390 = vsub.f32 %v3388, %v3389
    %v3391 = vand.u32 %v3390, 4294901760
    %3392 = vmatpush.msra.mxu0 %v3391
    %v3393 = vand.u32 %v3097, 4294901760
    %3394 = vmatmul.f32.gmra.mxu0 %v3393
    %v3395 = vpop.f32.mrf.mxu0
    %v3396 = vadd.f32 %v3347, %v3395
    %v3397 = vand.u32 %v3100, 4294901760
    %3398 = vmatmul.f32.gmra.mxu0 %v3397
    %v3399 = vpop.f32.mrf.mxu0
    %v3400 = vadd.f32 %v3355, %v3399
    %3401 = vdwg.mxu0
    %3402 = vmatpush.msra.mxu0 0.0
    %3403 = vmatpush.msra.mxu0 0.0
    %3404 = vmatpush.msra.mxu0 0.0
    %3405 = vmatpush.msra.mxu0 0.0
    %3406 = vmatpush.msra.mxu0 0.0
    %3407 = vmatpush.msra.mxu0 0.0
    %3408 = vmatpush.msra.mxu0 0.0
    %3409 = vmatpush.msra.mxu0 0.0
    %3410 = vmatpush.msra.mxu0 0.0
    %3411 = vmatpush.msra.mxu0 0.0
    %3412 = vmatpush.msra.mxu0 0.0
    %3413 = vmatpush.msra.mxu0 0.0
    %v3414 = vand.u32 %v2697, 4294901760
    %v3415 = vsub.f32 %v2697, %v3414
    %3416 = vmatpush.msra.mxu0 %v3415
    %v3417 = vand.u32 %v2696, 4294901760
    %v3418 = vsub.f32 %v2696, %v3417
    %3419 = vmatpush.msra.mxu0 %v3418
    %v3420 = vand.u32 %v2695, 4294901760
    %v3421 = vsub.f32 %v2695, %v3420
    %3422 = vmatpush.msra.mxu0 %v3421
    %v3423 = vand.u32 %v2694, 4294901760
    %v3424 = vsub.f32 %v2694, %v3423
    %3425 = vmatpush.msra.mxu0 %v3424
    %v3426 = vand.u32 %v3097, 4294901760
    %v3427 = vsub.f32 %v3097, %v3426
    %3428 = vmatmul.f32.gmra.mxu0 %v3427
    %v3429 = vpop.f32.mrf.mxu0
    %v3430 = vadd.f32 %v3396, %v3429
    %v3431 = vand.u32 %v3100, 4294901760
    %v3432 = vsub.f32 %v3100, %v3431
    %3433 = vmatmul.f32.gmra.mxu0 %v3432
    %v3434 = vpop.f32.mrf.mxu0
    %v3435 = vadd.f32 %v3400, %v3434
    %3436 = vdwg.mxu0
    %3437 = vmatpush.msra.mxu0 0.0
    %3438 = vmatpush.msra.mxu0 0.0
    %3439 = vmatpush.msra.mxu0 0.0
    %3440 = vmatpush.msra.mxu0 0.0
    %3441 = vmatpush.msra.mxu0 0.0
    %3442 = vmatpush.msra.mxu0 0.0
    %3443 = vmatpush.msra.mxu0 0.0
    %3444 = vmatpush.msra.mxu0 0.0
    %3445 = vmatpush.msra.mxu0 0.0
    %3446 = vmatpush.msra.mxu0 0.0
    %3447 = vmatpush.msra.mxu0 0.0
    %3448 = vmatpush.msra.mxu0 0.0
    %v3449 = vand.u32 %v2697, 4294901760
    %3450 = vmatpush.msra.mxu0 %v3449
    %v3451 = vand.u32 %v2696, 4294901760
    %3452 = vmatpush.msra.mxu0 %v3451
    %v3453 = vand.u32 %v2695, 4294901760
    %3454 = vmatpush.msra.mxu0 %v3453
    %v3455 = vand.u32 %v2694, 4294901760
    %3456 = vmatpush.msra.mxu0 %v3455
    %v3457 = vand.u32 %v3097, 4294901760
    %v3458 = vsub.f32 %v3097, %v3457
    %v3459 = vand.u32 %v3458, 4294901760
    %3460 = vmatmul.f32.gmra.mxu0 %v3459
    %v3461 = vpop.f32.mrf.mxu0
    %v3462 = vadd.f32 %v3430, %v3461
    %v3463 = vand.u32 %v3100, 4294901760
    %v3464 = vsub.f32 %v3100, %v3463
    %v3465 = vand.u32 %v3464, 4294901760
    %3466 = vmatmul.f32.gmra.mxu0 %v3465
    %v3467 = vpop.f32.mrf.mxu0
    %v3468 = vadd.f32 %v3435, %v3467
    %3469 = vdwg.mxu0
    %3470 = vmatpush.msra.mxu0 0.0
    %3471 = vmatpush.msra.mxu0 0.0
    %3472 = vmatpush.msra.mxu0 0.0
    %3473 = vmatpush.msra.mxu0 0.0
    %3474 = vmatpush.msra.mxu0 0.0
    %3475 = vmatpush.msra.mxu0 0.0
    %3476 = vmatpush.msra.mxu0 0.0
    %3477 = vmatpush.msra.mxu0 0.0
    %3478 = vmatpush.msra.mxu0 0.0
    %3479 = vmatpush.msra.mxu0 0.0
    %3480 = vmatpush.msra.mxu0 0.0
    %3481 = vmatpush.msra.mxu0 0.0
    %v3482 = vand.u32 %v2697, 4294901760
    %v3483 = vsub.f32 %v2697, %v3482
    %v3484 = vand.u32 %v3483, 4294901760
    %3485 = vmatpush.msra.mxu0 %v3484
    %v3486 = vand.u32 %v2696, 4294901760
    %v3487 = vsub.f32 %v2696, %v3486
    %v3488 = vand.u32 %v3487, 4294901760
    %3489 = vmatpush.msra.mxu0 %v3488
    %v3490 = vand.u32 %v2695, 4294901760
    %v3491 = vsub.f32 %v2695, %v3490
    %v3492 = vand.u32 %v3491, 4294901760
    %3493 = vmatpush.msra.mxu0 %v3492
    %v3494 = vand.u32 %v2694, 4294901760
    %v3495 = vsub.f32 %v2694, %v3494
    %v3496 = vand.u32 %v3495, 4294901760
    %3497 = vmatpush.msra.mxu0 %v3496
    %v3498 = vand.u32 %v3097, 4294901760
    %3499 = vmatmul.f32.gmra.mxu0 %v3498
    %v3500 = vpop.f32.mrf.mxu0
    %v3501 = vadd.f32 %v3462, %v3500
    %v3502 = vand.u32 %v3100, 4294901760
    %3503 = vmatmul.f32.gmra.mxu0 %v3502
    %v3504 = vpop.f32.mrf.mxu0
    %v3505 = vadd.f32 %v3468, %v3504
    %3506 = vdwg.mxu0
    %3507 = vmatpush.msra.mxu0 0.0
    %3508 = vmatpush.msra.mxu0 0.0
    %3509 = vmatpush.msra.mxu0 0.0
    %3510 = vmatpush.msra.mxu0 0.0
    %3511 = vmatpush.msra.mxu0 0.0
    %3512 = vmatpush.msra.mxu0 0.0
    %3513 = vmatpush.msra.mxu0 0.0
    %3514 = vmatpush.msra.mxu0 0.0
    %3515 = vmatpush.msra.mxu0 0.0
    %3516 = vmatpush.msra.mxu0 0.0
    %3517 = vmatpush.msra.mxu0 0.0
    %3518 = vmatpush.msra.mxu0 0.0
    %v3519 = vand.u32 %v2697, 4294901760
    %3520 = vmatpush.msra.mxu0 %v3519
    %v3521 = vand.u32 %v2696, 4294901760
    %3522 = vmatpush.msra.mxu0 %v3521
    %v3523 = vand.u32 %v2695, 4294901760
    %3524 = vmatpush.msra.mxu0 %v3523
    %v3525 = vand.u32 %v2694, 4294901760
    %3526 = vmatpush.msra.mxu0 %v3525
    %v3527 = vand.u32 %v3097, 4294901760
    %3528 = vmatmul.f32.gmra.mxu0 %v3527
    %v3529 = vpop.f32.mrf.mxu0
    %v3530 = vadd.f32 %v3501, %v3529
    %v3531 = vand.u32 %v3100, 4294901760
    %3532 = vmatmul.f32.gmra.mxu0 %v3531
    %v3533 = vpop.f32.mrf.mxu0
    %v3534 = vadd.f32 %v3505, %v3533
    %3535 = vdwg.mxu0
    %v3536 = vld [vmem:[%s2 + $0x2b0] sm:$0xff]
    %v3537 = vld [vmem:[%s2 + $0x2b8] sm:$0xff]
    %v3538 = vld [vmem:[%s2 + $0x2c0] sm:$0xff]
    %v3539 = vld [vmem:[%s2 + $0x2c8] sm:$0xff]
    %v3540 = vld [vmem:[%s2 + $0x2d0] sm:$0xff]
    %v3541 = vld [vmem:[%s2 + $0x2d8] sm:$0xff]
    %v3542 = vld [vmem:[%s2 + $0x2e0] sm:$0xff]
    %v3543 = vld [vmem:[%s2 + $0x2e8] sm:$0xff]
    %v3544 = vld [vmem:[%s2 + $0x2f0] sm:$0xff]
    %v3545 = vld [vmem:[%s2 + $0x2f8] sm:$0xff]
    %v3546 = vld [vmem:[%s2 + $0x300] sm:$0xff]
    %v3547 = vld [vmem:[%s2 + $0x308] sm:$0xff]
    %v3548 = vld [vmem:[%s2 + $0x310] sm:$0xff]
    %v3549 = vld [vmem:[%s2 + $0x318] sm:$0xff]
    %v3550 = vld [vmem:[%s2 + $0x320] sm:$0xff]
    %v3551 = vld [vmem:[%s2 + $0x328] sm:$0xff]
    %v3552 = vmul.f32 %v3080, %v3536
    %v3553 = vmul.f32 %v3084, %v3537
    %v3554 = vmul.f32 %v3088, %v3538
    %v3555 = vmul.f32 %v3092, %v3539
    %v3556 = vmul.f32 %v3080, %v3540
    %v3557 = vmul.f32 %v3084, %v3541
    %v3558 = vmul.f32 %v3088, %v3542
    %v3559 = vmul.f32 %v3092, %v3543
    %v3560 = vmul.f32 %v3080, %v3544
    %v3561 = vmul.f32 %v3084, %v3545
    %v3562 = vmul.f32 %v3088, %v3546
    %v3563 = vmul.f32 %v3092, %v3547
    %v3564 = vmul.f32 %v3080, %v3548
    %v3565 = vmul.f32 %v3084, %v3549
    %v3566 = vmul.f32 %v3088, %v3550
    %v3567 = vmul.f32 %v3092, %v3551
    %v3568 = vld [vmem:[%s2 + $0x230] sm:$0xff]
    %v3569 = vld [vmem:[%s2 + $0x238] sm:$0xff]
    %v3570 = vld [vmem:[%s2 + $0x240] sm:$0xff]
    %v3571 = vld [vmem:[%s2 + $0x248] sm:$0xff]
    %v3572 = vld [vmem:[%s2 + $0x250] sm:$0xff]
    %v3573 = vld [vmem:[%s2 + $0x258] sm:$0xff]
    %v3574 = vld [vmem:[%s2 + $0x260] sm:$0xff]
    %v3575 = vld [vmem:[%s2 + $0x268] sm:$0xff]
    %v3576 = vld [vmem:[%s2 + $0x270] sm:$0xff]
    %v3577 = vld [vmem:[%s2 + $0x278] sm:$0xff]
    %v3578 = vld [vmem:[%s2 + $0x280] sm:$0xff]
    %v3579 = vld [vmem:[%s2 + $0x288] sm:$0xff]
    %v3580 = vld [vmem:[%s2 + $0x290] sm:$0xff]
    %v3581 = vld [vmem:[%s2 + $0x298] sm:$0xff]
    %v3582 = vld [vmem:[%s2 + $0x2a0] sm:$0xff]
    %v3583 = vld [vmem:[%s2 + $0x2a8] sm:$0xff]
    %v3585 = vsel %vm29, %v3552, 0
    %v3588 = vsel %vm29, %v3553, 0
    %v3591 = vsel %vm29, %v3554, 0
    %v3594 = vsel %vm29, %v3555, 0
    %v3597 = vsel %vm29, %v3556, 0
    %v3600 = vsel %vm29, %v3557, 0
    %v3603 = vsel %vm29, %v3558, 0
    %v3606 = vsel %vm29, %v3559, 0
    %v3609 = vsel %vm29, %v3560, 0
    %v3612 = vsel %vm29, %v3561, 0
    %v3615 = vsel %vm29, %v3562, 0
    %v3618 = vsel %vm29, %v3563, 0
    %v3621 = vsel %vm29, %v3564, 0
    %v3624 = vsel %vm29, %v3565, 0
    %v3627 = vsel %vm29, %v3566, 0
    %v3630 = vsel %vm29, %v3567, 0
    %v3633 = vsel %vm29, %v3312, 0
    %v3636 = vsel %vm29, %v3316, 0
    %3638 = vmatpush.xpose.msra.mxu0 0.0
    %3639 = vmatpush.xpose.msra.mxu0 0.0
    %3640 = vmatpush.xpose.msra.mxu0 0.0
    %3641 = vmatpush.xpose.msra.mxu0 0.0
    %3642 = vmatpush.xpose.msra.mxu0 0.0
    %3643 = vmatpush.xpose.msra.mxu0 0.0
    %3644 = vmatpush.xpose.msra.mxu0 0.0
    %3645 = vmatpush.xpose.msra.mxu0 0.0
    %3646 = vmatpush.xpose.msra.mxu0 0.0
    %3647 = vmatpush.xpose.msra.mxu0 0.0
    %3648 = vmatpush.xpose.msra.mxu0 0.0
    %3649 = vmatpush.xpose.msra.mxu0 0.0
    %3650 = vmatpush.xpose.msra.mxu0 0.0
    %3651 = vmatpush.xpose.msra.mxu0 0.0
    %v3652 = vand.u32 %v3636, 4294901760
    %3653 = vmatpush.xpose.msra.mxu0 %v3652
    %v3654 = vand.u32 %v3633, 4294901760
    %3655 = vmatpush.xpose.msra.mxu0 %v3654
    %v3656 = vand.u32 %v3585, 4294901760
    %v3657 = vsub.f32 %v3585, %v3656
    %v3658 = vand.u32 %v3657, 4294901760
    %v3659 = vsub.f32 %v3657, %v3658
    %v3660 = vand.u32 %v3659, 4294901760
    %3661 = vmatmul.f32.gmra.mxu0 %v3660
    %v3662 = vpop.f32.mrf.mxu0
    %v3663 = vadd.f32 %v3568, %v3662
    %v3664 = vand.u32 %v3588, 4294901760
    %v3665 = vsub.f32 %v3588, %v3664
    %v3666 = vand.u32 %v3665, 4294901760
    %v3667 = vsub.f32 %v3665, %v3666
    %v3668 = vand.u32 %v3667, 4294901760
    %3669 = vmatmul.f32.gmra.mxu0 %v3668
    %v3670 = vpop.f32.mrf.mxu0
    %v3671 = vadd.f32 %v3569, %v3670
    %v3672 = vand.u32 %v3591, 4294901760
    %v3673 = vsub.f32 %v3591, %v3672
    %v3674 = vand.u32 %v3673, 4294901760
    %v3675 = vsub.f32 %v3673, %v3674
    %v3676 = vand.u32 %v3675, 4294901760
    %3677 = vmatmul.f32.gmra.mxu0 %v3676
    %v3678 = vpop.f32.mrf.mxu0
    %v3679 = vadd.f32 %v3570, %v3678
    %v3680 = vand.u32 %v3594, 4294901760
    %v3681 = vsub.f32 %v3594, %v3680
    %v3682 = vand.u32 %v3681, 4294901760
    %v3683 = vsub.f32 %v3681, %v3682
    %v3684 = vand.u32 %v3683, 4294901760
    %3685 = vmatmul.f32.gmra.mxu0 %v3684
    %v3686 = vpop.f32.mrf.mxu0
    %v3687 = vadd.f32 %v3571, %v3686
    %v3688 = vand.u32 %v3597, 4294901760
    %v3689 = vsub.f32 %v3597, %v3688
    %v3690 = vand.u32 %v3689, 4294901760
    %v3691 = vsub.f32 %v3689, %v3690
    %v3692 = vand.u32 %v3691, 4294901760
    %3693 = vmatmul.f32.gmra.mxu0 %v3692
    %v3694 = vpop.f32.mrf.mxu0
    %v3695 = vadd.f32 %v3572, %v3694
    %v3696 = vand.u32 %v3600, 4294901760
    %v3697 = vsub.f32 %v3600, %v3696
    %v3698 = vand.u32 %v3697, 4294901760
    %v3699 = vsub.f32 %v3697, %v3698
    %v3700 = vand.u32 %v3699, 4294901760
    %3701 = vmatmul.f32.gmra.mxu0 %v3700
    %v3702 = vpop.f32.mrf.mxu0
    %v3703 = vadd.f32 %v3573, %v3702
    %v3704 = vand.u32 %v3603, 4294901760
    %v3705 = vsub.f32 %v3603, %v3704
    %v3706 = vand.u32 %v3705, 4294901760
    %v3707 = vsub.f32 %v3705, %v3706
    %v3708 = vand.u32 %v3707, 4294901760
    %3709 = vmatmul.f32.gmra.mxu0 %v3708
    %v3710 = vpop.f32.mrf.mxu0
    %v3711 = vadd.f32 %v3574, %v3710
    %v3712 = vand.u32 %v3606, 4294901760
    %v3713 = vsub.f32 %v3606, %v3712
    %v3714 = vand.u32 %v3713, 4294901760
    %v3715 = vsub.f32 %v3713, %v3714
    %v3716 = vand.u32 %v3715, 4294901760
    %3717 = vmatmul.f32.gmra.mxu0 %v3716
    %v3718 = vpop.f32.mrf.mxu0
    %v3719 = vadd.f32 %v3575, %v3718
    %v3720 = vand.u32 %v3609, 4294901760
    %v3721 = vsub.f32 %v3609, %v3720
    %v3722 = vand.u32 %v3721, 4294901760
    %v3723 = vsub.f32 %v3721, %v3722
    %v3724 = vand.u32 %v3723, 4294901760
    %3725 = vmatmul.f32.gmra.mxu0 %v3724
    %v3726 = vpop.f32.mrf.mxu0
    %v3727 = vadd.f32 %v3576, %v3726
    %v3728 = vand.u32 %v3612, 4294901760
    %v3729 = vsub.f32 %v3612, %v3728
    %v3730 = vand.u32 %v3729, 4294901760
    %v3731 = vsub.f32 %v3729, %v3730
    %v3732 = vand.u32 %v3731, 4294901760
    %3733 = vmatmul.f32.gmra.mxu0 %v3732
    %v3734 = vpop.f32.mrf.mxu0
    %v3735 = vadd.f32 %v3577, %v3734
    %v3736 = vand.u32 %v3615, 4294901760
    %v3737 = vsub.f32 %v3615, %v3736
    %v3738 = vand.u32 %v3737, 4294901760
    %v3739 = vsub.f32 %v3737, %v3738
    %v3740 = vand.u32 %v3739, 4294901760
    %3741 = vmatmul.f32.gmra.mxu0 %v3740
    %v3742 = vpop.f32.mrf.mxu0
    %v3743 = vadd.f32 %v3578, %v3742
    %v3744 = vand.u32 %v3618, 4294901760
    %v3745 = vsub.f32 %v3618, %v3744
    %v3746 = vand.u32 %v3745, 4294901760
    %v3747 = vsub.f32 %v3745, %v3746
    %v3748 = vand.u32 %v3747, 4294901760
    %3749 = vmatmul.f32.gmra.mxu0 %v3748
    %v3750 = vpop.f32.mrf.mxu0
    %v3751 = vadd.f32 %v3579, %v3750
    %v3752 = vand.u32 %v3621, 4294901760
    %v3753 = vsub.f32 %v3621, %v3752
    %v3754 = vand.u32 %v3753, 4294901760
    %v3755 = vsub.f32 %v3753, %v3754
    %v3756 = vand.u32 %v3755, 4294901760
    %3757 = vmatmul.f32.gmra.mxu0 %v3756
    %v3758 = vpop.f32.mrf.mxu0
    %v3759 = vadd.f32 %v3580, %v3758
    %v3760 = vand.u32 %v3624, 4294901760
    %v3761 = vsub.f32 %v3624, %v3760
    %v3762 = vand.u32 %v3761, 4294901760
    %v3763 = vsub.f32 %v3761, %v3762
    %v3764 = vand.u32 %v3763, 4294901760
    %3765 = vmatmul.f32.gmra.mxu0 %v3764
    %v3766 = vpop.f32.mrf.mxu0
    %v3767 = vadd.f32 %v3581, %v3766
    %v3768 = vand.u32 %v3627, 4294901760
    %v3769 = vsub.f32 %v3627, %v3768
    %v3770 = vand.u32 %v3769, 4294901760
    %v3771 = vsub.f32 %v3769, %v3770
    %v3772 = vand.u32 %v3771, 4294901760
    %3773 = vmatmul.f32.gmra.mxu0 %v3772
    %v3774 = vpop.f32.mrf.mxu0
    %v3775 = vadd.f32 %v3582, %v3774
    %v3776 = vand.u32 %v3630, 4294901760
    %v3777 = vsub.f32 %v3630, %v3776
    %v3778 = vand.u32 %v3777, 4294901760
    %v3779 = vsub.f32 %v3777, %v3778
    %v3780 = vand.u32 %v3779, 4294901760
    %3781 = vmatmul.f32.gmra.mxu0 %v3780
    %v3782 = vpop.f32.mrf.mxu0
    %v3783 = vadd.f32 %v3583, %v3782
    %3784 = vdwg.mxu0
    %3785 = vmatpush.xpose.msra.mxu0 0.0
    %3786 = vmatpush.xpose.msra.mxu0 0.0
    %3787 = vmatpush.xpose.msra.mxu0 0.0
    %3788 = vmatpush.xpose.msra.mxu0 0.0
    %3789 = vmatpush.xpose.msra.mxu0 0.0
    %3790 = vmatpush.xpose.msra.mxu0 0.0
    %3791 = vmatpush.xpose.msra.mxu0 0.0
    %3792 = vmatpush.xpose.msra.mxu0 0.0
    %3793 = vmatpush.xpose.msra.mxu0 0.0
    %3794 = vmatpush.xpose.msra.mxu0 0.0
    %3795 = vmatpush.xpose.msra.mxu0 0.0
    %3796 = vmatpush.xpose.msra.mxu0 0.0
    %3797 = vmatpush.xpose.msra.mxu0 0.0
    %3798 = vmatpush.xpose.msra.mxu0 0.0
    %v3799 = vand.u32 %v3636, 4294901760
    %v3800 = vsub.f32 %v3636, %v3799
    %v3801 = vand.u32 %v3800, 4294901760
    %v3802 = vsub.f32 %v3800, %v3801
    %v3803 = vand.u32 %v3802, 4294901760
    %3804 = vmatpush.xpose.msra.mxu0 %v3803
    %v3805 = vand.u32 %v3633, 4294901760
    %v3806 = vsub.f32 %v3633, %v3805
    %v3807 = vand.u32 %v3806, 4294901760
    %v3808 = vsub.f32 %v3806, %v3807
    %v3809 = vand.u32 %v3808, 4294901760
    %3810 = vmatpush.xpose.msra.mxu0 %v3809
    %v3811 = vand.u32 %v3585, 4294901760
    %3812 = vmatmul.f32.gmra.mxu0 %v3811
    %v3813 = vpop.f32.mrf.mxu0
    %v3814 = vadd.f32 %v3663, %v3813
    %v3815 = vand.u32 %v3588, 4294901760
    %3816 = vmatmul.f32.gmra.mxu0 %v3815
    %v3817 = vpop.f32.mrf.mxu0
    %v3818 = vadd.f32 %v3671, %v3817
    %v3819 = vand.u32 %v3591, 4294901760
    %3820 = vmatmul.f32.gmra.mxu0 %v3819
    %v3821 = vpop.f32.mrf.mxu0
    %v3822 = vadd.f32 %v3679, %v3821
    %v3823 = vand.u32 %v3594, 4294901760
    %3824 = vmatmul.f32.gmra.mxu0 %v3823
    %v3825 = vpop.f32.mrf.mxu0
    %v3826 = vadd.f32 %v3687, %v3825
    %v3827 = vand.u32 %v3597, 4294901760
    %3828 = vmatmul.f32.gmra.mxu0 %v3827
    %v3829 = vpop.f32.mrf.mxu0
    %v3830 = vadd.f32 %v3695, %v3829
    %v3831 = vand.u32 %v3600, 4294901760
    %3832 = vmatmul.f32.gmra.mxu0 %v3831
    %v3833 = vpop.f32.mrf.mxu0
    %v3834 = vadd.f32 %v3703, %v3833
    %v3835 = vand.u32 %v3603, 4294901760
    %3836 = vmatmul.f32.gmra.mxu0 %v3835
    %v3837 = vpop.f32.mrf.mxu0
    %v3838 = vadd.f32 %v3711, %v3837
    %v3839 = vand.u32 %v3606, 4294901760
    %3840 = vmatmul.f32.gmra.mxu0 %v3839
    %v3841 = vpop.f32.mrf.mxu0
    %v3842 = vadd.f32 %v3719, %v3841
    %v3843 = vand.u32 %v3609, 4294901760
    %3844 = vmatmul.f32.gmra.mxu0 %v3843
    %v3845 = vpop.f32.mrf.mxu0
    %v3846 = vadd.f32 %v3727, %v3845
    %v3847 = vand.u32 %v3612, 4294901760
    %3848 = vmatmul.f32.gmra.mxu0 %v3847
    %v3849 = vpop.f32.mrf.mxu0
    %v3850 = vadd.f32 %v3735, %v3849
    %v3851 = vand.u32 %v3615, 4294901760
    %3852 = vmatmul.f32.gmra.mxu0 %v3851
    %v3853 = vpop.f32.mrf.mxu0
    %v3854 = vadd.f32 %v3743, %v3853
    %v3855 = vand.u32 %v3618, 4294901760
    %3856 = vmatmul.f32.gmra.mxu0 %v3855
    %v3857 = vpop.f32.mrf.mxu0
    %v3858 = vadd.f32 %v3751, %v3857
    %v3859 = vand.u32 %v3621, 4294901760
    %3860 = vmatmul.f32.gmra.mxu0 %v3859
    %v3861 = vpop.f32.mrf.mxu0
    %v3862 = vadd.f32 %v3759, %v3861
    %v3863 = vand.u32 %v3624, 4294901760
    %3864 = vmatmul.f32.gmra.mxu0 %v3863
    %v3865 = vpop.f32.mrf.mxu0
    %v3866 = vadd.f32 %v3767, %v3865
    %v3867 = vand.u32 %v3627, 4294901760
    %3868 = vmatmul.f32.gmra.mxu0 %v3867
    %v3869 = vpop.f32.mrf.mxu0
    %v3870 = vadd.f32 %v3775, %v3869
    %v3871 = vand.u32 %v3630, 4294901760
    %3872 = vmatmul.f32.gmra.mxu0 %v3871
    %v3873 = vpop.f32.mrf.mxu0
    %v3874 = vadd.f32 %v3783, %v3873
    %3875 = vdwg.mxu0
    %3876 = vmatpush.xpose.msra.mxu0 0.0
    %3877 = vmatpush.xpose.msra.mxu0 0.0
    %3878 = vmatpush.xpose.msra.mxu0 0.0
    %3879 = vmatpush.xpose.msra.mxu0 0.0
    %3880 = vmatpush.xpose.msra.mxu0 0.0
    %3881 = vmatpush.xpose.msra.mxu0 0.0
    %3882 = vmatpush.xpose.msra.mxu0 0.0
    %3883 = vmatpush.xpose.msra.mxu0 0.0
    %3884 = vmatpush.xpose.msra.mxu0 0.0
    %3885 = vmatpush.xpose.msra.mxu0 0.0
    %3886 = vmatpush.xpose.msra.mxu0 0.0
    %3887 = vmatpush.xpose.msra.mxu0 0.0
    %3888 = vmatpush.xpose.msra.mxu0 0.0
    %3889 = vmatpush.xpose.msra.mxu0 0.0
    %v3890 = vand.u32 %v3636, 4294901760
    %v3891 = vsub.f32 %v3636, %v3890
    %3892 = vmatpush.xpose.msra.mxu0 %v3891
    %v3893 = vand.u32 %v3633, 4294901760
    %v3894 = vsub.f32 %v3633, %v3893
    %3895 = vmatpush.xpose.msra.mxu0 %v3894
    %v3896 = vand.u32 %v3585, 4294901760
    %v3897 = vsub.f32 %v3585, %v3896
    %3898 = vmatmul.f32.gmra.mxu0 %v3897
    %v3899 = vpop.f32.mrf.mxu0
    %v3900 = vadd.f32 %v3814, %v3899
    %v3901 = vand.u32 %v3588, 4294901760
    %v3902 = vsub.f32 %v3588, %v3901
    %3903 = vmatmul.f32.gmra.mxu0 %v3902
    %v3904 = vpop.f32.mrf.mxu0
    %v3905 = vadd.f32 %v3818, %v3904
    %v3906 = vand.u32 %v3591, 4294901760
    %v3907 = vsub.f32 %v3591, %v3906
    %3908 = vmatmul.f32.gmra.mxu0 %v3907
    %v3909 = vpop.f32.mrf.mxu0
    %v3910 = vadd.f32 %v3822, %v3909
    %v3911 = vand.u32 %v3594, 4294901760
    %v3912 = vsub.f32 %v3594, %v3911
    %3913 = vmatmul.f32.gmra.mxu0 %v3912
    %v3914 = vpop.f32.mrf.mxu0
    %v3915 = vadd.f32 %v3826, %v3914
    %v3916 = vand.u32 %v3597, 4294901760
    %v3917 = vsub.f32 %v3597, %v3916
    %3918 = vmatmul.f32.gmra.mxu0 %v3917
    %v3919 = vpop.f32.mrf.mxu0
    %v3920 = vadd.f32 %v3830, %v3919
    %v3921 = vand.u32 %v3600, 4294901760
    %v3922 = vsub.f32 %v3600, %v3921
    %3923 = vmatmul.f32.gmra.mxu0 %v3922
    %v3924 = vpop.f32.mrf.mxu0
    %v3925 = vadd.f32 %v3834, %v3924
    %v3926 = vand.u32 %v3603, 4294901760
    %v3927 = vsub.f32 %v3603, %v3926
    %3928 = vmatmul.f32.gmra.mxu0 %v3927
    %v3929 = vpop.f32.mrf.mxu0
    %v3930 = vadd.f32 %v3838, %v3929
    %v3931 = vand.u32 %v3606, 4294901760
    %v3932 = vsub.f32 %v3606, %v3931
    %3933 = vmatmul.f32.gmra.mxu0 %v3932
    %v3934 = vpop.f32.mrf.mxu0
    %v3935 = vadd.f32 %v3842, %v3934
    %v3936 = vand.u32 %v3609, 4294901760
    %v3937 = vsub.f32 %v3609, %v3936
    %3938 = vmatmul.f32.gmra.mxu0 %v3937
    %v3939 = vpop.f32.mrf.mxu0
    %v3940 = vadd.f32 %v3846, %v3939
    %v3941 = vand.u32 %v3612, 4294901760
    %v3942 = vsub.f32 %v3612, %v3941
    %3943 = vmatmul.f32.gmra.mxu0 %v3942
    %v3944 = vpop.f32.mrf.mxu0
    %v3945 = vadd.f32 %v3850, %v3944
    %v3946 = vand.u32 %v3615, 4294901760
    %v3947 = vsub.f32 %v3615, %v3946
    %3948 = vmatmul.f32.gmra.mxu0 %v3947
    %v3949 = vpop.f32.mrf.mxu0
    %v3950 = vadd.f32 %v3854, %v3949
    %v3951 = vand.u32 %v3618, 4294901760
    %v3952 = vsub.f32 %v3618, %v3951
    %3953 = vmatmul.f32.gmra.mxu0 %v3952
    %v3954 = vpop.f32.mrf.mxu0
    %v3955 = vadd.f32 %v3858, %v3954
    %v3956 = vand.u32 %v3621, 4294901760
    %v3957 = vsub.f32 %v3621, %v3956
    %3958 = vmatmul.f32.gmra.mxu0 %v3957
    %v3959 = vpop.f32.mrf.mxu0
    %v3960 = vadd.f32 %v3862, %v3959
    %v3961 = vand.u32 %v3624, 4294901760
    %v3962 = vsub.f32 %v3624, %v3961
    %3963 = vmatmul.f32.gmra.mxu0 %v3962
    %v3964 = vpop.f32.mrf.mxu0
    %v3965 = vadd.f32 %v3866, %v3964
    %v3966 = vand.u32 %v3627, 4294901760
    %v3967 = vsub.f32 %v3627, %v3966
    %3968 = vmatmul.f32.gmra.mxu0 %v3967
    %v3969 = vpop.f32.mrf.mxu0
    %v3970 = vadd.f32 %v3870, %v3969
    %v3971 = vand.u32 %v3630, 4294901760
    %v3972 = vsub.f32 %v3630, %v3971
    %3973 = vmatmul.f32.gmra.mxu0 %v3972
    %v3974 = vpop.f32.mrf.mxu0
    %v3975 = vadd.f32 %v3874, %v3974
    %3976 = vdwg.mxu0
    %3977 = vmatpush.xpose.msra.mxu0 0.0
    %3978 = vmatpush.xpose.msra.mxu0 0.0
    %3979 = vmatpush.xpose.msra.mxu0 0.0
    %3980 = vmatpush.xpose.msra.mxu0 0.0
    %3981 = vmatpush.xpose.msra.mxu0 0.0
    %3982 = vmatpush.xpose.msra.mxu0 0.0
    %3983 = vmatpush.xpose.msra.mxu0 0.0
    %3984 = vmatpush.xpose.msra.mxu0 0.0
    %3985 = vmatpush.xpose.msra.mxu0 0.0
    %3986 = vmatpush.xpose.msra.mxu0 0.0
    %3987 = vmatpush.xpose.msra.mxu0 0.0
    %3988 = vmatpush.xpose.msra.mxu0 0.0
    %3989 = vmatpush.xpose.msra.mxu0 0.0
    %3990 = vmatpush.xpose.msra.mxu0 0.0
    %v3991 = vand.u32 %v3636, 4294901760
    %3992 = vmatpush.xpose.msra.mxu0 %v3991
    %v3993 = vand.u32 %v3633, 4294901760
    %3994 = vmatpush.xpose.msra.mxu0 %v3993
    %v3995 = vand.u32 %v3585, 4294901760
    %v3996 = vsub.f32 %v3585, %v3995
    %v3997 = vand.u32 %v3996, 4294901760
    %3998 = vmatmul.f32.gmra.mxu0 %v3997
    %v3999 = vpop.f32.mrf.mxu0
    %v4000 = vadd.f32 %v3900, %v3999
    %v4001 = vand.u32 %v3588, 4294901760
    %v4002 = vsub.f32 %v3588, %v4001
    %v4003 = vand.u32 %v4002, 4294901760
    %4004 = vmatmul.f32.gmra.mxu0 %v4003
    %v4005 = vpop.f32.mrf.mxu0
    %v4006 = vadd.f32 %v3905, %v4005
    %v4007 = vand.u32 %v3591, 4294901760
    %v4008 = vsub.f32 %v3591, %v4007
    %v4009 = vand.u32 %v4008, 4294901760
    %4010 = vmatmul.f32.gmra.mxu0 %v4009
    %v4011 = vpop.f32.mrf.mxu0
    %v4012 = vadd.f32 %v3910, %v4011
    %v4013 = vand.u32 %v3594, 4294901760
    %v4014 = vsub.f32 %v3594, %v4013
    %v4015 = vand.u32 %v4014, 4294901760
    %4016 = vmatmul.f32.gmra.mxu0 %v4015
    %v4017 = vpop.f32.mrf.mxu0
    %v4018 = vadd.f32 %v3915, %v4017
    %v4019 = vand.u32 %v3597, 4294901760
    %v4020 = vsub.f32 %v3597, %v4019
    %v4021 = vand.u32 %v4020, 4294901760
    %4022 = vmatmul.f32.gmra.mxu0 %v4021
    %v4023 = vpop.f32.mrf.mxu0
    %v4024 = vadd.f32 %v3920, %v4023
    %v4025 = vand.u32 %v3600, 4294901760
    %v4026 = vsub.f32 %v3600, %v4025
    %v4027 = vand.u32 %v4026, 4294901760
    %4028 = vmatmul.f32.gmra.mxu0 %v4027
    %v4029 = vpop.f32.mrf.mxu0
    %v4030 = vadd.f32 %v3925, %v4029
    %v4031 = vand.u32 %v3603, 4294901760
    %v4032 = vsub.f32 %v3603, %v4031
    %v4033 = vand.u32 %v4032, 4294901760
    %4034 = vmatmul.f32.gmra.mxu0 %v4033
    %v4035 = vpop.f32.mrf.mxu0
    %v4036 = vadd.f32 %v3930, %v4035
    %v4037 = vand.u32 %v3606, 4294901760
    %v4038 = vsub.f32 %v3606, %v4037
    %v4039 = vand.u32 %v4038, 4294901760
    %4040 = vmatmul.f32.gmra.mxu0 %v4039
    %v4041 = vpop.f32.mrf.mxu0
    %v4042 = vadd.f32 %v3935, %v4041
    %v4043 = vand.u32 %v3609, 4294901760
    %v4044 = vsub.f32 %v3609, %v4043
    %v4045 = vand.u32 %v4044, 4294901760
    %4046 = vmatmul.f32.gmra.mxu0 %v4045
    %v4047 = vpop.f32.mrf.mxu0
    %v4048 = vadd.f32 %v3940, %v4047
    %v4049 = vand.u32 %v3612, 4294901760
    %v4050 = vsub.f32 %v3612, %v4049
    %v4051 = vand.u32 %v4050, 4294901760
    %4052 = vmatmul.f32.gmra.mxu0 %v4051
    %v4053 = vpop.f32.mrf.mxu0
    %v4054 = vadd.f32 %v3945, %v4053
    %v4055 = vand.u32 %v3615, 4294901760
    %v4056 = vsub.f32 %v3615, %v4055
    %v4057 = vand.u32 %v4056, 4294901760
    %4058 = vmatmul.f32.gmra.mxu0 %v4057
    %v4059 = vpop.f32.mrf.mxu0
    %v4060 = vadd.f32 %v3950, %v4059
    %v4061 = vand.u32 %v3618, 4294901760
    %v4062 = vsub.f32 %v3618, %v4061
    %v4063 = vand.u32 %v4062, 4294901760
    %4064 = vmatmul.f32.gmra.mxu0 %v4063
    %v4065 = vpop.f32.mrf.mxu0
    %v4066 = vadd.f32 %v3955, %v4065
    %v4067 = vand.u32 %v3621, 4294901760
    %v4068 = vsub.f32 %v3621, %v4067
    %v4069 = vand.u32 %v4068, 4294901760
    %4070 = vmatmul.f32.gmra.mxu0 %v4069
    %v4071 = vpop.f32.mrf.mxu0
    %v4072 = vadd.f32 %v3960, %v4071
    %v4073 = vand.u32 %v3624, 4294901760
    %v4074 = vsub.f32 %v3624, %v4073
    %v4075 = vand.u32 %v4074, 4294901760
    %4076 = vmatmul.f32.gmra.mxu0 %v4075
    %v4077 = vpop.f32.mrf.mxu0
    %v4078 = vadd.f32 %v3965, %v4077
    %v4079 = vand.u32 %v3627, 4294901760
    %v4080 = vsub.f32 %v3627, %v4079
    %v4081 = vand.u32 %v4080, 4294901760
    %4082 = vmatmul.f32.gmra.mxu0 %v4081
    %v4083 = vpop.f32.mrf.mxu0
    %v4084 = vadd.f32 %v3970, %v4083
    %v4085 = vand.u32 %v3630, 4294901760
    %v4086 = vsub.f32 %v3630, %v4085
    %v4087 = vand.u32 %v4086, 4294901760
    %4088 = vmatmul.f32.gmra.mxu0 %v4087
    %v4089 = vpop.f32.mrf.mxu0
    %v4090 = vadd.f32 %v3975, %v4089
    %4091 = vdwg.mxu0
    %4092 = vmatpush.xpose.msra.mxu0 0.0
    %4093 = vmatpush.xpose.msra.mxu0 0.0
    %4094 = vmatpush.xpose.msra.mxu0 0.0
    %4095 = vmatpush.xpose.msra.mxu0 0.0
    %4096 = vmatpush.xpose.msra.mxu0 0.0
    %4097 = vmatpush.xpose.msra.mxu0 0.0
    %4098 = vmatpush.xpose.msra.mxu0 0.0
    %4099 = vmatpush.xpose.msra.mxu0 0.0
    %4100 = vmatpush.xpose.msra.mxu0 0.0
    %4101 = vmatpush.xpose.msra.mxu0 0.0
    %4102 = vmatpush.xpose.msra.mxu0 0.0
    %4103 = vmatpush.xpose.msra.mxu0 0.0
    %4104 = vmatpush.xpose.msra.mxu0 0.0
    %4105 = vmatpush.xpose.msra.mxu0 0.0
    %v4106 = vand.u32 %v3636, 4294901760
    %v4107 = vsub.f32 %v3636, %v4106
    %v4108 = vand.u32 %v4107, 4294901760
    %4109 = vmatpush.xpose.msra.mxu0 %v4108
    %v4110 = vand.u32 %v3633, 4294901760
    %v4111 = vsub.f32 %v3633, %v4110
    %v4112 = vand.u32 %v4111, 4294901760
    %4113 = vmatpush.xpose.msra.mxu0 %v4112
    %v4114 = vand.u32 %v3585, 4294901760
    %4115 = vmatmul.f32.gmra.mxu0 %v4114
    %v4116 = vpop.f32.mrf.mxu0
    %v4117 = vadd.f32 %v4000, %v4116
    %v4118 = vand.u32 %v3588, 4294901760
    %4119 = vmatmul.f32.gmra.mxu0 %v4118
    %v4120 = vpop.f32.mrf.mxu0
    %v4121 = vadd.f32 %v4006, %v4120
    %v4122 = vand.u32 %v3591, 4294901760
    %4123 = vmatmul.f32.gmra.mxu0 %v4122
    %v4124 = vpop.f32.mrf.mxu0
    %v4125 = vadd.f32 %v4012, %v4124
    %v4126 = vand.u32 %v3594, 4294901760
    %4127 = vmatmul.f32.gmra.mxu0 %v4126
    %v4128 = vpop.f32.mrf.mxu0
    %v4129 = vadd.f32 %v4018, %v4128
    %v4130 = vand.u32 %v3597, 4294901760
    %4131 = vmatmul.f32.gmra.mxu0 %v4130
    %v4132 = vpop.f32.mrf.mxu0
    %v4133 = vadd.f32 %v4024, %v4132
    %v4134 = vand.u32 %v3600, 4294901760
    %4135 = vmatmul.f32.gmra.mxu0 %v4134
    %v4136 = vpop.f32.mrf.mxu0
    %v4137 = vadd.f32 %v4030, %v4136
    %v4138 = vand.u32 %v3603, 4294901760
    %4139 = vmatmul.f32.gmra.mxu0 %v4138
    %v4140 = vpop.f32.mrf.mxu0
    %v4141 = vadd.f32 %v4036, %v4140
    %v4142 = vand.u32 %v3606, 4294901760
    %4143 = vmatmul.f32.gmra.mxu0 %v4142
    %v4144 = vpop.f32.mrf.mxu0
    %v4145 = vadd.f32 %v4042, %v4144
    %v4146 = vand.u32 %v3609, 4294901760
    %4147 = vmatmul.f32.gmra.mxu0 %v4146
    %v4148 = vpop.f32.mrf.mxu0
    %v4149 = vadd.f32 %v4048, %v4148
    %v4150 = vand.u32 %v3612, 4294901760
    %4151 = vmatmul.f32.gmra.mxu0 %v4150
    %v4152 = vpop.f32.mrf.mxu0
    %v4153 = vadd.f32 %v4054, %v4152
    %v4154 = vand.u32 %v3615, 4294901760
    %4155 = vmatmul.f32.gmra.mxu0 %v4154
    %v4156 = vpop.f32.mrf.mxu0
    %v4157 = vadd.f32 %v4060, %v4156
    %v4158 = vand.u32 %v3618, 4294901760
    %4159 = vmatmul.f32.gmra.mxu0 %v4158
    %v4160 = vpop.f32.mrf.mxu0
    %v4161 = vadd.f32 %v4066, %v4160
    %v4162 = vand.u32 %v3621, 4294901760
    %4163 = vmatmul.f32.gmra.mxu0 %v4162
    %v4164 = vpop.f32.mrf.mxu0
    %v4165 = vadd.f32 %v4072, %v4164
    %v4166 = vand.u32 %v3624, 4294901760
    %4167 = vmatmul.f32.gmra.mxu0 %v4166
    %v4168 = vpop.f32.mrf.mxu0
    %v4169 = vadd.f32 %v4078, %v4168
    %v4170 = vand.u32 %v3627, 4294901760
    %4171 = vmatmul.f32.gmra.mxu0 %v4170
    %v4172 = vpop.f32.mrf.mxu0
    %v4173 = vadd.f32 %v4084, %v4172
    %v4174 = vand.u32 %v3630, 4294901760
    %4175 = vmatmul.f32.gmra.mxu0 %v4174
    %v4176 = vpop.f32.mrf.mxu0
    %v4177 = vadd.f32 %v4090, %v4176
    %4178 = vdwg.mxu0
    %4179 = vmatpush.xpose.msra.mxu0 0.0
    %4180 = vmatpush.xpose.msra.mxu0 0.0
    %4181 = vmatpush.xpose.msra.mxu0 0.0
    %4182 = vmatpush.xpose.msra.mxu0 0.0
    %4183 = vmatpush.xpose.msra.mxu0 0.0
    %4184 = vmatpush.xpose.msra.mxu0 0.0
    %4185 = vmatpush.xpose.msra.mxu0 0.0
    %4186 = vmatpush.xpose.msra.mxu0 0.0
    %4187 = vmatpush.xpose.msra.mxu0 0.0
    %4188 = vmatpush.xpose.msra.mxu0 0.0
    %4189 = vmatpush.xpose.msra.mxu0 0.0
    %4190 = vmatpush.xpose.msra.mxu0 0.0
    %4191 = vmatpush.xpose.msra.mxu0 0.0
    %4192 = vmatpush.xpose.msra.mxu0 0.0
    %v4193 = vand.u32 %v3636, 4294901760
    %4194 = vmatpush.xpose.msra.mxu0 %v4193
    %v4195 = vand.u32 %v3633, 4294901760
    %4196 = vmatpush.xpose.msra.mxu0 %v4195
    %v4197 = vand.u32 %v3585, 4294901760
    %4198 = vmatmul.f32.gmra.mxu0 %v4197
    %v4199 = vpop.f32.mrf.mxu0
    %v4200 = vadd.f32 %v4117, %v4199
    %v4201 = vand.u32 %v3588, 4294901760
    %4202 = vmatmul.f32.gmra.mxu0 %v4201
    %v4203 = vpop.f32.mrf.mxu0
    %v4204 = vadd.f32 %v4121, %v4203
    %v4205 = vand.u32 %v3591, 4294901760
    %4206 = vmatmul.f32.gmra.mxu0 %v4205
    %v4207 = vpop.f32.mrf.mxu0
    %v4208 = vadd.f32 %v4125, %v4207
    %v4209 = vand.u32 %v3594, 4294901760
    %4210 = vmatmul.f32.gmra.mxu0 %v4209
    %v4211 = vpop.f32.mrf.mxu0
    %v4212 = vadd.f32 %v4129, %v4211
    %v4213 = vand.u32 %v3597, 4294901760
    %4214 = vmatmul.f32.gmra.mxu0 %v4213
    %v4215 = vpop.f32.mrf.mxu0
    %v4216 = vadd.f32 %v4133, %v4215
    %v4217 = vand.u32 %v3600, 4294901760
    %4218 = vmatmul.f32.gmra.mxu0 %v4217
    %v4219 = vpop.f32.mrf.mxu0
    %v4220 = vadd.f32 %v4137, %v4219
    %v4221 = vand.u32 %v3603, 4294901760
    %4222 = vmatmul.f32.gmra.mxu0 %v4221
    %v4223 = vpop.f32.mrf.mxu0
    %v4224 = vadd.f32 %v4141, %v4223
    %v4225 = vand.u32 %v3606, 4294901760
    %4226 = vmatmul.f32.gmra.mxu0 %v4225
    %v4227 = vpop.f32.mrf.mxu0
    %v4228 = vadd.f32 %v4145, %v4227
    %v4229 = vand.u32 %v3609, 4294901760
    %4230 = vmatmul.f32.gmra.mxu0 %v4229
    %v4231 = vpop.f32.mrf.mxu0
    %v4232 = vadd.f32 %v4149, %v4231
    %v4233 = vand.u32 %v3612, 4294901760
    %4234 = vmatmul.f32.gmra.mxu0 %v4233
    %v4235 = vpop.f32.mrf.mxu0
    %v4236 = vadd.f32 %v4153, %v4235
    %v4237 = vand.u32 %v3615, 4294901760
    %4238 = vmatmul.f32.gmra.mxu0 %v4237
    %v4239 = vpop.f32.mrf.mxu0
    %v4240 = vadd.f32 %v4157, %v4239
    %v4241 = vand.u32 %v3618, 4294901760
    %4242 = vmatmul.f32.gmra.mxu0 %v4241
    %v4243 = vpop.f32.mrf.mxu0
    %v4244 = vadd.f32 %v4161, %v4243
    %v4245 = vand.u32 %v3621, 4294901760
    %4246 = vmatmul.f32.gmra.mxu0 %v4245
    %v4247 = vpop.f32.mrf.mxu0
    %v4248 = vadd.f32 %v4165, %v4247
    %v4249 = vand.u32 %v3624, 4294901760
    %4250 = vmatmul.f32.gmra.mxu0 %v4249
    %v4251 = vpop.f32.mrf.mxu0
    %v4252 = vadd.f32 %v4169, %v4251
    %v4253 = vand.u32 %v3627, 4294901760
    %4254 = vmatmul.f32.gmra.mxu0 %v4253
    %v4255 = vpop.f32.mrf.mxu0
    %v4256 = vadd.f32 %v4173, %v4255
    %v4257 = vand.u32 %v3630, 4294901760
    %4258 = vmatmul.f32.gmra.mxu0 %v4257
    %v4259 = vpop.f32.mrf.mxu0
    %v4260 = vadd.f32 %v4177, %v4259
    %4261 = vdwg.mxu0
    %vm4262 = vcmask 130048
    %v4263 = vsel %vm4262, %v4200, -inf
    %4264 = vmax.xlane.f32.xlu0 %v4263
    %v4265 = vpop.xlane.xlu0 %4264
    %v4266 = vsel %vm4262, %v4204, -inf
    %4267 = vmax.xlane.f32.xlu0 %v4266
    %v4268 = vpop.xlane.xlu0 %4267
    %v4269 = vsel %vm4262, %v4208, -inf
    %4270 = vmax.xlane.f32.xlu0 %v4269
    %v4271 = vpop.xlane.xlu0 %4270
    %v4272 = vsel %vm4262, %v4212, -inf
    %4273 = vmax.xlane.f32.xlu0 %v4272
    %v4274 = vpop.xlane.xlu0 %4273
    %v4275 = vsel %vm4262, %v4216, -inf
    %4276 = vmax.xlane.f32.xlu0 %v4275
    %v4277 = vpop.xlane.xlu0 %4276
    %v4278 = vsel %vm4262, %v4220, -inf
    %4279 = vmax.xlane.f32.xlu0 %v4278
    %v4280 = vpop.xlane.xlu0 %4279
    %v4281 = vsel %vm4262, %v4224, -inf
    %4282 = vmax.xlane.f32.xlu0 %v4281
    %v4283 = vpop.xlane.xlu0 %4282
    %v4284 = vsel %vm4262, %v4228, -inf
    %4285 = vmax.xlane.f32.xlu0 %v4284
    %v4286 = vpop.xlane.xlu0 %4285
    %v4287 = vsel %vm4262, %v4232, -inf
    %4288 = vmax.xlane.f32.xlu0 %v4287
    %v4289 = vpop.xlane.xlu0 %4288
    %v4290 = vsel %vm4262, %v4236, -inf
    %4291 = vmax.xlane.f32.xlu0 %v4290
    %v4292 = vpop.xlane.xlu0 %4291
    %v4293 = vsel %vm4262, %v4240, -inf
    %4294 = vmax.xlane.f32.xlu0 %v4293
    %v4295 = vpop.xlane.xlu0 %4294
    %v4296 = vsel %vm4262, %v4244, -inf
    %4297 = vmax.xlane.f32.xlu0 %v4296
    %v4298 = vpop.xlane.xlu0 %4297
    %v4299 = vsel %vm4262, %v4248, -inf
    %4300 = vmax.xlane.f32.xlu0 %v4299
    %v4301 = vpop.xlane.xlu0 %4300
    %v4302 = vsel %vm4262, %v4252, -inf
    %4303 = vmax.xlane.f32.xlu0 %v4302
    %v4304 = vpop.xlane.xlu0 %4303
    %v4305 = vsel %vm4262, %v4256, -inf
    %4306 = vmax.xlane.f32.xlu0 %v4305
    %v4307 = vpop.xlane.xlu0 %4306
    %v4308 = vsel %vm4262, %v4260, -inf
    %4309 = vmax.xlane.f32.xlu0 %v4308
    %v4310 = vpop.xlane.xlu0 %4309
    %v4311 = vsub.f32 %v4200, %v4265
    %v4312 = vsub.f32 %v4204, %v4268
    %v4313 = vsub.f32 %v4208, %v4271
    %v4314 = vsub.f32 %v4212, %v4274
    %v4315 = vsub.f32 %v4216, %v4277
    %v4316 = vsub.f32 %v4220, %v4280
    %v4317 = vsub.f32 %v4224, %v4283
    %v4318 = vsub.f32 %v4228, %v4286
    %v4319 = vsub.f32 %v4232, %v4289
    %v4320 = vsub.f32 %v4236, %v4292
    %v4321 = vsub.f32 %v4240, %v4295
    %v4322 = vsub.f32 %v4244, %v4298
    %v4323 = vsub.f32 %v4248, %v4301
    %v4324 = vsub.f32 %v4252, %v4304
    %v4325 = vsub.f32 %v4256, %v4307
    %v4326 = vsub.f32 %v4260, %v4310
    %v4327 = vmul.f32 %v4311, 1.442695
    %v4328 = vpow.pop %v4327
    %v4329 = vmul.f32 %v4312, 1.442695
    %v4330 = vpow.pop %v4329
    %v4331 = vmul.f32 %v4313, 1.442695
    %v4332 = vpow.pop %v4331
    %v4333 = vmul.f32 %v4314, 1.442695
    %v4334 = vpow.pop %v4333
    %v4335 = vmul.f32 %v4315, 1.442695
    %v4336 = vpow.pop %v4335
    %v4337 = vmul.f32 %v4316, 1.442695
    %v4338 = vpow.pop %v4337
    %v4339 = vmul.f32 %v4317, 1.442695
    %v4340 = vpow.pop %v4339
    %v4341 = vmul.f32 %v4318, 1.442695
    %v4342 = vpow.pop %v4341
    %v4343 = vmul.f32 %v4319, 1.442695
    %v4344 = vpow.pop %v4343
    %v4345 = vmul.f32 %v4320, 1.442695
    %v4346 = vpow.pop %v4345
    %v4347 = vmul.f32 %v4321, 1.442695
    %v4348 = vpow.pop %v4347
    %v4349 = vmul.f32 %v4322, 1.442695
    %v4350 = vpow.pop %v4349
    %v4351 = vmul.f32 %v4323, 1.442695
    %v4352 = vpow.pop %v4351
    %v4353 = vmul.f32 %v4324, 1.442695
    %v4354 = vpow.pop %v4353
    %v4355 = vmul.f32 %v4325, 1.442695
    %v4356 = vpow.pop %v4355
    %v4357 = vmul.f32 %v4326, 1.442695
    %v4358 = vpow.pop %v4357
    %v4359 = vsel %vm4262, %v4328, 0.0
    %4360 = vadd.xlane.f32.xlu0 %v4359
    %v4361 = vpop.xlane.xlu0 %4360
    %v4362 = vsel %vm4262, %v4330, 0.0
    %4363 = vadd.xlane.f32.xlu0 %v4362
    %v4364 = vpop.xlane.xlu0 %4363
    %v4365 = vsel %vm4262, %v4332, 0.0
    %4366 = vadd.xlane.f32.xlu0 %v4365
    %v4367 = vpop.xlane.xlu0 %4366
    %v4368 = vsel %vm4262, %v4334, 0.0
    %4369 = vadd.xlane.f32.xlu0 %v4368
    %v4370 = vpop.xlane.xlu0 %4369
    %v4371 = vsel %vm4262, %v4336, 0.0
    %4372 = vadd.xlane.f32.xlu0 %v4371
    %v4373 = vpop.xlane.xlu0 %4372
    %v4374 = vsel %vm4262, %v4338, 0.0
    %4375 = vadd.xlane.f32.xlu0 %v4374
    %v4376 = vpop.xlane.xlu0 %4375
    %v4377 = vsel %vm4262, %v4340, 0.0
    %4378 = vadd.xlane.f32.xlu0 %v4377
    %v4379 = vpop.xlane.xlu0 %4378
    %v4380 = vsel %vm4262, %v4342, 0.0
    %4381 = vadd.xlane.f32.xlu0 %v4380
    %v4382 = vpop.xlane.xlu0 %4381
    %v4383 = vsel %vm4262, %v4344, 0.0
    %4384 = vadd.xlane.f32.xlu0 %v4383
    %v4385 = vpop.xlane.xlu0 %4384
    %v4386 = vsel %vm4262, %v4346, 0.0
    %4387 = vadd.xlane.f32.xlu0 %v4386
    %v4388 = vpop.xlane.xlu0 %4387
    %v4389 = vsel %vm4262, %v4348, 0.0
    %4390 = vadd.xlane.f32.xlu0 %v4389
    %v4391 = vpop.xlane.xlu0 %4390
    %v4392 = vsel %vm4262, %v4350, 0.0
    %4393 = vadd.xlane.f32.xlu0 %v4392
    %v4394 = vpop.xlane.xlu0 %4393
    %v4395 = vsel %vm4262, %v4352, 0.0
    %4396 = vadd.xlane.f32.xlu0 %v4395
    %v4397 = vpop.xlane.xlu0 %4396
    %v4398 = vsel %vm4262, %v4354, 0.0
    %4399 = vadd.xlane.f32.xlu0 %v4398
    %v4400 = vpop.xlane.xlu0 %4399
    %v4401 = vsel %vm4262, %v4356, 0.0
    %4402 = vadd.xlane.f32.xlu0 %v4401
    %v4403 = vpop.xlane.xlu0 %4402
    %v4404 = vsel %vm4262, %v4358, 0.0
    %4405 = vadd.xlane.f32.xlu0 %v4404
    %v4406 = vpop.xlane.xlu0 %4405
    %v4407 = vrcp.pop %v4361
    %v4408 = vmul.f32 %v4361, %v4407
    %v4409 = vsub.f32 1.0, %v4408
    %v4410 = vmul.f32 %v4407, %v4409
    %v4411 = vadd.f32 %v4407, %v4410
    %vm4412 = vweird.f32 %v4361
    %vm4413 = vweird.f32 %v4407
    %vm4414 = vmor %vm4412, %vm4413
    %v4415 = vsel %vm4414, %v4407, %v4411
    %v4416 = vand.u32 2147483647, %v4361
    %vm4417 = vcmp.eq.f32.partialorder %v4416, 8.507059e+37
    %v4418 = vand.u32 %v4361, 2147483648
    %v4419 = vor.u32 1.1754944e-38, %v4418
    %v4420 = vsel %vm4417, %v4419, %v4415
    %v4421 = vmul.f32 %v4328, %v4420
    %v4422 = vrcp.pop %v4364
    %v4423 = vmul.f32 %v4364, %v4422
    %v4424 = vsub.f32 1.0, %v4423
    %v4425 = vmul.f32 %v4422, %v4424
    %v4426 = vadd.f32 %v4422, %v4425
    %vm4427 = vweird.f32 %v4364
    %vm4428 = vweird.f32 %v4422
    %vm4429 = vmor %vm4427, %vm4428
    %v4430 = vsel %vm4429, %v4422, %v4426
    %v4431 = vand.u32 2147483647, %v4364
    %vm4432 = vcmp.eq.f32.partialorder %v4431, 8.507059e+37
    %v4433 = vand.u32 %v4364, 2147483648
    %v4434 = vor.u32 1.1754944e-38, %v4433
    %v4435 = vsel %vm4432, %v4434, %v4430
    %v4436 = vmul.f32 %v4330, %v4435
    %v4437 = vrcp.pop %v4367
    %v4438 = vmul.f32 %v4367, %v4437
    %v4439 = vsub.f32 1.0, %v4438
    %v4440 = vmul.f32 %v4437, %v4439
    %v4441 = vadd.f32 %v4437, %v4440
    %vm4442 = vweird.f32 %v4367
    %vm4443 = vweird.f32 %v4437
    %vm4444 = vmor %vm4442, %vm4443
    %v4445 = vsel %vm4444, %v4437, %v4441
    %v4446 = vand.u32 2147483647, %v4367
    %vm4447 = vcmp.eq.f32.partialorder %v4446, 8.507059e+37
    %v4448 = vand.u32 %v4367, 2147483648
    %v4449 = vor.u32 1.1754944e-38, %v4448
    %v4450 = vsel %vm4447, %v4449, %v4445
    %v4451 = vmul.f32 %v4332, %v4450
    %v4452 = vrcp.pop %v4370
    %v4453 = vmul.f32 %v4370, %v4452
    %v4454 = vsub.f32 1.0, %v4453
    %v4455 = vmul.f32 %v4452, %v4454
    %v4456 = vadd.f32 %v4452, %v4455
    %vm4457 = vweird.f32 %v4370
    %vm4458 = vweird.f32 %v4452
    %vm4459 = vmor %vm4457, %vm4458
    %v4460 = vsel %vm4459, %v4452, %v4456
    %v4461 = vand.u32 2147483647, %v4370
    %vm4462 = vcmp.eq.f32.partialorder %v4461, 8.507059e+37
    %v4463 = vand.u32 %v4370, 2147483648
    %v4464 = vor.u32 1.1754944e-38, %v4463
    %v4465 = vsel %vm4462, %v4464, %v4460
    %v4466 = vmul.f32 %v4334, %v4465
    %v4467 = vrcp.pop %v4373
    %v4468 = vmul.f32 %v4373, %v4467
    %v4469 = vsub.f32 1.0, %v4468
    %v4470 = vmul.f32 %v4467, %v4469
    %v4471 = vadd.f32 %v4467, %v4470
    %vm4472 = vweird.f32 %v4373
    %vm4473 = vweird.f32 %v4467
    %vm4474 = vmor %vm4472, %vm4473
    %v4475 = vsel %vm4474, %v4467, %v4471
    %v4476 = vand.u32 2147483647, %v4373
    %vm4477 = vcmp.eq.f32.partialorder %v4476, 8.507059e+37
    %v4478 = vand.u32 %v4373, 2147483648
    %v4479 = vor.u32 1.1754944e-38, %v4478
    %v4480 = vsel %vm4477, %v4479, %v4475
    %v4481 = vmul.f32 %v4336, %v4480
    %v4482 = vrcp.pop %v4376
    %v4483 = vmul.f32 %v4376, %v4482
    %v4484 = vsub.f32 1.0, %v4483
    %v4485 = vmul.f32 %v4482, %v4484
    %v4486 = vadd.f32 %v4482, %v4485
    %vm4487 = vweird.f32 %v4376
    %vm4488 = vweird.f32 %v4482
    %vm4489 = vmor %vm4487, %vm4488
    %v4490 = vsel %vm4489, %v4482, %v4486
    %v4491 = vand.u32 2147483647, %v4376
    %vm4492 = vcmp.eq.f32.partialorder %v4491, 8.507059e+37
    %v4493 = vand.u32 %v4376, 2147483648
    %v4494 = vor.u32 1.1754944e-38, %v4493
    %v4495 = vsel %vm4492, %v4494, %v4490
    %v4496 = vmul.f32 %v4338, %v4495
    %v4497 = vrcp.pop %v4379
    %v4498 = vmul.f32 %v4379, %v4497
    %v4499 = vsub.f32 1.0, %v4498
    %v4500 = vmul.f32 %v4497, %v4499
    %v4501 = vadd.f32 %v4497, %v4500
    %vm4502 = vweird.f32 %v4379
    %vm4503 = vweird.f32 %v4497
    %vm4504 = vmor %vm4502, %vm4503
    %v4505 = vsel %vm4504, %v4497, %v4501
    %v4506 = vand.u32 2147483647, %v4379
    %vm4507 = vcmp.eq.f32.partialorder %v4506, 8.507059e+37
    %v4508 = vand.u32 %v4379, 2147483648
    %v4509 = vor.u32 1.1754944e-38, %v4508
    %v4510 = vsel %vm4507, %v4509, %v4505
    %v4511 = vmul.f32 %v4340, %v4510
    %v4512 = vrcp.pop %v4382
    %v4513 = vmul.f32 %v4382, %v4512
    %v4514 = vsub.f32 1.0, %v4513
    %v4515 = vmul.f32 %v4512, %v4514
    %v4516 = vadd.f32 %v4512, %v4515
    %vm4517 = vweird.f32 %v4382
    %vm4518 = vweird.f32 %v4512
    %vm4519 = vmor %vm4517, %vm4518
    %v4520 = vsel %vm4519, %v4512, %v4516
    %v4521 = vand.u32 2147483647, %v4382
    %vm4522 = vcmp.eq.f32.partialorder %v4521, 8.507059e+37
    %v4523 = vand.u32 %v4382, 2147483648
    %v4524 = vor.u32 1.1754944e-38, %v4523
    %v4525 = vsel %vm4522, %v4524, %v4520
    %v4526 = vmul.f32 %v4342, %v4525
    %v4527 = vrcp.pop %v4385
    %v4528 = vmul.f32 %v4385, %v4527
    %v4529 = vsub.f32 1.0, %v4528
    %v4530 = vmul.f32 %v4527, %v4529
    %v4531 = vadd.f32 %v4527, %v4530
    %vm4532 = vweird.f32 %v4385
    %vm4533 = vweird.f32 %v4527
    %vm4534 = vmor %vm4532, %vm4533
    %v4535 = vsel %vm4534, %v4527, %v4531
    %v4536 = vand.u32 2147483647, %v4385
    %vm4537 = vcmp.eq.f32.partialorder %v4536, 8.507059e+37
    %v4538 = vand.u32 %v4385, 2147483648
    %v4539 = vor.u32 1.1754944e-38, %v4538
    %v4540 = vsel %vm4537, %v4539, %v4535
    %v4541 = vmul.f32 %v4344, %v4540
    %v4542 = vrcp.pop %v4388
    %v4543 = vmul.f32 %v4388, %v4542
    %v4544 = vsub.f32 1.0, %v4543
    %v4545 = vmul.f32 %v4542, %v4544
    %v4546 = vadd.f32 %v4542, %v4545
    %vm4547 = vweird.f32 %v4388
    %vm4548 = vweird.f32 %v4542
    %vm4549 = vmor %vm4547, %vm4548
    %v4550 = vsel %vm4549, %v4542, %v4546
    %v4551 = vand.u32 2147483647, %v4388
    %vm4552 = vcmp.eq.f32.partialorder %v4551, 8.507059e+37
    %v4553 = vand.u32 %v4388, 2147483648
    %v4554 = vor.u32 1.1754944e-38, %v4553
    %v4555 = vsel %vm4552, %v4554, %v4550
    %v4556 = vmul.f32 %v4346, %v4555
    %v4557 = vrcp.pop %v4391
    %v4558 = vmul.f32 %v4391, %v4557
    %v4559 = vsub.f32 1.0, %v4558
    %v4560 = vmul.f32 %v4557, %v4559
    %v4561 = vadd.f32 %v4557, %v4560
    %vm4562 = vweird.f32 %v4391
    %vm4563 = vweird.f32 %v4557
    %vm4564 = vmor %vm4562, %vm4563
    %v4565 = vsel %vm4564, %v4557, %v4561
    %v4566 = vand.u32 2147483647, %v4391
    %vm4567 = vcmp.eq.f32.partialorder %v4566, 8.507059e+37
    %v4568 = vand.u32 %v4391, 2147483648
    %v4569 = vor.u32 1.1754944e-38, %v4568
    %v4570 = vsel %vm4567, %v4569, %v4565
    %v4571 = vmul.f32 %v4348, %v4570
    %v4572 = vrcp.pop %v4394
    %v4573 = vmul.f32 %v4394, %v4572
    %v4574 = vsub.f32 1.0, %v4573
    %v4575 = vmul.f32 %v4572, %v4574
    %v4576 = vadd.f32 %v4572, %v4575
    %vm4577 = vweird.f32 %v4394
    %vm4578 = vweird.f32 %v4572
    %vm4579 = vmor %vm4577, %vm4578
    %v4580 = vsel %vm4579, %v4572, %v4576
    %v4581 = vand.u32 2147483647, %v4394
    %vm4582 = vcmp.eq.f32.partialorder %v4581, 8.507059e+37
    %v4583 = vand.u32 %v4394, 2147483648
    %v4584 = vor.u32 1.1754944e-38, %v4583
    %v4585 = vsel %vm4582, %v4584, %v4580
    %v4586 = vmul.f32 %v4350, %v4585
    %v4587 = vrcp.pop %v4397
    %v4588 = vmul.f32 %v4397, %v4587
    %v4589 = vsub.f32 1.0, %v4588
    %v4590 = vmul.f32 %v4587, %v4589
    %v4591 = vadd.f32 %v4587, %v4590
    %vm4592 = vweird.f32 %v4397
    %vm4593 = vweird.f32 %v4587
    %vm4594 = vmor %vm4592, %vm4593
    %v4595 = vsel %vm4594, %v4587, %v4591
    %v4596 = vand.u32 2147483647, %v4397
    %vm4597 = vcmp.eq.f32.partialorder %v4596, 8.507059e+37
    %v4598 = vand.u32 %v4397, 2147483648
    %v4599 = vor.u32 1.1754944e-38, %v4598
    %v4600 = vsel %vm4597, %v4599, %v4595
    %v4601 = vmul.f32 %v4352, %v4600
    %v4602 = vrcp.pop %v4400
    %v4603 = vmul.f32 %v4400, %v4602
    %v4604 = vsub.f32 1.0, %v4603
    %v4605 = vmul.f32 %v4602, %v4604
    %v4606 = vadd.f32 %v4602, %v4605
    %vm4607 = vweird.f32 %v4400
    %vm4608 = vweird.f32 %v4602
    %vm4609 = vmor %vm4607, %vm4608
    %v4610 = vsel %vm4609, %v4602, %v4606
    %v4611 = vand.u32 2147483647, %v4400
    %vm4612 = vcmp.eq.f32.partialorder %v4611, 8.507059e+37
    %v4613 = vand.u32 %v4400, 2147483648
    %v4614 = vor.u32 1.1754944e-38, %v4613
    %v4615 = vsel %vm4612, %v4614, %v4610
    %v4616 = vmul.f32 %v4354, %v4615
    %v4617 = vrcp.pop %v4403
    %v4618 = vmul.f32 %v4403, %v4617
    %v4619 = vsub.f32 1.0, %v4618
    %v4620 = vmul.f32 %v4617, %v4619
    %v4621 = vadd.f32 %v4617, %v4620
    %vm4622 = vweird.f32 %v4403
    %vm4623 = vweird.f32 %v4617
    %vm4624 = vmor %vm4622, %vm4623
    %v4625 = vsel %vm4624, %v4617, %v4621
    %v4626 = vand.u32 2147483647, %v4403
    %vm4627 = vcmp.eq.f32.partialorder %v4626, 8.507059e+37
    %v4628 = vand.u32 %v4403, 2147483648
    %v4629 = vor.u32 1.1754944e-38, %v4628
    %v4630 = vsel %vm4627, %v4629, %v4625
    %v4631 = vmul.f32 %v4356, %v4630
    %v4632 = vrcp.pop %v4406
    %v4633 = vmul.f32 %v4406, %v4632
    %v4634 = vsub.f32 1.0, %v4633
    %v4635 = vmul.f32 %v4632, %v4634
    %v4636 = vadd.f32 %v4632, %v4635
    %vm4637 = vweird.f32 %v4406
    %vm4638 = vweird.f32 %v4632
    %vm4639 = vmor %vm4637, %vm4638
    %v4640 = vsel %vm4639, %v4632, %v4636
    %v4641 = vand.u32 2147483647, %v4406
    %vm4642 = vcmp.eq.f32.partialorder %v4641, 8.507059e+37
    %v4643 = vand.u32 %v4406, 2147483648
    %v4644 = vor.u32 1.1754944e-38, %v4643
    %v4645 = vsel %vm4642, %v4644, %v4640
    %v4646 = vmul.f32 %v4358, %v4645
    %v4648 = vsel %vm4262, %v4421, 0
    %v4651 = vsel %vm4262, %v4436, 0
    %v4654 = vsel %vm4262, %v4451, 0
    %v4657 = vsel %vm4262, %v4466, 0
    %v4660 = vsel %vm4262, %v4481, 0
    %v4663 = vsel %vm4262, %v4496, 0
    %v4666 = vsel %vm4262, %v4511, 0
    %v4669 = vsel %vm4262, %v4526, 0
    %v4672 = vsel %vm4262, %v4541, 0
    %v4675 = vsel %vm4262, %v4556, 0
    %v4678 = vsel %vm4262, %v4571, 0
    %v4681 = vsel %vm4262, %v4586, 0
    %v4684 = vsel %vm4262, %v4601, 0
    %v4687 = vsel %vm4262, %v4616, 0
    %v4690 = vsel %vm4262, %v4631, 0
    %v4693 = vsel %vm4262, %v4646, 0
    %4695 = vmatpush.msra.mxu0 0.0
    %4696 = vmatpush.msra.mxu0 0.0
    %4697 = vmatpush.msra.mxu0 0.0
    %4698 = vmatpush.msra.mxu0 0.0
    %4699 = vmatpush.msra.mxu0 0.0
    %4700 = vmatpush.msra.mxu0 0.0
    %4701 = vmatpush.msra.mxu0 0.0
    %4702 = vmatpush.msra.mxu0 0.0
    %4703 = vmatpush.msra.mxu0 0.0
    %4704 = vmatpush.msra.mxu0 0.0
    %4705 = vmatpush.msra.mxu0 0.0
    %4706 = vmatpush.msra.mxu0 0.0
    %4707 = vmatpush.msra.mxu0 0.0
    %4708 = vmatpush.msra.mxu0 0.0
    %v4709 = vand.u32 %v3534, 4294901760
    %4710 = vmatpush.msra.mxu0 %v4709
    %v4711 = vand.u32 %v3530, 4294901760
    %4712 = vmatpush.msra.mxu0 %v4711
    %v4713 = vand.u32 %v4648, 4294901760
    %v4714 = vsub.f32 %v4648, %v4713
    %v4715 = vand.u32 %v4714, 4294901760
    %v4716 = vsub.f32 %v4714, %v4715
    %v4717 = vand.u32 %v4716, 4294901760
    %4718 = vmatmul.f32.gmra.mxu0 %v4717
    %v4719 = vpop.f32.mrf.mxu0
    %v4720 = vadd.f32 0.0, %v4719
    %v4721 = vand.u32 %v4651, 4294901760
    %v4722 = vsub.f32 %v4651, %v4721
    %v4723 = vand.u32 %v4722, 4294901760
    %v4724 = vsub.f32 %v4722, %v4723
    %v4725 = vand.u32 %v4724, 4294901760
    %4726 = vmatmul.f32.gmra.mxu0 %v4725
    %v4727 = vpop.f32.mrf.mxu0
    %v4728 = vadd.f32 0.0, %v4727
    %v4729 = vand.u32 %v4654, 4294901760
    %v4730 = vsub.f32 %v4654, %v4729
    %v4731 = vand.u32 %v4730, 4294901760
    %v4732 = vsub.f32 %v4730, %v4731
    %v4733 = vand.u32 %v4732, 4294901760
    %4734 = vmatmul.f32.gmra.mxu0 %v4733
    %v4735 = vpop.f32.mrf.mxu0
    %v4736 = vadd.f32 0.0, %v4735
    %v4737 = vand.u32 %v4657, 4294901760
    %v4738 = vsub.f32 %v4657, %v4737
    %v4739 = vand.u32 %v4738, 4294901760
    %v4740 = vsub.f32 %v4738, %v4739
    %v4741 = vand.u32 %v4740, 4294901760
    %4742 = vmatmul.f32.gmra.mxu0 %v4741
    %v4743 = vpop.f32.mrf.mxu0
    %v4744 = vadd.f32 0.0, %v4743
    %v4745 = vand.u32 %v4660, 4294901760
    %v4746 = vsub.f32 %v4660, %v4745
    %v4747 = vand.u32 %v4746, 4294901760
    %v4748 = vsub.f32 %v4746, %v4747
    %v4749 = vand.u32 %v4748, 4294901760
    %4750 = vmatmul.f32.gmra.mxu0 %v4749
    %v4751 = vpop.f32.mrf.mxu0
    %v4752 = vadd.f32 0.0, %v4751
    %v4753 = vand.u32 %v4663, 4294901760
    %v4754 = vsub.f32 %v4663, %v4753
    %v4755 = vand.u32 %v4754, 4294901760
    %v4756 = vsub.f32 %v4754, %v4755
    %v4757 = vand.u32 %v4756, 4294901760
    %4758 = vmatmul.f32.gmra.mxu0 %v4757
    %v4759 = vpop.f32.mrf.mxu0
    %v4760 = vadd.f32 0.0, %v4759
    %v4761 = vand.u32 %v4666, 4294901760
    %v4762 = vsub.f32 %v4666, %v4761
    %v4763 = vand.u32 %v4762, 4294901760
    %v4764 = vsub.f32 %v4762, %v4763
    %v4765 = vand.u32 %v4764, 4294901760
    %4766 = vmatmul.f32.gmra.mxu0 %v4765
    %v4767 = vpop.f32.mrf.mxu0
    %v4768 = vadd.f32 0.0, %v4767
    %v4769 = vand.u32 %v4669, 4294901760
    %v4770 = vsub.f32 %v4669, %v4769
    %v4771 = vand.u32 %v4770, 4294901760
    %v4772 = vsub.f32 %v4770, %v4771
    %v4773 = vand.u32 %v4772, 4294901760
    %4774 = vmatmul.f32.gmra.mxu0 %v4773
    %v4775 = vpop.f32.mrf.mxu0
    %v4776 = vadd.f32 0.0, %v4775
    %v4777 = vand.u32 %v4672, 4294901760
    %v4778 = vsub.f32 %v4672, %v4777
    %v4779 = vand.u32 %v4778, 4294901760
    %v4780 = vsub.f32 %v4778, %v4779
    %v4781 = vand.u32 %v4780, 4294901760
    %4782 = vmatmul.f32.gmra.mxu0 %v4781
    %v4783 = vpop.f32.mrf.mxu0
    %v4784 = vadd.f32 0.0, %v4783
    %v4785 = vand.u32 %v4675, 4294901760
    %v4786 = vsub.f32 %v4675, %v4785
    %v4787 = vand.u32 %v4786, 4294901760
    %v4788 = vsub.f32 %v4786, %v4787
    %v4789 = vand.u32 %v4788, 4294901760
    %4790 = vmatmul.f32.gmra.mxu0 %v4789
    %v4791 = vpop.f32.mrf.mxu0
    %v4792 = vadd.f32 0.0, %v4791
    %v4793 = vand.u32 %v4678, 4294901760
    %v4794 = vsub.f32 %v4678, %v4793
    %v4795 = vand.u32 %v4794, 4294901760
    %v4796 = vsub.f32 %v4794, %v4795
    %v4797 = vand.u32 %v4796, 4294901760
    %4798 = vmatmul.f32.gmra.mxu0 %v4797
    %v4799 = vpop.f32.mrf.mxu0
    %v4800 = vadd.f32 0.0, %v4799
    %v4801 = vand.u32 %v4681, 4294901760
    %v4802 = vsub.f32 %v4681, %v4801
    %v4803 = vand.u32 %v4802, 4294901760
    %v4804 = vsub.f32 %v4802, %v4803
    %v4805 = vand.u32 %v4804, 4294901760
    %4806 = vmatmul.f32.gmra.mxu0 %v4805
    %v4807 = vpop.f32.mrf.mxu0
    %v4808 = vadd.f32 0.0, %v4807
    %v4809 = vand.u32 %v4684, 4294901760
    %v4810 = vsub.f32 %v4684, %v4809
    %v4811 = vand.u32 %v4810, 4294901760
    %v4812 = vsub.f32 %v4810, %v4811
    %v4813 = vand.u32 %v4812, 4294901760
    %4814 = vmatmul.f32.gmra.mxu0 %v4813
    %v4815 = vpop.f32.mrf.mxu0
    %v4816 = vadd.f32 0.0, %v4815
    %v4817 = vand.u32 %v4687, 4294901760
    %v4818 = vsub.f32 %v4687, %v4817
    %v4819 = vand.u32 %v4818, 4294901760
    %v4820 = vsub.f32 %v4818, %v4819
    %v4821 = vand.u32 %v4820, 4294901760
    %4822 = vmatmul.f32.gmra.mxu0 %v4821
    %v4823 = vpop.f32.mrf.mxu0
    %v4824 = vadd.f32 0.0, %v4823
    %v4825 = vand.u32 %v4690, 4294901760
    %v4826 = vsub.f32 %v4690, %v4825
    %v4827 = vand.u32 %v4826, 4294901760
    %v4828 = vsub.f32 %v4826, %v4827
    %v4829 = vand.u32 %v4828, 4294901760
    %4830 = vmatmul.f32.gmra.mxu0 %v4829
    %v4831 = vpop.f32.mrf.mxu0
    %v4832 = vadd.f32 0.0, %v4831
    %v4833 = vand.u32 %v4693, 4294901760
    %v4834 = vsub.f32 %v4693, %v4833
    %v4835 = vand.u32 %v4834, 4294901760
    %v4836 = vsub.f32 %v4834, %v4835
    %v4837 = vand.u32 %v4836, 4294901760
    %4838 = vmatmul.f32.gmra.mxu0 %v4837
    %v4839 = vpop.f32.mrf.mxu0
    %v4840 = vadd.f32 0.0, %v4839
    %4841 = vdwg.mxu0
    %4842 = vmatpush.msra.mxu0 0.0
    %4843 = vmatpush.msra.mxu0 0.0
    %4844 = vmatpush.msra.mxu0 0.0
    %4845 = vmatpush.msra.mxu0 0.0
    %4846 = vmatpush.msra.mxu0 0.0
    %4847 = vmatpush.msra.mxu0 0.0
    %4848 = vmatpush.msra.mxu0 0.0
    %4849 = vmatpush.msra.mxu0 0.0
    %4850 = vmatpush.msra.mxu0 0.0
    %4851 = vmatpush.msra.mxu0 0.0
    %4852 = vmatpush.msra.mxu0 0.0
    %4853 = vmatpush.msra.mxu0 0.0
    %4854 = vmatpush.msra.mxu0 0.0
    %4855 = vmatpush.msra.mxu0 0.0
    %v4856 = vand.u32 %v3534, 4294901760
    %v4857 = vsub.f32 %v3534, %v4856
    %v4858 = vand.u32 %v4857, 4294901760
    %v4859 = vsub.f32 %v4857, %v4858
    %v4860 = vand.u32 %v4859, 4294901760
    %4861 = vmatpush.msra.mxu0 %v4860
    %v4862 = vand.u32 %v3530, 4294901760
    %v4863 = vsub.f32 %v3530, %v4862
    %v4864 = vand.u32 %v4863, 4294901760
    %v4865 = vsub.f32 %v4863, %v4864
    %v4866 = vand.u32 %v4865, 4294901760
    %4867 = vmatpush.msra.mxu0 %v4866
    %v4868 = vand.u32 %v4648, 4294901760
    %4869 = vmatmul.f32.gmra.mxu0 %v4868
    %v4870 = vpop.f32.mrf.mxu0
    %v4871 = vadd.f32 %v4720, %v4870
    %v4872 = vand.u32 %v4651, 4294901760
    %4873 = vmatmul.f32.gmra.mxu0 %v4872
    %v4874 = vpop.f32.mrf.mxu0
    %v4875 = vadd.f32 %v4728, %v4874
    %v4876 = vand.u32 %v4654, 4294901760
    %4877 = vmatmul.f32.gmra.mxu0 %v4876
    %v4878 = vpop.f32.mrf.mxu0
    %v4879 = vadd.f32 %v4736, %v4878
    %v4880 = vand.u32 %v4657, 4294901760
    %4881 = vmatmul.f32.gmra.mxu0 %v4880
    %v4882 = vpop.f32.mrf.mxu0
    %v4883 = vadd.f32 %v4744, %v4882
    %v4884 = vand.u32 %v4660, 4294901760
    %4885 = vmatmul.f32.gmra.mxu0 %v4884
    %v4886 = vpop.f32.mrf.mxu0
    %v4887 = vadd.f32 %v4752, %v4886
    %v4888 = vand.u32 %v4663, 4294901760
    %4889 = vmatmul.f32.gmra.mxu0 %v4888
    %v4890 = vpop.f32.mrf.mxu0
    %v4891 = vadd.f32 %v4760, %v4890
    %v4892 = vand.u32 %v4666, 4294901760
    %4893 = vmatmul.f32.gmra.mxu0 %v4892
    %v4894 = vpop.f32.mrf.mxu0
    %v4895 = vadd.f32 %v4768, %v4894
    %v4896 = vand.u32 %v4669, 4294901760
    %4897 = vmatmul.f32.gmra.mxu0 %v4896
    %v4898 = vpop.f32.mrf.mxu0
    %v4899 = vadd.f32 %v4776, %v4898
    %v4900 = vand.u32 %v4672, 4294901760
    %4901 = vmatmul.f32.gmra.mxu0 %v4900
    %v4902 = vpop.f32.mrf.mxu0
    %v4903 = vadd.f32 %v4784, %v4902
    %v4904 = vand.u32 %v4675, 4294901760
    %4905 = vmatmul.f32.gmra.mxu0 %v4904
    %v4906 = vpop.f32.mrf.mxu0
    %v4907 = vadd.f32 %v4792, %v4906
    %v4908 = vand.u32 %v4678, 4294901760
    %4909 = vmatmul.f32.gmra.mxu0 %v4908
    %v4910 = vpop.f32.mrf.mxu0
    %v4911 = vadd.f32 %v4800, %v4910
    %v4912 = vand.u32 %v4681, 4294901760
    %4913 = vmatmul.f32.gmra.mxu0 %v4912
    %v4914 = vpop.f32.mrf.mxu0
    %v4915 = vadd.f32 %v4808, %v4914
    %v4916 = vand.u32 %v4684, 4294901760
    %4917 = vmatmul.f32.gmra.mxu0 %v4916
    %v4918 = vpop.f32.mrf.mxu0
    %v4919 = vadd.f32 %v4816, %v4918
    %v4920 = vand.u32 %v4687, 4294901760
    %4921 = vmatmul.f32.gmra.mxu0 %v4920
    %v4922 = vpop.f32.mrf.mxu0
    %v4923 = vadd.f32 %v4824, %v4922
    %v4924 = vand.u32 %v4690, 4294901760
    %4925 = vmatmul.f32.gmra.mxu0 %v4924
    %v4926 = vpop.f32.mrf.mxu0
    %v4927 = vadd.f32 %v4832, %v4926
    %v4928 = vand.u32 %v4693, 4294901760
    %4929 = vmatmul.f32.gmra.mxu0 %v4928
    %v4930 = vpop.f32.mrf.mxu0
    %v4931 = vadd.f32 %v4840, %v4930
    %4932 = vdwg.mxu0
    %4933 = vmatpush.msra.mxu0 0.0
    %4934 = vmatpush.msra.mxu0 0.0
    %4935 = vmatpush.msra.mxu0 0.0
    %4936 = vmatpush.msra.mxu0 0.0
    %4937 = vmatpush.msra.mxu0 0.0
    %4938 = vmatpush.msra.mxu0 0.0
    %4939 = vmatpush.msra.mxu0 0.0
    %4940 = vmatpush.msra.mxu0 0.0
    %4941 = vmatpush.msra.mxu0 0.0
    %4942 = vmatpush.msra.mxu0 0.0
    %4943 = vmatpush.msra.mxu0 0.0
    %4944 = vmatpush.msra.mxu0 0.0
    %4945 = vmatpush.msra.mxu0 0.0
    %4946 = vmatpush.msra.mxu0 0.0
    %v4947 = vand.u32 %v3534, 4294901760
    %v4948 = vsub.f32 %v3534, %v4947
    %4949 = vmatpush.msra.mxu0 %v4948
    %v4950 = vand.u32 %v3530, 4294901760
    %v4951 = vsub.f32 %v3530, %v4950
    %4952 = vmatpush.msra.mxu0 %v4951
    %v4953 = vand.u32 %v4648, 4294901760
    %v4954 = vsub.f32 %v4648, %v4953
    %4955 = vmatmul.f32.gmra.mxu0 %v4954
    %v4956 = vpop.f32.mrf.mxu0
    %v4957 = vadd.f32 %v4871, %v4956
    %v4958 = vand.u32 %v4651, 4294901760
    %v4959 = vsub.f32 %v4651, %v4958
    %4960 = vmatmul.f32.gmra.mxu0 %v4959
    %v4961 = vpop.f32.mrf.mxu0
    %v4962 = vadd.f32 %v4875, %v4961
    %v4963 = vand.u32 %v4654, 4294901760
    %v4964 = vsub.f32 %v4654, %v4963
    %4965 = vmatmul.f32.gmra.mxu0 %v4964
    %v4966 = vpop.f32.mrf.mxu0
    %v4967 = vadd.f32 %v4879, %v4966
    %v4968 = vand.u32 %v4657, 4294901760
    %v4969 = vsub.f32 %v4657, %v4968
    %4970 = vmatmul.f32.gmra.mxu0 %v4969
    %v4971 = vpop.f32.mrf.mxu0
    %v4972 = vadd.f32 %v4883, %v4971
    %v4973 = vand.u32 %v4660, 4294901760
    %v4974 = vsub.f32 %v4660, %v4973
    %4975 = vmatmul.f32.gmra.mxu0 %v4974
    %v4976 = vpop.f32.mrf.mxu0
    %v4977 = vadd.f32 %v4887, %v4976
    %v4978 = vand.u32 %v4663, 4294901760
    %v4979 = vsub.f32 %v4663, %v4978
    %4980 = vmatmul.f32.gmra.mxu0 %v4979
    %v4981 = vpop.f32.mrf.mxu0
    %v4982 = vadd.f32 %v4891, %v4981
    %v4983 = vand.u32 %v4666, 4294901760
    %v4984 = vsub.f32 %v4666, %v4983
    %4985 = vmatmul.f32.gmra.mxu0 %v4984
    %v4986 = vpop.f32.mrf.mxu0
    %v4987 = vadd.f32 %v4895, %v4986
    %v4988 = vand.u32 %v4669, 4294901760
    %v4989 = vsub.f32 %v4669, %v4988
    %4990 = vmatmul.f32.gmra.mxu0 %v4989
    %v4991 = vpop.f32.mrf.mxu0
    %v4992 = vadd.f32 %v4899, %v4991
    %v4993 = vand.u32 %v4672, 4294901760
    %v4994 = vsub.f32 %v4672, %v4993
    %4995 = vmatmul.f32.gmra.mxu0 %v4994
    %v4996 = vpop.f32.mrf.mxu0
    %v4997 = vadd.f32 %v4903, %v4996
    %v4998 = vand.u32 %v4675, 4294901760
    %v4999 = vsub.f32 %v4675, %v4998
    %5000 = vmatmul.f32.gmra.mxu0 %v4999
    %v5001 = vpop.f32.mrf.mxu0
    %v5002 = vadd.f32 %v4907, %v5001
    %v5003 = vand.u32 %v4678, 4294901760
    %v5004 = vsub.f32 %v4678, %v5003
    %5005 = vmatmul.f32.gmra.mxu0 %v5004
    %v5006 = vpop.f32.mrf.mxu0
    %v5007 = vadd.f32 %v4911, %v5006
    %v5008 = vand.u32 %v4681, 4294901760
    %v5009 = vsub.f32 %v4681, %v5008
    %5010 = vmatmul.f32.gmra.mxu0 %v5009
    %v5011 = vpop.f32.mrf.mxu0
    %v5012 = vadd.f32 %v4915, %v5011
    %v5013 = vand.u32 %v4684, 4294901760
    %v5014 = vsub.f32 %v4684, %v5013
    %5015 = vmatmul.f32.gmra.mxu0 %v5014
    %v5016 = vpop.f32.mrf.mxu0
    %v5017 = vadd.f32 %v4919, %v5016
    %v5018 = vand.u32 %v4687, 4294901760
    %v5019 = vsub.f32 %v4687, %v5018
    %5020 = vmatmul.f32.gmra.mxu0 %v5019
    %v5021 = vpop.f32.mrf.mxu0
    %v5022 = vadd.f32 %v4923, %v5021
    %v5023 = vand.u32 %v4690, 4294901760
    %v5024 = vsub.f32 %v4690, %v5023
    %5025 = vmatmul.f32.gmra.mxu0 %v5024
    %v5026 = vpop.f32.mrf.mxu0
    %v5027 = vadd.f32 %v4927, %v5026
    %v5028 = vand.u32 %v4693, 4294901760
    %v5029 = vsub.f32 %v4693, %v5028
    %5030 = vmatmul.f32.gmra.mxu0 %v5029
    %v5031 = vpop.f32.mrf.mxu0
    %v5032 = vadd.f32 %v4931, %v5031
    %5033 = vdwg.mxu0
    %5034 = vmatpush.msra.mxu0 0.0
    %5035 = vmatpush.msra.mxu0 0.0
    %5036 = vmatpush.msra.mxu0 0.0
    %5037 = vmatpush.msra.mxu0 0.0
    %5038 = vmatpush.msra.mxu0 0.0
    %5039 = vmatpush.msra.mxu0 0.0
    %5040 = vmatpush.msra.mxu0 0.0
    %5041 = vmatpush.msra.mxu0 0.0
    %5042 = vmatpush.msra.mxu0 0.0
    %5043 = vmatpush.msra.mxu0 0.0
    %5044 = vmatpush.msra.mxu0 0.0
    %5045 = vmatpush.msra.mxu0 0.0
    %5046 = vmatpush.msra.mxu0 0.0
    %5047 = vmatpush.msra.mxu0 0.0
    %v5048 = vand.u32 %v3534, 4294901760
    %5049 = vmatpush.msra.mxu0 %v5048
    %v5050 = vand.u32 %v3530, 4294901760
    %5051 = vmatpush.msra.mxu0 %v5050
    %v5052 = vand.u32 %v4648, 4294901760
    %v5053 = vsub.f32 %v4648, %v5052
    %v5054 = vand.u32 %v5053, 4294901760
    %5055 = vmatmul.f32.gmra.mxu0 %v5054
    %v5056 = vpop.f32.mrf.mxu0
    %v5057 = vadd.f32 %v4957, %v5056
    %v5058 = vand.u32 %v4651, 4294901760
    %v5059 = vsub.f32 %v4651, %v5058
    %v5060 = vand.u32 %v5059, 4294901760
    %5061 = vmatmul.f32.gmra.mxu0 %v5060
    %v5062 = vpop.f32.mrf.mxu0
    %v5063 = vadd.f32 %v4962, %v5062
    %v5064 = vand.u32 %v4654, 4294901760
    %v5065 = vsub.f32 %v4654, %v5064
    %v5066 = vand.u32 %v5065, 4294901760
    %5067 = vmatmul.f32.gmra.mxu0 %v5066
    %v5068 = vpop.f32.mrf.mxu0
    %v5069 = vadd.f32 %v4967, %v5068
    %v5070 = vand.u32 %v4657, 4294901760
    %v5071 = vsub.f32 %v4657, %v5070
    %v5072 = vand.u32 %v5071, 4294901760
    %5073 = vmatmul.f32.gmra.mxu0 %v5072
    %v5074 = vpop.f32.mrf.mxu0
    %v5075 = vadd.f32 %v4972, %v5074
    %v5076 = vand.u32 %v4660, 4294901760
    %v5077 = vsub.f32 %v4660, %v5076
    %v5078 = vand.u32 %v5077, 4294901760
    %5079 = vmatmul.f32.gmra.mxu0 %v5078
    %v5080 = vpop.f32.mrf.mxu0
    %v5081 = vadd.f32 %v4977, %v5080
    %v5082 = vand.u32 %v4663, 4294901760
    %v5083 = vsub.f32 %v4663, %v5082
    %v5084 = vand.u32 %v5083, 4294901760
    %5085 = vmatmul.f32.gmra.mxu0 %v5084
    %v5086 = vpop.f32.mrf.mxu0
    %v5087 = vadd.f32 %v4982, %v5086
    %v5088 = vand.u32 %v4666, 4294901760
    %v5089 = vsub.f32 %v4666, %v5088
    %v5090 = vand.u32 %v5089, 4294901760
    %5091 = vmatmul.f32.gmra.mxu0 %v5090
    %v5092 = vpop.f32.mrf.mxu0
    %v5093 = vadd.f32 %v4987, %v5092
    %v5094 = vand.u32 %v4669, 4294901760
    %v5095 = vsub.f32 %v4669, %v5094
    %v5096 = vand.u32 %v5095, 4294901760
    %5097 = vmatmul.f32.gmra.mxu0 %v5096
    %v5098 = vpop.f32.mrf.mxu0
    %v5099 = vadd.f32 %v4992, %v5098
    %v5100 = vand.u32 %v4672, 4294901760
    %v5101 = vsub.f32 %v4672, %v5100
    %v5102 = vand.u32 %v5101, 4294901760
    %5103 = vmatmul.f32.gmra.mxu0 %v5102
    %v5104 = vpop.f32.mrf.mxu0
    %v5105 = vadd.f32 %v4997, %v5104
    %v5106 = vand.u32 %v4675, 4294901760
    %v5107 = vsub.f32 %v4675, %v5106
    %v5108 = vand.u32 %v5107, 4294901760
    %5109 = vmatmul.f32.gmra.mxu0 %v5108
    %v5110 = vpop.f32.mrf.mxu0
    %v5111 = vadd.f32 %v5002, %v5110
    %v5112 = vand.u32 %v4678, 4294901760
    %v5113 = vsub.f32 %v4678, %v5112
    %v5114 = vand.u32 %v5113, 4294901760
    %5115 = vmatmul.f32.gmra.mxu0 %v5114
    %v5116 = vpop.f32.mrf.mxu0
    %v5117 = vadd.f32 %v5007, %v5116
    %v5118 = vand.u32 %v4681, 4294901760
    %v5119 = vsub.f32 %v4681, %v5118
    %v5120 = vand.u32 %v5119, 4294901760
    %5121 = vmatmul.f32.gmra.mxu0 %v5120
    %v5122 = vpop.f32.mrf.mxu0
    %v5123 = vadd.f32 %v5012, %v5122
    %v5124 = vand.u32 %v4684, 4294901760
    %v5125 = vsub.f32 %v4684, %v5124
    %v5126 = vand.u32 %v5125, 4294901760
    %5127 = vmatmul.f32.gmra.mxu0 %v5126
    %v5128 = vpop.f32.mrf.mxu0
    %v5129 = vadd.f32 %v5017, %v5128
    %v5130 = vand.u32 %v4687, 4294901760
    %v5131 = vsub.f32 %v4687, %v5130
    %v5132 = vand.u32 %v5131, 4294901760
    %5133 = vmatmul.f32.gmra.mxu0 %v5132
    %v5134 = vpop.f32.mrf.mxu0
    %v5135 = vadd.f32 %v5022, %v5134
    %v5136 = vand.u32 %v4690, 4294901760
    %v5137 = vsub.f32 %v4690, %v5136
    %v5138 = vand.u32 %v5137, 4294901760
    %5139 = vmatmul.f32.gmra.mxu0 %v5138
    %v5140 = vpop.f32.mrf.mxu0
    %v5141 = vadd.f32 %v5027, %v5140
    %v5142 = vand.u32 %v4693, 4294901760
    %v5143 = vsub.f32 %v4693, %v5142
    %v5144 = vand.u32 %v5143, 4294901760
    %5145 = vmatmul.f32.gmra.mxu0 %v5144
    %v5146 = vpop.f32.mrf.mxu0
    %v5147 = vadd.f32 %v5032, %v5146
    %5148 = vdwg.mxu0
    %5149 = vmatpush.msra.mxu0 0.0
    %5150 = vmatpush.msra.mxu0 0.0
    %5151 = vmatpush.msra.mxu0 0.0
    %5152 = vmatpush.msra.mxu0 0.0
    %5153 = vmatpush.msra.mxu0 0.0
    %5154 = vmatpush.msra.mxu0 0.0
    %5155 = vmatpush.msra.mxu0 0.0
    %5156 = vmatpush.msra.mxu0 0.0
    %5157 = vmatpush.msra.mxu0 0.0
    %5158 = vmatpush.msra.mxu0 0.0
    %5159 = vmatpush.msra.mxu0 0.0
    %5160 = vmatpush.msra.mxu0 0.0
    %5161 = vmatpush.msra.mxu0 0.0
    %5162 = vmatpush.msra.mxu0 0.0
    %v5163 = vand.u32 %v3534, 4294901760
    %v5164 = vsub.f32 %v3534, %v5163
    %v5165 = vand.u32 %v5164, 4294901760
    %5166 = vmatpush.msra.mxu0 %v5165
    %v5167 = vand.u32 %v3530, 4294901760
    %v5168 = vsub.f32 %v3530, %v5167
    %v5169 = vand.u32 %v5168, 4294901760
    %5170 = vmatpush.msra.mxu0 %v5169
    %v5171 = vand.u32 %v4648, 4294901760
    %5172 = vmatmul.f32.gmra.mxu0 %v5171
    %v5173 = vpop.f32.mrf.mxu0
    %v5174 = vadd.f32 %v5057, %v5173
    %v5175 = vand.u32 %v4651, 4294901760
    %5176 = vmatmul.f32.gmra.mxu0 %v5175
    %v5177 = vpop.f32.mrf.mxu0
    %v5178 = vadd.f32 %v5063, %v5177
    %v5179 = vand.u32 %v4654, 4294901760
    %5180 = vmatmul.f32.gmra.mxu0 %v5179
    %v5181 = vpop.f32.mrf.mxu0
    %v5182 = vadd.f32 %v5069, %v5181
    %v5183 = vand.u32 %v4657, 4294901760
    %5184 = vmatmul.f32.gmra.mxu0 %v5183
    %v5185 = vpop.f32.mrf.mxu0
    %v5186 = vadd.f32 %v5075, %v5185
    %v5187 = vand.u32 %v4660, 4294901760
    %5188 = vmatmul.f32.gmra.mxu0 %v5187
    %v5189 = vpop.f32.mrf.mxu0
    %v5190 = vadd.f32 %v5081, %v5189
    %v5191 = vand.u32 %v4663, 4294901760
    %5192 = vmatmul.f32.gmra.mxu0 %v5191
    %v5193 = vpop.f32.mrf.mxu0
    %v5194 = vadd.f32 %v5087, %v5193
    %v5195 = vand.u32 %v4666, 4294901760
    %5196 = vmatmul.f32.gmra.mxu0 %v5195
    %v5197 = vpop.f32.mrf.mxu0
    %v5198 = vadd.f32 %v5093, %v5197
    %v5199 = vand.u32 %v4669, 4294901760
    %5200 = vmatmul.f32.gmra.mxu0 %v5199
    %v5201 = vpop.f32.mrf.mxu0
    %v5202 = vadd.f32 %v5099, %v5201
    %v5203 = vand.u32 %v4672, 4294901760
    %5204 = vmatmul.f32.gmra.mxu0 %v5203
    %v5205 = vpop.f32.mrf.mxu0
    %v5206 = vadd.f32 %v5105, %v5205
    %v5207 = vand.u32 %v4675, 4294901760
    %5208 = vmatmul.f32.gmra.mxu0 %v5207
    %v5209 = vpop.f32.mrf.mxu0
    %v5210 = vadd.f32 %v5111, %v5209
    %v5211 = vand.u32 %v4678, 4294901760
    %5212 = vmatmul.f32.gmra.mxu0 %v5211
    %v5213 = vpop.f32.mrf.mxu0
    %v5214 = vadd.f32 %v5117, %v5213
    %v5215 = vand.u32 %v4681, 4294901760
    %5216 = vmatmul.f32.gmra.mxu0 %v5215
    %v5217 = vpop.f32.mrf.mxu0
    %v5218 = vadd.f32 %v5123, %v5217
    %v5219 = vand.u32 %v4684, 4294901760
    %5220 = vmatmul.f32.gmra.mxu0 %v5219
    %v5221 = vpop.f32.mrf.mxu0
    %v5222 = vadd.f32 %v5129, %v5221
    %v5223 = vand.u32 %v4687, 4294901760
    %5224 = vmatmul.f32.gmra.mxu0 %v5223
    %v5225 = vpop.f32.mrf.mxu0
    %v5226 = vadd.f32 %v5135, %v5225
    %v5227 = vand.u32 %v4690, 4294901760
    %5228 = vmatmul.f32.gmra.mxu0 %v5227
    %v5229 = vpop.f32.mrf.mxu0
    %v5230 = vadd.f32 %v5141, %v5229
    %v5231 = vand.u32 %v4693, 4294901760
    %5232 = vmatmul.f32.gmra.mxu0 %v5231
    %v5233 = vpop.f32.mrf.mxu0
    %v5234 = vadd.f32 %v5147, %v5233
    %5235 = vdwg.mxu0
    %5236 = vmatpush.msra.mxu0 0.0
    %5237 = vmatpush.msra.mxu0 0.0
    %5238 = vmatpush.msra.mxu0 0.0
    %5239 = vmatpush.msra.mxu0 0.0
    %5240 = vmatpush.msra.mxu0 0.0
    %5241 = vmatpush.msra.mxu0 0.0
    %5242 = vmatpush.msra.mxu0 0.0
    %5243 = vmatpush.msra.mxu0 0.0
    %5244 = vmatpush.msra.mxu0 0.0
    %5245 = vmatpush.msra.mxu0 0.0
    %5246 = vmatpush.msra.mxu0 0.0
    %5247 = vmatpush.msra.mxu0 0.0
    %5248 = vmatpush.msra.mxu0 0.0
    %5249 = vmatpush.msra.mxu0 0.0
    %v5250 = vand.u32 %v3534, 4294901760
    %5251 = vmatpush.msra.mxu0 %v5250
    %v5252 = vand.u32 %v3530, 4294901760
    %5253 = vmatpush.msra.mxu0 %v5252
    %v5254 = vand.u32 %v4648, 4294901760
    %5255 = vmatmul.f32.gmra.mxu0 %v5254
    %v5256 = vpop.f32.mrf.mxu0
    %v5257 = vadd.f32 %v5174, %v5256
    %v5258 = vand.u32 %v4651, 4294901760
    %5259 = vmatmul.f32.gmra.mxu0 %v5258
    %v5260 = vpop.f32.mrf.mxu0
    %v5261 = vadd.f32 %v5178, %v5260
    %v5262 = vand.u32 %v4654, 4294901760
    %5263 = vmatmul.f32.gmra.mxu0 %v5262
    %v5264 = vpop.f32.mrf.mxu0
    %v5265 = vadd.f32 %v5182, %v5264
    %v5266 = vand.u32 %v4657, 4294901760
    %5267 = vmatmul.f32.gmra.mxu0 %v5266
    %v5268 = vpop.f32.mrf.mxu0
    %v5269 = vadd.f32 %v5186, %v5268
    %v5270 = vand.u32 %v4660, 4294901760
    %5271 = vmatmul.f32.gmra.mxu0 %v5270
    %v5272 = vpop.f32.mrf.mxu0
    %v5273 = vadd.f32 %v5190, %v5272
    %v5274 = vand.u32 %v4663, 4294901760
    %5275 = vmatmul.f32.gmra.mxu0 %v5274
    %v5276 = vpop.f32.mrf.mxu0
    %v5277 = vadd.f32 %v5194, %v5276
    %v5278 = vand.u32 %v4666, 4294901760
    %5279 = vmatmul.f32.gmra.mxu0 %v5278
    %v5280 = vpop.f32.mrf.mxu0
    %v5281 = vadd.f32 %v5198, %v5280
    %v5282 = vand.u32 %v4669, 4294901760
    %5283 = vmatmul.f32.gmra.mxu0 %v5282
    %v5284 = vpop.f32.mrf.mxu0
    %v5285 = vadd.f32 %v5202, %v5284
    %v5286 = vand.u32 %v4672, 4294901760
    %5287 = vmatmul.f32.gmra.mxu0 %v5286
    %v5288 = vpop.f32.mrf.mxu0
    %v5289 = vadd.f32 %v5206, %v5288
    %v5290 = vand.u32 %v4675, 4294901760
    %5291 = vmatmul.f32.gmra.mxu0 %v5290
    %v5292 = vpop.f32.mrf.mxu0
    %v5293 = vadd.f32 %v5210, %v5292
    %v5294 = vand.u32 %v4678, 4294901760
    %5295 = vmatmul.f32.gmra.mxu0 %v5294
    %v5296 = vpop.f32.mrf.mxu0
    %v5297 = vadd.f32 %v5214, %v5296
    %v5298 = vand.u32 %v4681, 4294901760
    %5299 = vmatmul.f32.gmra.mxu0 %v5298
    %v5300 = vpop.f32.mrf.mxu0
    %v5301 = vadd.f32 %v5218, %v5300
    %v5302 = vand.u32 %v4684, 4294901760
    %5303 = vmatmul.f32.gmra.mxu0 %v5302
    %v5304 = vpop.f32.mrf.mxu0
    %v5305 = vadd.f32 %v5222, %v5304
    %v5306 = vand.u32 %v4687, 4294901760
    %5307 = vmatmul.f32.gmra.mxu0 %v5306
    %v5308 = vpop.f32.mrf.mxu0
    %v5309 = vadd.f32 %v5226, %v5308
    %v5310 = vand.u32 %v4690, 4294901760
    %5311 = vmatmul.f32.gmra.mxu0 %v5310
    %v5312 = vpop.f32.mrf.mxu0
    %v5313 = vadd.f32 %v5230, %v5312
    %v5314 = vand.u32 %v4693, 4294901760
    %5315 = vmatmul.f32.gmra.mxu0 %v5314
    %v5316 = vpop.f32.mrf.mxu0
    %v5317 = vadd.f32 %v5234, %v5316
    %5318 = vdwg.mxu0
    %v5319 = vmul.f32 %v5257, %v3536
    %v5320 = vmul.f32 %v5261, %v3537
    %v5321 = vmul.f32 %v5265, %v3538
    %v5322 = vmul.f32 %v5269, %v3539
    %v5323 = vmul.f32 %v5273, %v3540
    %v5324 = vmul.f32 %v5277, %v3541
    %v5325 = vmul.f32 %v5281, %v3542
    %v5326 = vmul.f32 %v5285, %v3543
    %v5327 = vmul.f32 %v5289, %v3544
    %v5328 = vmul.f32 %v5293, %v3545
    %v5329 = vmul.f32 %v5297, %v3546
    %v5330 = vmul.f32 %v5301, %v3547
    %v5331 = vmul.f32 %v5305, %v3548
    %v5332 = vmul.f32 %v5309, %v3549
    %v5333 = vmul.f32 %v5313, %v3550
    %v5334 = vmul.f32 %v5317, %v3551
    %v5335 = vadd.f32 %v5319, %v5323
    %v5336 = vadd.f32 %v5320, %v5324
    %v5337 = vadd.f32 %v5321, %v5325
    %v5338 = vadd.f32 %v5322, %v5326
    %v5339 = vadd.f32 %v5335, %v5327
    %v5340 = vadd.f32 %v5336, %v5328
    %v5341 = vadd.f32 %v5337, %v5329
    %v5342 = vadd.f32 %v5338, %v5330
    %v5343 = vadd.f32 %v5339, %v5331
    %v5344 = vadd.f32 %v5340, %v5332
    %v5345 = vadd.f32 %v5341, %v5333
    %v5346 = vadd.f32 %v5342, %v5334
    %v5347 = vperm.slane %v24, 2
    %v5349 = vsel %vm29, %v5343, 0
    %v5352 = vsel %vm29, %v5344, 0
    %v5355 = vsel %vm29, %v5345, 0
    %v5358 = vsel %vm29, %v5346, 0
    %5360 = vmatpush.msra.mxu0 0.0
    %5361 = vmatpush.msra.mxu0 0.0
    %5362 = vmatpush.msra.mxu0 0.0
    %5363 = vmatpush.msra.mxu0 0.0
    %5364 = vmatpush.msra.mxu0 0.0
    %5365 = vmatpush.msra.mxu0 0.0
    %5366 = vmatpush.msra.mxu0 0.0
    %5367 = vmatpush.msra.mxu0 0.0
    %5368 = vmatpush.msra.mxu0 0.0
    %5369 = vmatpush.msra.mxu0 0.0
    %5370 = vmatpush.msra.mxu0 0.0
    %5371 = vmatpush.msra.mxu0 0.0
    %v5372 = vand.u32 %v2701, 4294901760
    %5373 = vmatpush.msra.mxu0 %v5372
    %v5374 = vand.u32 %v2700, 4294901760
    %5375 = vmatpush.msra.mxu0 %v5374
    %v5376 = vand.u32 %v2699, 4294901760
    %5377 = vmatpush.msra.mxu0 %v5376
    %v5378 = vand.u32 %v2698, 4294901760
    %5379 = vmatpush.msra.mxu0 %v5378
    %v5380 = vand.u32 %v5349, 4294901760
    %v5381 = vsub.f32 %v5349, %v5380
    %v5382 = vand.u32 %v5381, 4294901760
    %v5383 = vsub.f32 %v5381, %v5382
    %v5384 = vand.u32 %v5383, 4294901760
    %5385 = vmatmul.f32.gmra.mxu0 %v5384
    %v5386 = vpop.f32.mrf.mxu0
    %v5387 = vadd.f32 %v5347, %v5386
    %v5388 = vand.u32 %v5352, 4294901760
    %v5389 = vsub.f32 %v5352, %v5388
    %v5390 = vand.u32 %v5389, 4294901760
    %v5391 = vsub.f32 %v5389, %v5390
    %v5392 = vand.u32 %v5391, 4294901760
    %5393 = vmatmul.f32.gmra.mxu0 %v5392
    %v5394 = vpop.f32.mrf.mxu0
    %v5395 = vadd.f32 %v5347, %v5394
    %v5396 = vand.u32 %v5355, 4294901760
    %v5397 = vsub.f32 %v5355, %v5396
    %v5398 = vand.u32 %v5397, 4294901760
    %v5399 = vsub.f32 %v5397, %v5398
    %v5400 = vand.u32 %v5399, 4294901760
    %5401 = vmatmul.f32.gmra.mxu0 %v5400
    %v5402 = vpop.f32.mrf.mxu0
    %v5403 = vadd.f32 %v5347, %v5402
    %v5404 = vand.u32 %v5358, 4294901760
    %v5405 = vsub.f32 %v5358, %v5404
    %v5406 = vand.u32 %v5405, 4294901760
    %v5407 = vsub.f32 %v5405, %v5406
    %v5408 = vand.u32 %v5407, 4294901760
    %5409 = vmatmul.f32.gmra.mxu0 %v5408
    %v5410 = vpop.f32.mrf.mxu0
    %v5411 = vadd.f32 %v5347, %v5410
    %5412 = vdwg.mxu0
    %5413 = vmatpush.msra.mxu0 0.0
    %5414 = vmatpush.msra.mxu0 0.0
    %5415 = vmatpush.msra.mxu0 0.0
    %5416 = vmatpush.msra.mxu0 0.0
    %5417 = vmatpush.msra.mxu0 0.0
    %5418 = vmatpush.msra.mxu0 0.0
    %5419 = vmatpush.msra.mxu0 0.0
    %5420 = vmatpush.msra.mxu0 0.0
    %5421 = vmatpush.msra.mxu0 0.0
    %5422 = vmatpush.msra.mxu0 0.0
    %5423 = vmatpush.msra.mxu0 0.0
    %5424 = vmatpush.msra.mxu0 0.0
    %v5425 = vand.u32 %v2701, 4294901760
    %v5426 = vsub.f32 %v2701, %v5425
    %v5427 = vand.u32 %v5426, 4294901760
    %v5428 = vsub.f32 %v5426, %v5427
    %v5429 = vand.u32 %v5428, 4294901760
    %5430 = vmatpush.msra.mxu0 %v5429
    %v5431 = vand.u32 %v2700, 4294901760
    %v5432 = vsub.f32 %v2700, %v5431
    %v5433 = vand.u32 %v5432, 4294901760
    %v5434 = vsub.f32 %v5432, %v5433
    %v5435 = vand.u32 %v5434, 4294901760
    %5436 = vmatpush.msra.mxu0 %v5435
    %v5437 = vand.u32 %v2699, 4294901760
    %v5438 = vsub.f32 %v2699, %v5437
    %v5439 = vand.u32 %v5438, 4294901760
    %v5440 = vsub.f32 %v5438, %v5439
    %v5441 = vand.u32 %v5440, 4294901760
    %5442 = vmatpush.msra.mxu0 %v5441
    %v5443 = vand.u32 %v2698, 4294901760
    %v5444 = vsub.f32 %v2698, %v5443
    %v5445 = vand.u32 %v5444, 4294901760
    %v5446 = vsub.f32 %v5444, %v5445
    %v5447 = vand.u32 %v5446, 4294901760
    %5448 = vmatpush.msra.mxu0 %v5447
    %v5449 = vand.u32 %v5349, 4294901760
    %5450 = vmatmul.f32.gmra.mxu0 %v5449
    %v5451 = vpop.f32.mrf.mxu0
    %v5452 = vadd.f32 %v5387, %v5451
    %v5453 = vand.u32 %v5352, 4294901760
    %5454 = vmatmul.f32.gmra.mxu0 %v5453
    %v5455 = vpop.f32.mrf.mxu0
    %v5456 = vadd.f32 %v5395, %v5455
    %v5457 = vand.u32 %v5355, 4294901760
    %5458 = vmatmul.f32.gmra.mxu0 %v5457
    %v5459 = vpop.f32.mrf.mxu0
    %v5460 = vadd.f32 %v5403, %v5459
    %v5461 = vand.u32 %v5358, 4294901760
    %5462 = vmatmul.f32.gmra.mxu0 %v5461
    %v5463 = vpop.f32.mrf.mxu0
    %v5464 = vadd.f32 %v5411, %v5463
    %5465 = vdwg.mxu0
    %5466 = vmatpush.msra.mxu0 0.0
    %5467 = vmatpush.msra.mxu0 0.0
    %5468 = vmatpush.msra.mxu0 0.0
    %5469 = vmatpush.msra.mxu0 0.0
    %5470 = vmatpush.msra.mxu0 0.0
    %5471 = vmatpush.msra.mxu0 0.0
    %5472 = vmatpush.msra.mxu0 0.0
    %5473 = vmatpush.msra.mxu0 0.0
    %5474 = vmatpush.msra.mxu0 0.0
    %5475 = vmatpush.msra.mxu0 0.0
    %5476 = vmatpush.msra.mxu0 0.0
    %5477 = vmatpush.msra.mxu0 0.0
    %v5478 = vand.u32 %v2701, 4294901760
    %v5479 = vsub.f32 %v2701, %v5478
    %5480 = vmatpush.msra.mxu0 %v5479
    %v5481 = vand.u32 %v2700, 4294901760
    %v5482 = vsub.f32 %v2700, %v5481
    %5483 = vmatpush.msra.mxu0 %v5482
    %v5484 = vand.u32 %v2699, 4294901760
    %v5485 = vsub.f32 %v2699, %v5484
    %5486 = vmatpush.msra.mxu0 %v5485
    %v5487 = vand.u32 %v2698, 4294901760
    %v5488 = vsub.f32 %v2698, %v5487
    %5489 = vmatpush.msra.mxu0 %v5488
    %v5490 = vand.u32 %v5349, 4294901760
    %v5491 = vsub.f32 %v5349, %v5490
    %5492 = vmatmul.f32.gmra.mxu0 %v5491
    %v5493 = vpop.f32.mrf.mxu0
    %v5494 = vadd.f32 %v5452, %v5493
    %v5495 = vand.u32 %v5352, 4294901760
    %v5496 = vsub.f32 %v5352, %v5495
    %5497 = vmatmul.f32.gmra.mxu0 %v5496
    %v5498 = vpop.f32.mrf.mxu0
    %v5499 = vadd.f32 %v5456, %v5498
    %v5500 = vand.u32 %v5355, 4294901760
    %v5501 = vsub.f32 %v5355, %v5500
    %5502 = vmatmul.f32.gmra.mxu0 %v5501
    %v5503 = vpop.f32.mrf.mxu0
    %v5504 = vadd.f32 %v5460, %v5503
    %v5505 = vand.u32 %v5358, 4294901760
    %v5506 = vsub.f32 %v5358, %v5505
    %5507 = vmatmul.f32.gmra.mxu0 %v5506
    %v5508 = vpop.f32.mrf.mxu0
    %v5509 = vadd.f32 %v5464, %v5508
    %5510 = vdwg.mxu0
    %5511 = vmatpush.msra.mxu0 0.0
    %5512 = vmatpush.msra.mxu0 0.0
    %5513 = vmatpush.msra.mxu0 0.0
    %5514 = vmatpush.msra.mxu0 0.0
    %5515 = vmatpush.msra.mxu0 0.0
    %5516 = vmatpush.msra.mxu0 0.0
    %5517 = vmatpush.msra.mxu0 0.0
    %5518 = vmatpush.msra.mxu0 0.0
    %5519 = vmatpush.msra.mxu0 0.0
    %5520 = vmatpush.msra.mxu0 0.0
    %5521 = vmatpush.msra.mxu0 0.0
    %5522 = vmatpush.msra.mxu0 0.0
    %v5523 = vand.u32 %v2701, 4294901760
    %5524 = vmatpush.msra.mxu0 %v5523
    %v5525 = vand.u32 %v2700, 4294901760
    %5526 = vmatpush.msra.mxu0 %v5525
    %v5527 = vand.u32 %v2699, 4294901760
    %5528 = vmatpush.msra.mxu0 %v5527
    %v5529 = vand.u32 %v2698, 4294901760
    %5530 = vmatpush.msra.mxu0 %v5529
    %v5531 = vand.u32 %v5349, 4294901760
    %v5532 = vsub.f32 %v5349, %v5531
    %v5533 = vand.u32 %v5532, 4294901760
    %5534 = vmatmul.f32.gmra.mxu0 %v5533
    %v5535 = vpop.f32.mrf.mxu0
    %v5536 = vadd.f32 %v5494, %v5535
    %v5537 = vand.u32 %v5352, 4294901760
    %v5538 = vsub.f32 %v5352, %v5537
    %v5539 = vand.u32 %v5538, 4294901760
    %5540 = vmatmul.f32.gmra.mxu0 %v5539
    %v5541 = vpop.f32.mrf.mxu0
    %v5542 = vadd.f32 %v5499, %v5541
    %v5543 = vand.u32 %v5355, 4294901760
    %v5544 = vsub.f32 %v5355, %v5543
    %v5545 = vand.u32 %v5544, 4294901760
    %5546 = vmatmul.f32.gmra.mxu0 %v5545
    %v5547 = vpop.f32.mrf.mxu0
    %v5548 = vadd.f32 %v5504, %v5547
    %v5549 = vand.u32 %v5358, 4294901760
    %v5550 = vsub.f32 %v5358, %v5549
    %v5551 = vand.u32 %v5550, 4294901760
    %5552 = vmatmul.f32.gmra.mxu0 %v5551
    %v5553 = vpop.f32.mrf.mxu0
    %v5554 = vadd.f32 %v5509, %v5553
    %5555 = vdwg.mxu0
    %5556 = vmatpush.msra.mxu0 0.0
    %5557 = vmatpush.msra.mxu0 0.0
    %5558 = vmatpush.msra.mxu0 0.0
    %5559 = vmatpush.msra.mxu0 0.0
    %5560 = vmatpush.msra.mxu0 0.0
    %5561 = vmatpush.msra.mxu0 0.0
    %5562 = vmatpush.msra.mxu0 0.0
    %5563 = vmatpush.msra.mxu0 0.0
    %5564 = vmatpush.msra.mxu0 0.0
    %5565 = vmatpush.msra.mxu0 0.0
    %5566 = vmatpush.msra.mxu0 0.0
    %5567 = vmatpush.msra.mxu0 0.0
    %v5568 = vand.u32 %v2701, 4294901760
    %v5569 = vsub.f32 %v2701, %v5568
    %v5570 = vand.u32 %v5569, 4294901760
    %5571 = vmatpush.msra.mxu0 %v5570
    %v5572 = vand.u32 %v2700, 4294901760
    %v5573 = vsub.f32 %v2700, %v5572
    %v5574 = vand.u32 %v5573, 4294901760
    %5575 = vmatpush.msra.mxu0 %v5574
    %v5576 = vand.u32 %v2699, 4294901760
    %v5577 = vsub.f32 %v2699, %v5576
    %v5578 = vand.u32 %v5577, 4294901760
    %5579 = vmatpush.msra.mxu0 %v5578
    %v5580 = vand.u32 %v2698, 4294901760
    %v5581 = vsub.f32 %v2698, %v5580
    %v5582 = vand.u32 %v5581, 4294901760
    %5583 = vmatpush.msra.mxu0 %v5582
    %v5584 = vand.u32 %v5349, 4294901760
    %5585 = vmatmul.f32.gmra.mxu0 %v5584
    %v5586 = vpop.f32.mrf.mxu0
    %v5587 = vadd.f32 %v5536, %v5586
    %v5588 = vand.u32 %v5352, 4294901760
    %5589 = vmatmul.f32.gmra.mxu0 %v5588
    %v5590 = vpop.f32.mrf.mxu0
    %v5591 = vadd.f32 %v5542, %v5590
    %v5592 = vand.u32 %v5355, 4294901760
    %5593 = vmatmul.f32.gmra.mxu0 %v5592
    %v5594 = vpop.f32.mrf.mxu0
    %v5595 = vadd.f32 %v5548, %v5594
    %v5596 = vand.u32 %v5358, 4294901760
    %5597 = vmatmul.f32.gmra.mxu0 %v5596
    %v5598 = vpop.f32.mrf.mxu0
    %v5599 = vadd.f32 %v5554, %v5598
    %5600 = vdwg.mxu0
    %5601 = vmatpush.msra.mxu0 0.0
    %5602 = vmatpush.msra.mxu0 0.0
    %5603 = vmatpush.msra.mxu0 0.0
    %5604 = vmatpush.msra.mxu0 0.0
    %5605 = vmatpush.msra.mxu0 0.0
    %5606 = vmatpush.msra.mxu0 0.0
    %5607 = vmatpush.msra.mxu0 0.0
    %5608 = vmatpush.msra.mxu0 0.0
    %5609 = vmatpush.msra.mxu0 0.0
    %5610 = vmatpush.msra.mxu0 0.0
    %5611 = vmatpush.msra.mxu0 0.0
    %5612 = vmatpush.msra.mxu0 0.0
    %v5613 = vand.u32 %v2701, 4294901760
    %5614 = vmatpush.msra.mxu0 %v5613
    %v5615 = vand.u32 %v2700, 4294901760
    %5616 = vmatpush.msra.mxu0 %v5615
    %v5617 = vand.u32 %v2699, 4294901760
    %5618 = vmatpush.msra.mxu0 %v5617
    %v5619 = vand.u32 %v2698, 4294901760
    %5620 = vmatpush.msra.mxu0 %v5619
    %v5621 = vand.u32 %v5349, 4294901760
    %5622 = vmatmul.f32.gmra.mxu0 %v5621
    %v5623 = vpop.f32.mrf.mxu0
    %v5624 = vadd.f32 %v5587, %v5623
    %v5625 = vand.u32 %v5352, 4294901760
    %5626 = vmatmul.f32.gmra.mxu0 %v5625
    %v5627 = vpop.f32.mrf.mxu0
    %v5628 = vadd.f32 %v5591, %v5627
    %v5629 = vand.u32 %v5355, 4294901760
    %5630 = vmatmul.f32.gmra.mxu0 %v5629
    %v5631 = vpop.f32.mrf.mxu0
    %v5632 = vadd.f32 %v5595, %v5631
    %v5633 = vand.u32 %v5358, 4294901760
    %5634 = vmatmul.f32.gmra.mxu0 %v5633
    %v5635 = vpop.f32.mrf.mxu0
    %v5636 = vadd.f32 %v5599, %v5635
    %5637 = vdwg.mxu0
    %v5638 = vsel %vm29, %v5624, 0.0
    %5639 = vadd.xlane.f32.xlu0 %v5638
    %v5640 = vpop.xlane.xlu0 %5639
    %v5641 = vsel %vm29, %v5628, 0.0
    %5642 = vadd.xlane.f32.xlu0 %v5641
    %v5643 = vpop.xlane.xlu0 %5642
    %v5644 = vsel %vm29, %v5632, 0.0
    %5645 = vadd.xlane.f32.xlu0 %v5644
    %v5646 = vpop.xlane.xlu0 %5645
    %v5647 = vsel %vm29, %v5636, 0.0
    %5648 = vadd.xlane.f32.xlu0 %v5647
    %v5649 = vpop.xlane.xlu0 %5648
    %v5650 = vmul.f32 %v5640, %v656
    %v5651 = vmul.f32 %v5643, %v656
    %v5652 = vmul.f32 %v5646, %v656
    %v5653 = vmul.f32 %v5649, %v656
    %v5654 = vsub.f32 %v5624, %v5650
    %v5655 = vsub.f32 %v5628, %v5651
    %v5656 = vsub.f32 %v5632, %v5652
    %v5657 = vsub.f32 %v5636, %v5653
    %v5658 = vmul.f32 %v5654, %v5654
    %v5659 = vmul.f32 %v5655, %v5655
    %v5660 = vmul.f32 %v5656, %v5656
    %v5661 = vmul.f32 %v5657, %v5657
    %v5662 = vsel %vm29, %v5658, 0.0
    %5663 = vadd.xlane.f32.xlu0 %v5662
    %v5664 = vpop.xlane.xlu0 %5663
    %v5665 = vsel %vm29, %v5659, 0.0
    %5666 = vadd.xlane.f32.xlu0 %v5665
    %v5667 = vpop.xlane.xlu0 %5666
    %v5668 = vsel %vm29, %v5660, 0.0
    %5669 = vadd.xlane.f32.xlu0 %v5668
    %v5670 = vpop.xlane.xlu0 %5669
    %v5671 = vsel %vm29, %v5661, 0.0
    %5672 = vadd.xlane.f32.xlu0 %v5671
    %v5673 = vpop.xlane.xlu0 %5672
    %v5674 = vmul.f32 %v5664, %v656
    %v5675 = vmul.f32 %v5667, %v656
    %v5676 = vmul.f32 %v5670, %v656
    %v5677 = vmul.f32 %v5673, %v656
    %v5678 = vadd.f32 %v5674, 1e-05
    %v5679 = vadd.f32 %v5675, 1e-05
    %v5680 = vadd.f32 %v5676, 1e-05
    %v5681 = vadd.f32 %v5677, 1e-05
    %v5682 = vrsqrt.pop %v5678
    %v5683 = vmul.f32 %v5682, %v5678
    %v5684 = vmul.f32 %v5683, %v5682
    %v5685 = vmul.f32 0.5, %v5684
    %v5686 = vsub.f32 1.5, %v5685
    %v5687 = vmul.f32 %v5682, %v5686
    %vm5688 = vweird.f32 %v5678
    %vm5689 = vweird.f32 %v5682
    %vm5690 = vmor %vm5688, %vm5689
    %v5691 = vsel %vm5690, %v5682, %v5687
    %v5692 = vrsqrt.pop %v5679
    %v5693 = vmul.f32 %v5692, %v5679
    %v5694 = vmul.f32 %v5693, %v5692
    %v5695 = vmul.f32 0.5, %v5694
    %v5696 = vsub.f32 1.5, %v5695
    %v5697 = vmul.f32 %v5692, %v5696
    %vm5698 = vweird.f32 %v5679
    %vm5699 = vweird.f32 %v5692
    %vm5700 = vmor %vm5698, %vm5699
    %v5701 = vsel %vm5700, %v5692, %v5697
    %v5702 = vrsqrt.pop %v5680
    %v5703 = vmul.f32 %v5702, %v5680
    %v5704 = vmul.f32 %v5703, %v5702
    %v5705 = vmul.f32 0.5, %v5704
    %v5706 = vsub.f32 1.5, %v5705
    %v5707 = vmul.f32 %v5702, %v5706
    %vm5708 = vweird.f32 %v5680
    %vm5709 = vweird.f32 %v5702
    %vm5710 = vmor %vm5708, %vm5709
    %v5711 = vsel %vm5710, %v5702, %v5707
    %v5712 = vrsqrt.pop %v5681
    %v5713 = vmul.f32 %v5712, %v5681
    %v5714 = vmul.f32 %v5713, %v5712
    %v5715 = vmul.f32 0.5, %v5714
    %v5716 = vsub.f32 1.5, %v5715
    %v5717 = vmul.f32 %v5712, %v5716
    %vm5718 = vweird.f32 %v5681
    %vm5719 = vweird.f32 %v5712
    %vm5720 = vmor %vm5718, %vm5719
    %v5721 = vsel %vm5720, %v5712, %v5717
    %v5722 = vmul.f32 %v5654, %v5691
    %v5723 = vmul.f32 %v5655, %v5701
    %v5724 = vmul.f32 %v5656, %v5711
    %v5725 = vmul.f32 %v5657, %v5721
    %v5726 = vperm.slane %v23, 7
    %v5727 = vmul.f32 %v5722, %v5726
    %v5728 = vmul.f32 %v5723, %v5726
    %v5729 = vmul.f32 %v5724, %v5726
    %v5730 = vmul.f32 %v5725, %v5726
    %v5731 = vperm.slane %v24, 0
    %v5732 = vadd.f32 %v5727, %v5731
    %v5733 = vadd.f32 %v5728, %v5731
    %v5734 = vadd.f32 %v5729, %v5731
    %v5735 = vadd.f32 %v5730, %v5731
    %v5736 = vmul.f32 %v5732, 0.01
    %v5737 = vmul.f32 %v5733, 0.01
    %v5738 = vmul.f32 %v5734, 0.01
    %v5739 = vmul.f32 %v5735, 0.01
    %v5740 = vadd.f32 %v2682, %v5736
    %v5741 = vadd.f32 %v2683, %v5737
    %v5742 = vadd.f32 %v2684, %v5738
    %v5743 = vadd.f32 %v2685, %v5739
    %5744 = vst.msk [vmem:[#allocation2] sm:$0xff] %vm29, %v5740
    %5745 = vst.msk [vmem:[#allocation2 + $0x8] sm:$0xff] %vm29, %v5741
    %5746 = vst.msk [vmem:[#allocation2 + $0x10] sm:$0xff] %vm29, %v5742
    %5747 = vst.msk [vmem:[#allocation2 + $0x18] sm:$0xff] %vm29, %v5743
    // Predicated region
    $region14: #{fus_language_vision.1} parent=1 // pred_check
      _
    $region15: #{fus_language_vision.1} parent=1 // pred_check_branch
      %5749 = sbr.rel (0) target = $region17
    $region16: #{fus_language_vision.1} parent=1 // pred_region
      %5751 = vsyncadd [#allocation3], 0
      %s5752 = sshll.u32 [#allocation2], 4
      %s5753 = int_to_ptr.vmem [resolvable:$true] %s5752
      %s5754 = sshll.u32 %s3, 4
      %s5755 = int_to_ptr.hbm [resolvable:$true] %s5754
      %5760 = dma.vmem_to_hbm [thread:$0]  %s5753, 512, %s5755, [#allocation3], 128, 128, 8
    $region17: #{fus_language_vision.1} parent=1 // pred_fallthru
      _
    // Predicated region
    $region18: #{fus_language_vision.1} parent=1 // pred_check
      _
    $region19: #{fus_language_vision.1} parent=1 // pred_check_branch
      %5762 = sbr.rel (0) target = $region21
    $region20: #{fus_language_vision.1} parent=1 // pred_region
      %5764 = dma.done [#allocation3], 512
    $region21: #{fus_language_vision.1} parent=1 // pred_fallthru
      _
    %5765 = vsyncpa [#allocation3], 1

</llo_original>
